<compile_context>
chip_gen: v7x
topology: tpu7x:2x2x1
jax: 0.10.0
libtpu: 0.0.40
codegen_flags: <defaults>
</compile_context>

<pallas_src>
import jax
import jax.numpy as jnp
from jax.experimental import pallas as pl
from jax.experimental.pallas import tpu as pltpu


def _round_up(x, m):
    return (x + m - 1) // m * m


# ----------------------------------------------------------------------------
# Pallas kernels
# ----------------------------------------------------------------------------
def conv_pool_relu_kernel(p_ref, w_ref, b_ref, o_ref):
    """Fused Conv2d(k=5, s=1, p=2) + MaxPool2d(2) + ReLU for one tile of pool windows.

    p_ref: (4, TN, F) bf16 im2col patches; slab j = pool-window element j.
    w_ref: (F, Cout)  bf16, resident across the grid.
    b_ref: (1, Cout)  f32,  resident.
    o_ref: (TN, Cout) f32.
    """
    g, tn, f = p_ref.shape
    # One large MXU matmul over all 4 pool elements (M = 4*TN); f32 accumulation.
    p = p_ref[...].reshape(g * tn, f)
    c = jnp.dot(p, w_ref[...], preferred_element_type=jnp.float32)   # (4*TN, Cout)
    # 2x2 max-pool = max over the four TN-row slabs (aligned static slices).
    m = jnp.maximum(jnp.maximum(c[0 * tn:1 * tn], c[1 * tn:2 * tn]),
                    jnp.maximum(c[2 * tn:3 * tn], c[3 * tn:4 * tn]))
    # Per-channel bias commutes with the max; ReLU after the pool (matches torch).
    o_ref[...] = jnp.maximum(m + b_ref[...], 0.0)


def linear_kernel(x_ref, w_ref, b_ref, o_ref):
    """out = x @ W + b, W pre-transposed/padded to (Din, Dout_pad)."""
    o_ref[...] = (
        jnp.dot(x_ref[...], w_ref[...], preferred_element_type=jnp.float32)
        + b_ref[...]
    )


# ----------------------------------------------------------------------------
# JAX glue (im2col, layout plumbing) + pallas_call wrappers
# ----------------------------------------------------------------------------
def _im2col_pool_groups(x_nhwc, k, pad):
    """Return patches of shape (4, N, F); N = B*Ho*Wo, F = k*k*Cin (kh,kw,cin order)."""
    B, H, W, Cin = x_nhwc.shape
    assert H % 2 == 0 and W % 2 == 0, "2x2 pooling assumes even spatial dims"
    xp = jnp.pad(x_nhwc, ((0, 0), (pad, pad), (pad, pad), (0, 0)))
    taps = [xp[:, kh:kh + H, kw:kw + W, :] for kh in range(k) for kw in range(k)]
    p = jnp.stack(taps, axis=3)                       # (B, H, W, k*k, Cin)
    Ho, Wo = H // 2, W // 2
    F = k * k * Cin
    p = p.reshape(B, Ho, 2, Wo, 2, k * k, Cin)
    p = p.transpose(2, 4, 0, 1, 3, 5, 6)              # (2, 2, B, Ho, Wo, k*k, Cin)
    return p.reshape(4, B * Ho * Wo, F), (B, Ho, Wo)


def conv_pool_relu(x_nhwc, w_oihw, b, *, tile_n=1024):
    Cout, Cin, K, _ = w_oihw.shape
    patches, (B, Ho, Wo) = _im2col_pool_groups(x_nhwc, K, K // 2)
    _, N, F = patches.shape

    TN = min(tile_n, _round_up(N, 16))                # mult of 16 (bf16 sublane pack)
    n_pad = _round_up(N, TN)
    if n_pad != N:
        patches = jnp.pad(patches, ((0, 0), (0, n_pad - N), (0, 0)))
    patches = patches.astype(jnp.bfloat16)

    # weight rows ordered (kh, kw, cin) to match the patch feature order.
    w2 = jnp.transpose(w_oihw, (2, 3, 1, 0)).reshape(F, Cout).astype(jnp.bfloat16)
    b2 = b.reshape(1, Cout).astype(jnp.float32)

    out = pl.pallas_call(
        conv_pool_relu_kernel,
        out_shape=jax.ShapeDtypeStruct((n_pad, Cout), jnp.float32),
        grid=(n_pad // TN,),
        in_specs=[
            pl.BlockSpec((4, TN, F), lambda i: (0, i, 0)),   # tiled over pool windows
            pl.BlockSpec((F, Cout), lambda i: (0, 0)),       # resident weight
            pl.BlockSpec((1, Cout), lambda i: (0, 0)),       # resident bias
        ],
        out_specs=pl.BlockSpec((TN, Cout), lambda i: (i, 0)),
        compiler_params=pltpu.CompilerParams(
            dimension_semantics=("parallel",),
            vmem_limit_bytes=32 * 1024 * 1024,
        ),
    )(patches, w2, b2)
    return out[:N].reshape(B, Ho, Wo, Cout)


def linear(x, w_out_in, b, *, tile_b=256):
    B, Din = x.shape
    Dout = w_out_in.shape[0]
    dout_pad = _round_up(Dout, 128)                   # lane-dense output stores

    TB = min(tile_b, _round_up(B, 16))
    b_pad = _round_up(B, TB)
    x_p = jnp.pad(x, ((0, b_pad - B), (0, 0))) if b_pad != B else x
    x_p = x_p.astype(jnp.bfloat16)

    w = jnp.transpose(w_out_in)                                        # (Din, Dout)
    w = jnp.pad(w, ((0, 0), (0, dout_pad - Dout))).astype(jnp.bfloat16)
    bias = jnp.pad(b.reshape(1, Dout), ((0, 0), (0, dout_pad - Dout))).astype(jnp.float32)

    out = pl.pallas_call(
        linear_kernel,
        out_shape=jax.ShapeDtypeStruct((b_pad, dout_pad), jnp.float32),
        grid=(b_pad // TB,),
        in_specs=[
            pl.BlockSpec((TB, Din), lambda i: (i, 0)),
            pl.BlockSpec((Din, dout_pad), lambda i: (0, 0)),
            pl.BlockSpec((1, dout_pad), lambda i: (0, 0)),
        ],
        out_specs=pl.BlockSpec((TB, dout_pad), lambda i: (i, 0)),
        compiler_params=pltpu.CompilerParams(
            dimension_semantics=("parallel",),
            vmem_limit_bytes=32 * 1024 * 1024,
        ),
    )(x_p, w, bias)
    return out[:B, :Dout]


def cnn_forward(x_nchw, params):
    x = jnp.transpose(x_nchw, (0, 2, 3, 1))                     # NCHW -> NHWC
    x = conv_pool_relu(x, params["w1"], params["b1"])           # (B, 14, 14, 16)
    # TODO(synk): nn.Dropout2d is training-time stochastic channel dropout; identity in eval.
    x = conv_pool_relu(x, params["w2"], params["b2"])           # (B, 7, 7, 32)
    B, Ho, Wo, C = x.shape
    # Flatten in NHWC order (no activation transpose); permute w_out columns instead.
    x = x.reshape(B, Ho * Wo * C)
    w_out = (params["w_out"].reshape(-1, C, Ho, Wo)
             .transpose(0, 2, 3, 1).reshape(-1, Ho * Wo * C))
    return linear(x, w_out, params["b_out"])                    # (B, 10)


# ----------------------------------------------------------------------------
# Pure-JAX reference (for a correctness sanity check)
# ----------------------------------------------------------------------------
def reference_forward(x, params):
    def conv(x, w, b):
        y = jax.lax.conv_general_dilated(
            x, w, (1, 1), ((2, 2), (2, 2)),
            dimension_numbers=("NCHW", "OIHW", "NCHW"))
        return y + b.reshape(1, -1, 1, 1)

    def pool(x):
        return jax.lax.reduce_window(
            x, -jnp.inf, jax.lax.max, (1, 1, 2, 2), (1, 1, 2, 2), "VALID")

    x = jax.nn.relu(pool(conv(x, params["w1"], params["b1"])))
    x = jax.nn.relu(pool(conv(x, params["w2"], params["b2"])))
    x = x.reshape(x.shape[0], -1)
    return x @ params["w_out"].T + params["b_out"]


# ----------------------------------------------------------------------------
# Deterministic parameter init + run
# ----------------------------------------------------------------------------
def init_params(key):
    k1, k2, k3, k4, k5, k6 = jax.random.split(key, 6)
    return {
        "w1": 0.1 * jax.random.normal(k1, (16, 1, 5, 5), jnp.float32),
        "b1": 0.1 * jax.random.normal(k2, (16,), jnp.float32),
        "w2": 0.1 * jax.random.normal(k3, (32, 16, 5, 5), jnp.float32),
        "b2": 0.1 * jax.random.normal(k4, (32,), jnp.float32),
        "w_out": 0.05 * jax.random.normal(k5, (10, 32 * 7 * 7), jnp.float32),
        "b_out": 0.05 * jax.random.normal(k6, (10,), jnp.float32),
    }


if __name__ == "__main__":
    key = jax.random.PRNGKey(0)
    pkey, xkey = jax.random.split(key)
    params = init_params(pkey)
    # MNIST-style input implied by Linear(32*7*7, 10): (B, 1, 28, 28), small batch.
    x = jax.random.normal(xkey, (2, 1, 28, 28), jnp.float32)

    out = jax.block_until_ready(jax.jit(cnn_forward)(x, params))
    assert out.shape == (2, 10), out.shape

    ref = jax.block_until_ready(jax.jit(reference_forward)(x, params))
    # bf16 matmul inputs, f32 accumulation -> loose-ish tolerance.
    assert jnp.allclose(out, ref, atol=5e-2, rtol=5e-2), float(
        jnp.max(jnp.abs(out - ref)))

    print("KERNEL_OK")
</pallas_src>

<mosaic_0001>
module attributes {stable_mosaic.version = 11 : i64} {
  func.func @conv_pool_relu_kernel(%arg0: i32, %arg1: memref<4x400x25xbf16, #tpu.memory_space<vmem>>, %arg2: memref<25x16xbf16, #tpu.memory_space<vmem>>, %arg3: memref<1x16xf32, #tpu.memory_space<vmem>>, %arg4: memref<400x16xf32, #tpu.memory_space<vmem>>) attributes {dimension_semantics = [#tpu.dimension_semantics<parallel>], iteration_bounds = array<i64: 1>, scalar_prefetch = 0 : i64, scratch_operands = 0 : i64, tpu.core_type = #tpu.core_type<tc>, window_params = [{transform_indices = @transform_0, window_bounds = array<i64: 4, 400, 25>}, {pipeline_mode = #tpu.pipeline_mode<synchronous>, transform_indices = @transform_1, window_bounds = array<i64: 25, 16>}, {pipeline_mode = #tpu.pipeline_mode<synchronous>, transform_indices = @transform_2, window_bounds = array<i64: 1, 16>}, {transform_indices = @transform_3, window_bounds = array<i64: 400, 16>}]} {
    %c0 = arith.constant 0 : index
    %c0_0 = arith.constant 0 : index
    %c0_1 = arith.constant 0 : index
    %0 = vector.load %arg1[%c0, %c0_0, %c0_1] : memref<4x400x25xbf16, #tpu.memory_space<vmem>>, vector<4x400x25xbf16>
    %1 = vector.shape_cast %0 : vector<4x400x25xbf16> to vector<1600x25xbf16>
    %c0_2 = arith.constant 0 : index
    %c0_3 = arith.constant 0 : index
    %2 = vector.load %arg2[%c0_2, %c0_3] : memref<25x16xbf16, #tpu.memory_space<vmem>>, vector<25x16xbf16>
    %cst = arith.constant dense<0.000000e+00> : vector<1600x16xf32>
    %3 = tpu.matmul %1, %2, %cst {dimension_numbers = #tpu.dot_dimension_numbers<[1], [0], [0], [1], [0, 0, 1, 1], [], []>} : vector<1600x25xbf16>, vector<25x16xbf16>, vector<1600x16xf32> -> vector<1600x16xf32>
    %4 = vector.extract_strided_slice %3 {offsets = [0, 0], sizes = [400, 16], strides = [1, 1]} : vector<1600x16xf32> to vector<400x16xf32>
    %5 = vector.extract_strided_slice %3 {offsets = [400, 0], sizes = [400, 16], strides = [1, 1]} : vector<1600x16xf32> to vector<400x16xf32>
    %6 = arith.maximumf %4, %5 : vector<400x16xf32>
    %7 = vector.extract_strided_slice %3 {offsets = [800, 0], sizes = [400, 16], strides = [1, 1]} : vector<1600x16xf32> to vector<400x16xf32>
    %8 = vector.extract_strided_slice %3 {offsets = [1200, 0], sizes = [400, 16], strides = [1, 1]} : vector<1600x16xf32> to vector<400x16xf32>
    %9 = arith.maximumf %7, %8 : vector<400x16xf32>
    %10 = arith.maximumf %6, %9 : vector<400x16xf32>
    %c0_4 = arith.constant 0 : index
    %c0_5 = arith.constant 0 : index
    %11 = vector.load %arg3[%c0_4, %c0_5] : memref<1x16xf32, #tpu.memory_space<vmem>>, vector<1x16xf32>
    %12 = vector.broadcast %11 : vector<1x16xf32> to vector<400x16xf32>
    %13 = arith.addf %10, %12 : vector<400x16xf32>
    %cst_6 = arith.constant 0.000000e+00 : f32
    %14 = vector.broadcast %cst_6 : f32 to vector<400x16xf32>
    %15 = arith.maximumf %13, %14 : vector<400x16xf32>
    %c0_7 = arith.constant 0 : index
    %c0_8 = arith.constant 0 : index
    %16 = vector.load %arg4[%c0_7, %c0_8] : memref<400x16xf32, #tpu.memory_space<vmem>>, vector<400x16xf32>
    tpu.vector_store %arg4[%c0_7, %c0_8], %15 {strides = array<i32>} : memref<400x16xf32, #tpu.memory_space<vmem>>, vector<400x16xf32>,
    return
  }
  func.func @transform_0(%arg0: i32) -> (i32, i32, i32) {
    %c0_i32 = arith.constant 0 : i32
    %c0_i32_0 = arith.constant 0 : i32
    %c0_i32_1 = arith.constant 0 : i32
    return %c0_i32, %arg0, %c0_i32_0 : i32, i32, i32
  }
  func.func @transform_1(%arg0: i32) -> (i32, i32) {
    %c0_i32 = arith.constant 0 : i32
    %c0_i32_0 = arith.constant 0 : i32
    %c0_i32_1 = arith.constant 0 : i32
    return %c0_i32, %c0_i32_0 : i32, i32
  }
  func.func @transform_2(%arg0: i32) -> (i32, i32) {
    %c0_i32 = arith.constant 0 : i32
    %c0_i32_0 = arith.constant 0 : i32
    %c0_i32_1 = arith.constant 0 : i32
    return %c0_i32, %c0_i32_0 : i32, i32
  }
  func.func @transform_3(%arg0: i32) -> (i32, i32) {
    %c0_i32 = arith.constant 0 : i32
    %c0_i32_0 = arith.constant 0 : i32
    return %arg0, %c0_i32 : i32, i32
  }
}

module attributes {stable_mosaic.version = 11 : i64} {
  func.func @conv_pool_relu_kernel(%arg0: i32, %arg1: memref<4x112x400xbf16, #tpu.memory_space<vmem>>, %arg2: memref<400x32xbf16, #tpu.memory_space<vmem>>, %arg3: memref<1x32xf32, #tpu.memory_space<vmem>>, %arg4: memref<112x32xf32, #tpu.memory_space<vmem>>) attributes {dimension_semantics = [#tpu.dimension_semantics<parallel>], iteration_bounds = array<i64: 1>, scalar_prefetch = 0 : i64, scratch_operands = 0 : i64, tpu.core_type = #tpu.core_type<tc>, window_params = [{transform_indices = @transform_0, window_bounds = array<i64: 4, 112, 400>}, {pipeline_mode = #tpu.pipeline_mode<synchronous>, transform_indices = @transform_1, window_bounds = array<i64: 400, 32>}, {pipeline_mode = #tpu.pipeline_mode<synchronous>, transform_indices = @transform_2, window_bounds = array<i64: 1, 32>}, {transform_indices = @transform_3, window_bounds = array<i64: 112, 32>}]} {
    %c0 = arith.constant 0 : index
    %c0_0 = arith.constant 0 : index
    %c0_1 = arith.constant 0 : index
    %0 = vector.load %arg1[%c0, %c0_0, %c0_1] : memref<4x112x400xbf16, #tpu.memory_space<vmem>>, vector<4x112x400xbf16>
    %1 = vector.shape_cast %0 : vector<4x112x400xbf16> to vector<448x400xbf16>
    %c0_2 = arith.constant 0 : index
    %c0_3 = arith.constant 0 : index
    %2 = vector.load %arg2[%c0_2, %c0_3] : memref<400x32xbf16, #tpu.memory_space<vmem>>, vector<400x32xbf16>
    %cst = arith.constant dense<0.000000e+00> : vector<448x32xf32>
    %3 = tpu.matmul %1, %2, %cst {dimension_numbers = #tpu.dot_dimension_numbers<[1], [0], [0], [1], [0, 0, 1, 1], [], []>} : vector<448x400xbf16>, vector<400x32xbf16>, vector<448x32xf32> -> vector<448x32xf32>
    %4 = vector.extract_strided_slice %3 {offsets = [0, 0], sizes = [112, 32], strides = [1, 1]} : vector<448x32xf32> to vector<112x32xf32>
    %5 = vector.extract_strided_slice %3 {offsets = [112, 0], sizes = [112, 32], strides = [1, 1]} : vector<448x32xf32> to vector<112x32xf32>
    %6 = arith.maximumf %4, %5 : vector<112x32xf32>
    %7 = vector.extract_strided_slice %3 {offsets = [224, 0], sizes = [112, 32], strides = [1, 1]} : vector<448x32xf32> to vector<112x32xf32>
    %8 = vector.extract_strided_slice %3 {offsets = [336, 0], sizes = [112, 32], strides = [1, 1]} : vector<448x32xf32> to vector<112x32xf32>
    %9 = arith.maximumf %7, %8 : vector<112x32xf32>
    %10 = arith.maximumf %6, %9 : vector<112x32xf32>
    %c0_4 = arith.constant 0 : index
    %c0_5 = arith.constant 0 : index
    %11 = vector.load %arg3[%c0_4, %c0_5] : memref<1x32xf32, #tpu.memory_space<vmem>>, vector<1x32xf32>
    %12 = vector.broadcast %11 : vector<1x32xf32> to vector<112x32xf32>
    %13 = arith.addf %10, %12 : vector<112x32xf32>
    %cst_6 = arith.constant 0.000000e+00 : f32
    %14 = vector.broadcast %cst_6 : f32 to vector<112x32xf32>
    %15 = arith.maximumf %13, %14 : vector<112x32xf32>
    %c0_7 = arith.constant 0 : index
    %c0_8 = arith.constant 0 : index
    %16 = vector.load %arg4[%c0_7, %c0_8] : memref<112x32xf32, #tpu.memory_space<vmem>>, vector<112x32xf32>
    tpu.vector_store %arg4[%c0_7, %c0_8], %15 {strides = array<i32>} : memref<112x32xf32, #tpu.memory_space<vmem>>, vector<112x32xf32>,
    return
  }
  func.func @transform_0(%arg0: i32) -> (i32, i32, i32) {
    %c0_i32 = arith.constant 0 : i32
    %c0_i32_0 = arith.constant 0 : i32
    %c0_i32_1 = arith.constant 0 : i32
    return %c0_i32, %arg0, %c0_i32_0 : i32, i32, i32
  }
  func.func @transform_1(%arg0: i32) -> (i32, i32) {
    %c0_i32 = arith.constant 0 : i32
    %c0_i32_0 = arith.constant 0 : i32
    %c0_i32_1 = arith.constant 0 : i32
    return %c0_i32, %c0_i32_0 : i32, i32
  }
  func.func @transform_2(%arg0: i32) -> (i32, i32) {
    %c0_i32 = arith.constant 0 : i32
    %c0_i32_0 = arith.constant 0 : i32
    %c0_i32_1 = arith.constant 0 : i32
    return %c0_i32, %c0_i32_0 : i32, i32
  }
  func.func @transform_3(%arg0: i32) -> (i32, i32) {
    %c0_i32 = arith.constant 0 : i32
    %c0_i32_0 = arith.constant 0 : i32
    return %arg0, %c0_i32 : i32, i32
  }
}

module attributes {stable_mosaic.version = 11 : i64} {
  func.func @linear_kernel(%arg0: i32, %arg1: memref<16x1568xbf16, #tpu.memory_space<vmem>>, %arg2: memref<1568x128xbf16, #tpu.memory_space<vmem>>, %arg3: memref<1x128xf32, #tpu.memory_space<vmem>>, %arg4: memref<16x128xf32, #tpu.memory_space<vmem>>) attributes {dimension_semantics = [#tpu.dimension_semantics<parallel>], iteration_bounds = array<i64: 1>, scalar_prefetch = 0 : i64, scratch_operands = 0 : i64, tpu.core_type = #tpu.core_type<tc>, window_params = [{transform_indices = @transform_0, window_bounds = array<i64: 16, 1568>}, {pipeline_mode = #tpu.pipeline_mode<synchronous>, transform_indices = @transform_1, window_bounds = array<i64: 1568, 128>}, {pipeline_mode = #tpu.pipeline_mode<synchronous>, transform_indices = @transform_2, window_bounds = array<i64: 1, 128>}, {transform_indices = @transform_3, window_bounds = array<i64: 16, 128>}]} {
    %c0 = arith.constant 0 : index
    %c0_0 = arith.constant 0 : index
    %0 = vector.load %arg1[%c0, %c0_0] : memref<16x1568xbf16, #tpu.memory_space<vmem>>, vector<16x1568xbf16>
    %c0_1 = arith.constant 0 : index
    %c0_2 = arith.constant 0 : index
    %1 = vector.load %arg2[%c0_1, %c0_2] : memref<1568x128xbf16, #tpu.memory_space<vmem>>, vector<1568x128xbf16>
    %cst = arith.constant dense<0.000000e+00> : vector<16x128xf32>
    %2 = tpu.matmul %0, %1, %cst {dimension_numbers = #tpu.dot_dimension_numbers<[1], [0], [0], [1], [0, 0, 1, 1], [], []>} : vector<16x1568xbf16>, vector<1568x128xbf16>, vector<16x128xf32> -> vector<16x128xf32>
    %c0_3 = arith.constant 0 : index
    %c0_4 = arith.constant 0 : index
    %3 = vector.load %arg3[%c0_3, %c0_4] : memref<1x128xf32, #tpu.memory_space<vmem>>, vector<1x128xf32>
    %4 = vector.broadcast %3 : vector<1x128xf32> to vector<16x128xf32>
    %5 = arith.addf %2, %4 : vector<16x128xf32>
    %c0_5 = arith.constant 0 : index
    %c0_6 = arith.constant 0 : index
    %6 = vector.load %arg4[%c0_5, %c0_6] : memref<16x128xf32, #tpu.memory_space<vmem>>, vector<16x128xf32>
    tpu.vector_store %arg4[%c0_5, %c0_6], %5 {strides = array<i32>} : memref<16x128xf32, #tpu.memory_space<vmem>>, vector<16x128xf32>,
    return
  }
  func.func @transform_0(%arg0: i32) -> (i32, i32) {
    %c0_i32 = arith.constant 0 : i32
    %c0_i32_0 = arith.constant 0 : i32
    return %arg0, %c0_i32 : i32, i32
  }
  func.func @transform_1(%arg0: i32) -> (i32, i32) {
    %c0_i32 = arith.constant 0 : i32
    %c0_i32_0 = arith.constant 0 : i32
    %c0_i32_1 = arith.constant 0 : i32
    return %c0_i32, %c0_i32_0 : i32, i32
  }
  func.func @transform_2(%arg0: i32) -> (i32, i32) {
    %c0_i32 = arith.constant 0 : i32
    %c0_i32_0 = arith.constant 0 : i32
    %c0_i32_1 = arith.constant 0 : i32
    return %c0_i32, %c0_i32_0 : i32, i32
  }
  func.func @transform_3(%arg0: i32) -> (i32, i32) {
    %c0_i32 = arith.constant 0 : i32
    %c0_i32_0 = arith.constant 0 : i32
    return %arg0, %c0_i32 : i32, i32
  }
}

</mosaic_0001>

<llo_original>
// kernel: cnn_forward.3
$region0: #{cnn_forward.3}
  #allocation0 [shape = 'u32[]', space=smem, size = 0x4, offset = 0x4, fixed_abs, tag = 'smem constant byte address 0x4 - core index']
  #allocation1 [shape = 'u32[144,128]{1,0:T(1,128)}', space=vmem, size = 0x12000, scoped, tag = 'internal scratch']
  %s0 = inlined_call_operand.vmem [shape: bf16[4,400,25], index: 0, kind: input, shape index: {}]
  %s1 = inlined_call_operand.vmem [shape: bf16[25,16], index: 1, kind: input, shape index: {}]
  %s2 = inlined_call_operand.vmem [shape: f32[1,16], index: 2, kind: input, shape index: {}]
  %s3 = inlined_call_operand.vmem [shape: f32[400,16], index: 3, kind: output, shape index: {}]
  %s4 = sld [smem:[#allocation0]]
  $region22: #{cnn_forward.3} parent=0
    _
  %s6 = ssub.s32 1, %s4
  %s7 = scalar_select 0, %s6, %s4
  // Predicated region
  $region2: #{cnn_forward.3} parent=0 // pred_check
    _
  $region3: #{cnn_forward.3} parent=0 // pred_check_branch
    %9 = sbr.rel (0) target = $region5
  $region4: #{cnn_forward.3} parent=0 // pred_region
    _
  $region5: #{cnn_forward.3} parent=0 // pred_fallthru
    _
  // Predicated region
  $region6: #{cnn_forward.3} parent=0 // pred_check
    _
  $region7: #{cnn_forward.3} parent=0 // pred_check_branch
    %11 = sbr.rel (0) target = $region9
  $region8: #{cnn_forward.3} parent=0 // pred_region
    _
  $region9: #{cnn_forward.3} parent=0 // pred_fallthru
    _
  // Predicated region
  $region10: #{cnn_forward.3} parent=0 // pred_check
    _
  $region11: #{cnn_forward.3} parent=0 // pred_check_branch
    %13 = sbr.rel (0) target = $region13
  $region12: #{cnn_forward.3} parent=0 // pred_region
    _
  $region13: #{cnn_forward.3} parent=0 // pred_fallthru
    _
  %v15 = vld [vmem:[%s0] sm:$0xf]
  %v16 = vld [vmem:[%s0 + $0x4] sm:$0xf]
  %v17 = vld [vmem:[%s0 + $0x8] sm:$0xf]
  %v18 = vld [vmem:[%s0 + $0xc] sm:$0xf]
  %v19 = vld [vmem:[%s0 + $0x10] sm:$0xf]
  %v20 = vld [vmem:[%s0 + $0x14] sm:$0xf]
  %v21 = vld [vmem:[%s0 + $0x18] sm:$0xf]
  %v22 = vld [vmem:[%s0 + $0x1c] sm:$0xf]
  %v23 = vld [vmem:[%s0 + $0x20] sm:$0xf]
  %v24 = vld [vmem:[%s0 + $0x24] sm:$0xf]
  %v25 = vld [vmem:[%s0 + $0x28] sm:$0xf]
  %v26 = vld [vmem:[%s0 + $0x2c] sm:$0xf]
  %v27 = vld [vmem:[%s0 + $0x30] sm:$0xf]
  %v28 = vld [vmem:[%s0 + $0x34] sm:$0xf]
  %v29 = vld [vmem:[%s0 + $0x38] sm:$0xf]
  %v30 = vld [vmem:[%s0 + $0x3c] sm:$0xf]
  %v31 = vld [vmem:[%s0 + $0x40] sm:$0xf]
  %v32 = vld [vmem:[%s0 + $0x44] sm:$0xf]
  %v33 = vld [vmem:[%s0 + $0x48] sm:$0xf]
  %v34 = vld [vmem:[%s0 + $0x4c] sm:$0xf]
  %v35 = vld [vmem:[%s0 + $0x50] sm:$0xf]
  %v36 = vld [vmem:[%s0 + $0x54] sm:$0xf]
  %v37 = vld [vmem:[%s0 + $0x58] sm:$0xf]
  %v38 = vld [vmem:[%s0 + $0x5c] sm:$0xf]
  %v39 = vld [vmem:[%s0 + $0x60] sm:$0xf]
  %v40 = vld [vmem:[%s0 + $0x64] sm:$0xf]
  %v41 = vld [vmem:[%s0 + $0x68] sm:$0xf]
  %v42 = vld [vmem:[%s0 + $0x6c] sm:$0xf]
  %v43 = vld [vmem:[%s0 + $0x70] sm:$0xf]
  %v44 = vld [vmem:[%s0 + $0x74] sm:$0xf]
  %v45 = vld [vmem:[%s0 + $0x78] sm:$0xf]
  %v46 = vld [vmem:[%s0 + $0x7c] sm:$0xf]
  %v47 = vld [vmem:[%s0 + $0x80] sm:$0xf]
  %v48 = vld [vmem:[%s0 + $0x84] sm:$0xf]
  %v49 = vld [vmem:[%s0 + $0x88] sm:$0xf]
  %v50 = vld [vmem:[%s0 + $0x8c] sm:$0xf]
  %v51 = vld [vmem:[%s0 + $0x90] sm:$0xf]
  %v52 = vld [vmem:[%s0 + $0x94] sm:$0xf]
  %v53 = vld [vmem:[%s0 + $0x98] sm:$0xf]
  %v54 = vld [vmem:[%s0 + $0x9c] sm:$0xf]
  %v55 = vld [vmem:[%s0 + $0xa0] sm:$0xf]
  %v56 = vld [vmem:[%s0 + $0xa4] sm:$0xf]
  %v57 = vld [vmem:[%s0 + $0xa8] sm:$0xf]
  %v58 = vld [vmem:[%s0 + $0xac] sm:$0xf]
  %v59 = vld [vmem:[%s0 + $0xb0] sm:$0xf]
  %v60 = vld [vmem:[%s0 + $0xb4] sm:$0xf]
  %v61 = vld [vmem:[%s0 + $0xb8] sm:$0xf]
  %v62 = vld [vmem:[%s0 + $0xbc] sm:$0xf]
  %v63 = vld [vmem:[%s0 + $0xc0] sm:$0xf]
  %v64 = vld [vmem:[%s0 + $0xc4] sm:$0xf]
  %v65 = vld [vmem:[%s0 + $0xc8] sm:$0xf]
  %v66 = vld [vmem:[%s0 + $0xcc] sm:$0xf]
  %v67 = vld [vmem:[%s0 + $0xd0] sm:$0xf]
  %v68 = vld [vmem:[%s0 + $0xd4] sm:$0xf]
  %v69 = vld [vmem:[%s0 + $0xd8] sm:$0xf]
  %v70 = vld [vmem:[%s0 + $0xdc] sm:$0xf]
  %v71 = vld [vmem:[%s0 + $0xe0] sm:$0xf]
  %v72 = vld [vmem:[%s0 + $0xe4] sm:$0xf]
  %v73 = vld [vmem:[%s0 + $0xe8] sm:$0xf]
  %v74 = vld [vmem:[%s0 + $0xec] sm:$0xf]
  %v75 = vld [vmem:[%s0 + $0xf0] sm:$0xf]
  %v76 = vld [vmem:[%s0 + $0xf4] sm:$0xf]
  %v77 = vld [vmem:[%s0 + $0xf8] sm:$0xf]
  %v78 = vld [vmem:[%s0 + $0xfc] sm:$0xf]
  %v79 = vld [vmem:[%s0 + $0x100] sm:$0xf]
  %v80 = vld [vmem:[%s0 + $0x104] sm:$0xf]
  %v81 = vld [vmem:[%s0 + $0x108] sm:$0xf]
  %v82 = vld [vmem:[%s0 + $0x10c] sm:$0xf]
  %v83 = vld [vmem:[%s0 + $0x110] sm:$0xf]
  %v84 = vld [vmem:[%s0 + $0x114] sm:$0xf]
  %v85 = vld [vmem:[%s0 + $0x118] sm:$0xf]
  %v86 = vld [vmem:[%s0 + $0x11c] sm:$0xf]
  %v87 = vld [vmem:[%s0 + $0x120] sm:$0xf]
  %v88 = vld [vmem:[%s0 + $0x124] sm:$0xf]
  %v89 = vld [vmem:[%s0 + $0x128] sm:$0xf]
  %v90 = vld [vmem:[%s0 + $0x12c] sm:$0xf]
  %v91 = vld [vmem:[%s0 + $0x130] sm:$0xf]
  %v92 = vld [vmem:[%s0 + $0x134] sm:$0xf]
  %v93 = vld [vmem:[%s0 + $0x138] sm:$0xf]
  %v94 = vld [vmem:[%s0 + $0x13c] sm:$0xf]
  %v95 = vld [vmem:[%s0 + $0x140] sm:$0xf]
  %v96 = vld [vmem:[%s0 + $0x144] sm:$0xf]
  %v97 = vld [vmem:[%s0 + $0x148] sm:$0xf]
  %v98 = vld [vmem:[%s0 + $0x14c] sm:$0xf]
  %v99 = vld [vmem:[%s0 + $0x150] sm:$0xf]
  %v100 = vld [vmem:[%s0 + $0x154] sm:$0xf]
  %v101 = vld [vmem:[%s0 + $0x158] sm:$0xf]
  %v102 = vld [vmem:[%s0 + $0x15c] sm:$0xf]
  %v103 = vld [vmem:[%s0 + $0x160] sm:$0xf]
  %v104 = vld [vmem:[%s0 + $0x164] sm:$0xf]
  %v105 = vld [vmem:[%s0 + $0x168] sm:$0xf]
  %v106 = vld [vmem:[%s0 + $0x16c] sm:$0xf]
  %v107 = vld [vmem:[%s0 + $0x170] sm:$0xf]
  %v108 = vld [vmem:[%s0 + $0x174] sm:$0xf]
  %v109 = vld [vmem:[%s0 + $0x178] sm:$0xf]
  %v110 = vld [vmem:[%s0 + $0x17c] sm:$0xf]
  %v111 = vld [vmem:[%s0 + $0x180] sm:$0xf]
  %v112 = vld [vmem:[%s0 + $0x184] sm:$0xf]
  %v113 = vld [vmem:[%s0 + $0x188] sm:$0xf]
  %v114 = vld [vmem:[%s0 + $0x18c] sm:$0xf]
  %v115 = vld [vmem:[%s0 + $0x190] sm:$0xf]
  %v116 = vld [vmem:[%s0 + $0x194] sm:$0xf]
  %v117 = vld [vmem:[%s0 + $0x198] sm:$0xf]
  %v118 = vld [vmem:[%s0 + $0x19c] sm:$0xf]
  %v119 = vld [vmem:[%s0 + $0x1a0] sm:$0xf]
  %v120 = vld [vmem:[%s0 + $0x1a4] sm:$0xf]
  %v121 = vld [vmem:[%s0 + $0x1a8] sm:$0xf]
  %v122 = vld [vmem:[%s0 + $0x1ac] sm:$0xf]
  %v123 = vld [vmem:[%s0 + $0x1b0] sm:$0xf]
  %v124 = vld [vmem:[%s0 + $0x1b4] sm:$0xf]
  %v125 = vld [vmem:[%s0 + $0x1b8] sm:$0xf]
  %v126 = vld [vmem:[%s0 + $0x1bc] sm:$0xf]
  %v127 = vld [vmem:[%s0 + $0x1c0] sm:$0xf]
  %v128 = vld [vmem:[%s0 + $0x1c4] sm:$0xf]
  %v129 = vld [vmem:[%s0 + $0x1c8] sm:$0xf]
  %v130 = vld [vmem:[%s0 + $0x1cc] sm:$0xf]
  %v131 = vld [vmem:[%s0 + $0x1d0] sm:$0xf]
  %v132 = vld [vmem:[%s0 + $0x1d4] sm:$0xf]
  %v133 = vld [vmem:[%s0 + $0x1d8] sm:$0xf]
  %v134 = vld [vmem:[%s0 + $0x1dc] sm:$0xf]
  %v135 = vld [vmem:[%s0 + $0x1e0] sm:$0xf]
  %v136 = vld [vmem:[%s0 + $0x1e4] sm:$0xf]
  %v137 = vld [vmem:[%s0 + $0x1e8] sm:$0xf]
  %v138 = vld [vmem:[%s0 + $0x1ec] sm:$0xf]
  %v139 = vld [vmem:[%s0 + $0x1f0] sm:$0xf]
  %v140 = vld [vmem:[%s0 + $0x1f4] sm:$0xf]
  %v141 = vld [vmem:[%s0 + $0x1f8] sm:$0xf]
  %v142 = vld [vmem:[%s0 + $0x1fc] sm:$0xf]
  %v143 = vld [vmem:[%s0 + $0x200] sm:$0xf]
  %v144 = vld [vmem:[%s0 + $0x204] sm:$0xf]
  %v145 = vld [vmem:[%s0 + $0x208] sm:$0xf]
  %v146 = vld [vmem:[%s0 + $0x20c] sm:$0xf]
  %v147 = vld [vmem:[%s0 + $0x210] sm:$0xf]
  %v148 = vld [vmem:[%s0 + $0x214] sm:$0xf]
  %v149 = vld [vmem:[%s0 + $0x218] sm:$0xf]
  %v150 = vld [vmem:[%s0 + $0x21c] sm:$0xf]
  %v151 = vld [vmem:[%s0 + $0x220] sm:$0xf]
  %v152 = vld [vmem:[%s0 + $0x224] sm:$0xf]
  %v153 = vld [vmem:[%s0 + $0x228] sm:$0xf]
  %v154 = vld [vmem:[%s0 + $0x22c] sm:$0xf]
  %v155 = vld [vmem:[%s0 + $0x230] sm:$0xf]
  %v156 = vld [vmem:[%s0 + $0x234] sm:$0xf]
  %v157 = vld [vmem:[%s0 + $0x238] sm:$0xf]
  %v158 = vld [vmem:[%s0 + $0x23c] sm:$0xf]
  %v159 = vld [vmem:[%s0 + $0x240] sm:$0xf]
  %v160 = vld [vmem:[%s0 + $0x244] sm:$0xf]
  %v161 = vld [vmem:[%s0 + $0x248] sm:$0xf]
  %v162 = vld [vmem:[%s0 + $0x24c] sm:$0xf]
  %v163 = vld [vmem:[%s0 + $0x250] sm:$0xf]
  %v164 = vld [vmem:[%s0 + $0x254] sm:$0xf]
  %v165 = vld [vmem:[%s0 + $0x258] sm:$0xf]
  %v166 = vld [vmem:[%s0 + $0x25c] sm:$0xf]
  %v167 = vld [vmem:[%s0 + $0x260] sm:$0xf]
  %v168 = vld [vmem:[%s0 + $0x264] sm:$0xf]
  %v169 = vld [vmem:[%s0 + $0x268] sm:$0xf]
  %v170 = vld [vmem:[%s0 + $0x26c] sm:$0xf]
  %v171 = vld [vmem:[%s0 + $0x270] sm:$0xf]
  %v172 = vld [vmem:[%s0 + $0x274] sm:$0xf]
  %v173 = vld [vmem:[%s0 + $0x278] sm:$0xf]
  %v174 = vld [vmem:[%s0 + $0x27c] sm:$0xf]
  %v175 = vld [vmem:[%s0 + $0x280] sm:$0xf]
  %v176 = vld [vmem:[%s0 + $0x284] sm:$0xf]
  %v177 = vld [vmem:[%s0 + $0x288] sm:$0xf]
  %v178 = vld [vmem:[%s0 + $0x28c] sm:$0xf]
  %v179 = vld [vmem:[%s0 + $0x290] sm:$0xf]
  %v180 = vld [vmem:[%s0 + $0x294] sm:$0xf]
  %v181 = vld [vmem:[%s0 + $0x298] sm:$0xf]
  %v182 = vld [vmem:[%s0 + $0x29c] sm:$0xf]
  %v183 = vld [vmem:[%s0 + $0x2a0] sm:$0xf]
  %v184 = vld [vmem:[%s0 + $0x2a4] sm:$0xf]
  %v185 = vld [vmem:[%s0 + $0x2a8] sm:$0xf]
  %v186 = vld [vmem:[%s0 + $0x2ac] sm:$0xf]
  %v187 = vld [vmem:[%s0 + $0x2b0] sm:$0xf]
  %v188 = vld [vmem:[%s0 + $0x2b4] sm:$0xf]
  %v189 = vld [vmem:[%s0 + $0x2b8] sm:$0xf]
  %v190 = vld [vmem:[%s0 + $0x2bc] sm:$0xf]
  %v191 = vld [vmem:[%s0 + $0x2c0] sm:$0xf]
  %v192 = vld [vmem:[%s0 + $0x2c4] sm:$0xf]
  %v193 = vld [vmem:[%s0 + $0x2c8] sm:$0xf]
  %v194 = vld [vmem:[%s0 + $0x2cc] sm:$0xf]
  %v195 = vld [vmem:[%s0 + $0x2d0] sm:$0xf]
  %v196 = vld [vmem:[%s0 + $0x2d4] sm:$0xf]
  %v197 = vld [vmem:[%s0 + $0x2d8] sm:$0xf]
  %v198 = vld [vmem:[%s0 + $0x2dc] sm:$0xf]
  %v199 = vld [vmem:[%s0 + $0x2e0] sm:$0xf]
  %v200 = vld [vmem:[%s0 + $0x2e4] sm:$0xf]
  %v201 = vld [vmem:[%s0 + $0x2e8] sm:$0xf]
  %v202 = vld [vmem:[%s0 + $0x2ec] sm:$0xf]
  %v203 = vld [vmem:[%s0 + $0x2f0] sm:$0xf]
  %v204 = vld [vmem:[%s0 + $0x2f4] sm:$0xf]
  %v205 = vld [vmem:[%s0 + $0x2f8] sm:$0xf]
  %v206 = vld [vmem:[%s0 + $0x2fc] sm:$0xf]
  %v207 = vld [vmem:[%s0 + $0x300] sm:$0xf]
  %v208 = vld [vmem:[%s0 + $0x304] sm:$0xf]
  %v209 = vld [vmem:[%s0 + $0x308] sm:$0xf]
  %v210 = vld [vmem:[%s0 + $0x30c] sm:$0xf]
  %v211 = vld [vmem:[%s0 + $0x310] sm:$0xf]
  %v212 = vld [vmem:[%s0 + $0x314] sm:$0xf]
  %v213 = vld [vmem:[%s0 + $0x318] sm:$0xf]
  %v214 = vld [vmem:[%s0 + $0x31c] sm:$0xf]
  %v215 = vld [vmem:[%s1] sm:$0xf]
  %v216 = vld [vmem:[%s1 + $0x4] sm:$0xf]
  %v217 = vld [vmem:[%s1 + $0x8] sm:$0xf]
  %v218 = vld [vmem:[%s1 + $0xc] sm:$0x1]
  %v419 = vunpack.c.l.b16 %v15
  %v420 = vunpack.c.l.b16 %v16
  %v421 = vunpack.c.l.b16 %v17
  %v422 = vunpack.c.l.b16 %v18
  %v423 = vunpack.c.l.b16 %v19
  %v424 = vunpack.c.l.b16 %v20
  %v425 = vunpack.c.l.b16 %v21
  %v426 = vunpack.c.l.b16 %v22
  %v427 = vunpack.c.l.b16 %v23
  %v428 = vunpack.c.l.b16 %v24
  %v429 = vunpack.c.l.b16 %v25
  %v430 = vunpack.c.l.b16 %v26
  %v431 = vunpack.c.l.b16 %v27
  %v432 = vunpack.c.l.b16 %v28
  %v433 = vunpack.c.l.b16 %v29
  %v434 = vunpack.c.l.b16 %v30
  %v435 = vunpack.c.l.b16 %v31
  %v436 = vunpack.c.l.b16 %v32
  %v437 = vunpack.c.l.b16 %v33
  %v438 = vunpack.c.l.b16 %v34
  %v439 = vunpack.c.l.b16 %v35
  %v440 = vunpack.c.l.b16 %v36
  %v441 = vunpack.c.l.b16 %v37
  %v442 = vunpack.c.l.b16 %v38
  %v443 = vunpack.c.l.b16 %v39
  %v444 = vunpack.c.l.b16 %v40
  %v445 = vunpack.c.l.b16 %v41
  %v446 = vunpack.c.l.b16 %v42
  %v447 = vunpack.c.l.b16 %v43
  %v448 = vunpack.c.l.b16 %v44
  %v449 = vunpack.c.l.b16 %v45
  %v450 = vunpack.c.l.b16 %v46
  %v451 = vunpack.c.l.b16 %v47
  %v452 = vunpack.c.l.b16 %v48
  %v453 = vunpack.c.l.b16 %v49
  %v454 = vunpack.c.l.b16 %v50
  %v455 = vunpack.c.l.b16 %v51
  %v456 = vunpack.c.l.b16 %v52
  %v457 = vunpack.c.l.b16 %v53
  %v458 = vunpack.c.l.b16 %v54
  %v459 = vunpack.c.l.b16 %v55
  %v460 = vunpack.c.l.b16 %v56
  %v461 = vunpack.c.l.b16 %v57
  %v462 = vunpack.c.l.b16 %v58
  %v463 = vunpack.c.l.b16 %v59
  %v464 = vunpack.c.l.b16 %v60
  %v465 = vunpack.c.l.b16 %v61
  %v466 = vunpack.c.l.b16 %v62
  %v467 = vunpack.c.l.b16 %v63
  %v468 = vunpack.c.l.b16 %v64
  %v469 = vunpack.c.l.b16 %v65
  %v470 = vunpack.c.l.b16 %v66
  %v471 = vunpack.c.l.b16 %v67
  %v472 = vunpack.c.l.b16 %v68
  %v473 = vunpack.c.l.b16 %v69
  %v474 = vunpack.c.l.b16 %v70
  %v475 = vunpack.c.l.b16 %v71
  %v476 = vunpack.c.l.b16 %v72
  %v477 = vunpack.c.l.b16 %v73
  %v478 = vunpack.c.l.b16 %v74
  %v479 = vunpack.c.l.b16 %v75
  %v480 = vunpack.c.l.b16 %v76
  %v481 = vunpack.c.l.b16 %v77
  %v482 = vunpack.c.l.b16 %v78
  %v483 = vunpack.c.l.b16 %v79
  %v484 = vunpack.c.l.b16 %v80
  %v485 = vunpack.c.l.b16 %v81
  %v486 = vunpack.c.l.b16 %v82
  %v487 = vunpack.c.l.b16 %v83
  %v488 = vunpack.c.l.b16 %v84
  %v489 = vunpack.c.l.b16 %v85
  %v490 = vunpack.c.l.b16 %v86
  %v491 = vunpack.c.l.b16 %v87
  %v492 = vunpack.c.l.b16 %v88
  %v493 = vunpack.c.l.b16 %v89
  %v494 = vunpack.c.l.b16 %v90
  %v495 = vunpack.c.l.b16 %v91
  %v496 = vunpack.c.l.b16 %v92
  %v497 = vunpack.c.l.b16 %v93
  %v498 = vunpack.c.l.b16 %v94
  %v499 = vunpack.c.l.b16 %v95
  %v500 = vunpack.c.l.b16 %v96
  %v501 = vunpack.c.l.b16 %v97
  %v502 = vunpack.c.l.b16 %v98
  %v503 = vunpack.c.l.b16 %v99
  %v504 = vunpack.c.l.b16 %v100
  %v505 = vunpack.c.l.b16 %v101
  %v506 = vunpack.c.l.b16 %v102
  %v507 = vunpack.c.l.b16 %v103
  %v508 = vunpack.c.l.b16 %v104
  %v509 = vunpack.c.l.b16 %v105
  %v510 = vunpack.c.l.b16 %v106
  %v511 = vunpack.c.l.b16 %v107
  %v512 = vunpack.c.l.b16 %v108
  %v513 = vunpack.c.l.b16 %v109
  %v514 = vunpack.c.l.b16 %v110
  %v515 = vunpack.c.l.b16 %v111
  %v516 = vunpack.c.l.b16 %v112
  %v517 = vunpack.c.l.b16 %v113
  %v518 = vunpack.c.l.b16 %v114
  %v519 = vunpack.c.l.b16 %v115
  %v520 = vunpack.c.l.b16 %v116
  %v521 = vunpack.c.l.b16 %v117
  %v522 = vunpack.c.l.b16 %v118
  %v523 = vunpack.c.l.b16 %v119
  %v524 = vunpack.c.l.b16 %v120
  %v525 = vunpack.c.l.b16 %v121
  %v526 = vunpack.c.l.b16 %v122
  %v527 = vunpack.c.l.b16 %v123
  %v528 = vunpack.c.l.b16 %v124
  %v529 = vunpack.c.l.b16 %v125
  %v530 = vunpack.c.l.b16 %v126
  %v531 = vunpack.c.l.b16 %v127
  %v532 = vunpack.c.l.b16 %v128
  %v533 = vunpack.c.l.b16 %v129
  %v534 = vunpack.c.l.b16 %v130
  %v535 = vunpack.c.l.b16 %v131
  %v536 = vunpack.c.l.b16 %v132
  %v537 = vunpack.c.l.b16 %v133
  %v538 = vunpack.c.l.b16 %v134
  %v539 = vunpack.c.l.b16 %v135
  %v540 = vunpack.c.l.b16 %v136
  %v541 = vunpack.c.l.b16 %v137
  %v542 = vunpack.c.l.b16 %v138
  %v543 = vunpack.c.l.b16 %v139
  %v544 = vunpack.c.l.b16 %v140
  %v545 = vunpack.c.l.b16 %v141
  %v546 = vunpack.c.l.b16 %v142
  %v547 = vunpack.c.l.b16 %v143
  %v548 = vunpack.c.l.b16 %v144
  %v549 = vunpack.c.l.b16 %v145
  %v550 = vunpack.c.l.b16 %v146
  %v551 = vunpack.c.l.b16 %v147
  %v552 = vunpack.c.l.b16 %v148
  %v553 = vunpack.c.l.b16 %v149
  %v554 = vunpack.c.l.b16 %v150
  %v555 = vunpack.c.l.b16 %v151
  %v556 = vunpack.c.l.b16 %v152
  %v557 = vunpack.c.l.b16 %v153
  %v558 = vunpack.c.l.b16 %v154
  %v559 = vunpack.c.l.b16 %v155
  %v560 = vunpack.c.l.b16 %v156
  %v561 = vunpack.c.l.b16 %v157
  %v562 = vunpack.c.l.b16 %v158
  %v563 = vunpack.c.l.b16 %v159
  %v564 = vunpack.c.l.b16 %v160
  %v565 = vunpack.c.l.b16 %v161
  %v566 = vunpack.c.l.b16 %v162
  %v567 = vunpack.c.l.b16 %v163
  %v568 = vunpack.c.l.b16 %v164
  %v569 = vunpack.c.l.b16 %v165
  %v570 = vunpack.c.l.b16 %v166
  %v571 = vunpack.c.l.b16 %v167
  %v572 = vunpack.c.l.b16 %v168
  %v573 = vunpack.c.l.b16 %v169
  %v574 = vunpack.c.l.b16 %v170
  %v575 = vunpack.c.l.b16 %v171
  %v576 = vunpack.c.l.b16 %v172
  %v577 = vunpack.c.l.b16 %v173
  %v578 = vunpack.c.l.b16 %v174
  %v579 = vunpack.c.l.b16 %v175
  %v580 = vunpack.c.l.b16 %v176
  %v581 = vunpack.c.l.b16 %v177
  %v582 = vunpack.c.l.b16 %v178
  %v583 = vunpack.c.l.b16 %v179
  %v584 = vunpack.c.l.b16 %v180
  %v585 = vunpack.c.l.b16 %v181
  %v586 = vunpack.c.l.b16 %v182
  %v587 = vunpack.c.l.b16 %v183
  %v588 = vunpack.c.l.b16 %v184
  %v589 = vunpack.c.l.b16 %v185
  %v590 = vunpack.c.l.b16 %v186
  %v591 = vunpack.c.l.b16 %v187
  %v592 = vunpack.c.l.b16 %v188
  %v593 = vunpack.c.l.b16 %v189
  %v594 = vunpack.c.l.b16 %v190
  %v595 = vunpack.c.l.b16 %v191
  %v596 = vunpack.c.l.b16 %v192
  %v597 = vunpack.c.l.b16 %v193
  %v598 = vunpack.c.l.b16 %v194
  %v599 = vunpack.c.l.b16 %v195
  %v600 = vunpack.c.l.b16 %v196
  %v601 = vunpack.c.l.b16 %v197
  %v602 = vunpack.c.l.b16 %v198
  %v603 = vunpack.c.l.b16 %v199
  %v604 = vunpack.c.l.b16 %v200
  %v605 = vunpack.c.l.b16 %v201
  %v606 = vunpack.c.l.b16 %v202
  %v607 = vunpack.c.l.b16 %v203
  %v608 = vunpack.c.l.b16 %v204
  %v609 = vunpack.c.l.b16 %v205
  %v610 = vunpack.c.l.b16 %v206
  %v611 = vunpack.c.l.b16 %v207
  %v612 = vunpack.c.l.b16 %v208
  %v613 = vunpack.c.l.b16 %v209
  %v614 = vunpack.c.l.b16 %v210
  %v615 = vunpack.c.l.b16 %v211
  %v616 = vunpack.c.l.b16 %v212
  %v617 = vunpack.c.l.b16 %v213
  %v618 = vunpack.c.l.b16 %v214
  %v619 = vpack.c.b16 %v420, %v419
  %v620 = vpack.c.b16 %v422, %v421
  %v621 = vpack.c.b16 %v424, %v423
  %v622 = vpack.c.b16 %v426, %v425
  %v623 = vpack.c.b16 %v428, %v427
  %v624 = vpack.c.b16 %v430, %v429
  %v625 = vpack.c.b16 %v432, %v431
  %v626 = vpack.c.b16 %v434, %v433
  %v627 = vpack.c.b16 %v436, %v435
  %v628 = vpack.c.b16 %v438, %v437
  %v629 = vpack.c.b16 %v440, %v439
  %v630 = vpack.c.b16 %v442, %v441
  %v631 = vpack.c.b16 %v444, %v443
  %v632 = vpack.c.b16 %v446, %v445
  %v633 = vpack.c.b16 %v448, %v447
  %v634 = vpack.c.b16 %v450, %v449
  %v635 = vpack.c.b16 %v452, %v451
  %v636 = vpack.c.b16 %v454, %v453
  %v637 = vpack.c.b16 %v456, %v455
  %v638 = vpack.c.b16 %v458, %v457
  %v639 = vpack.c.b16 %v460, %v459
  %v640 = vpack.c.b16 %v462, %v461
  %v641 = vpack.c.b16 %v464, %v463
  %v642 = vpack.c.b16 %v466, %v465
  %v643 = vpack.c.b16 %v468, %v467
  %v644 = vpack.c.b16 %v470, %v469
  %v645 = vpack.c.b16 %v472, %v471
  %v646 = vpack.c.b16 %v474, %v473
  %v647 = vpack.c.b16 %v476, %v475
  %v648 = vpack.c.b16 %v478, %v477
  %v649 = vpack.c.b16 %v480, %v479
  %v650 = vpack.c.b16 %v482, %v481
  %v651 = vpack.c.b16 %v484, %v483
  %v652 = vpack.c.b16 %v486, %v485
  %v653 = vpack.c.b16 %v488, %v487
  %v654 = vpack.c.b16 %v490, %v489
  %v655 = vpack.c.b16 %v492, %v491
  %v656 = vpack.c.b16 %v494, %v493
  %v657 = vpack.c.b16 %v496, %v495
  %v658 = vpack.c.b16 %v498, %v497
  %v659 = vpack.c.b16 %v500, %v499
  %v660 = vpack.c.b16 %v502, %v501
  %v661 = vpack.c.b16 %v504, %v503
  %v662 = vpack.c.b16 %v506, %v505
  %v663 = vpack.c.b16 %v508, %v507
  %v664 = vpack.c.b16 %v510, %v509
  %v665 = vpack.c.b16 %v512, %v511
  %v666 = vpack.c.b16 %v514, %v513
  %v667 = vpack.c.b16 %v516, %v515
  %v668 = vpack.c.b16 %v518, %v517
  %v669 = vpack.c.b16 %v520, %v519
  %v670 = vpack.c.b16 %v522, %v521
  %v671 = vpack.c.b16 %v524, %v523
  %v672 = vpack.c.b16 %v526, %v525
  %v673 = vpack.c.b16 %v528, %v527
  %v674 = vpack.c.b16 %v530, %v529
  %v675 = vpack.c.b16 %v532, %v531
  %v676 = vpack.c.b16 %v534, %v533
  %v677 = vpack.c.b16 %v536, %v535
  %v678 = vpack.c.b16 %v538, %v537
  %v679 = vpack.c.b16 %v540, %v539
  %v680 = vpack.c.b16 %v542, %v541
  %v681 = vpack.c.b16 %v544, %v543
  %v682 = vpack.c.b16 %v546, %v545
  %v683 = vpack.c.b16 %v548, %v547
  %v684 = vpack.c.b16 %v550, %v549
  %v685 = vpack.c.b16 %v552, %v551
  %v686 = vpack.c.b16 %v554, %v553
  %v687 = vpack.c.b16 %v556, %v555
  %v688 = vpack.c.b16 %v558, %v557
  %v689 = vpack.c.b16 %v560, %v559
  %v690 = vpack.c.b16 %v562, %v561
  %v691 = vpack.c.b16 %v564, %v563
  %v692 = vpack.c.b16 %v566, %v565
  %v693 = vpack.c.b16 %v568, %v567
  %v694 = vpack.c.b16 %v570, %v569
  %v695 = vpack.c.b16 %v572, %v571
  %v696 = vpack.c.b16 %v574, %v573
  %v697 = vpack.c.b16 %v576, %v575
  %v698 = vpack.c.b16 %v578, %v577
  %v699 = vpack.c.b16 %v580, %v579
  %v700 = vpack.c.b16 %v582, %v581
  %v701 = vpack.c.b16 %v584, %v583
  %v702 = vpack.c.b16 %v586, %v585
  %v703 = vpack.c.b16 %v588, %v587
  %v704 = vpack.c.b16 %v590, %v589
  %v705 = vpack.c.b16 %v592, %v591
  %v706 = vpack.c.b16 %v594, %v593
  %v707 = vpack.c.b16 %v596, %v595
  %v708 = vpack.c.b16 %v598, %v597
  %v709 = vpack.c.b16 %v600, %v599
  %v710 = vpack.c.b16 %v602, %v601
  %v711 = vpack.c.b16 %v604, %v603
  %v712 = vpack.c.b16 %v606, %v605
  %v713 = vpack.c.b16 %v608, %v607
  %v714 = vpack.c.b16 %v610, %v609
  %v715 = vpack.c.b16 %v612, %v611
  %v716 = vpack.c.b16 %v614, %v613
  %v717 = vpack.c.b16 %v616, %v615
  %v718 = vpack.c.b16 %v618, %v617
  %v723 = vunpack.c.l.b16 %v215
  %v724 = vunpack.c.l.b16 %v216
  %v725 = vunpack.c.l.b16 %v217
  %v726 = vunpack.c.l.b16 %v218
  %v727 = vpack.c.b16 %v724, %v723
  %v728 = vpack.c.b16 %v726, %v725
  %vm730 = vcmask 203776
  %v732 = vsel %vm730, %v619, 0
  %v735 = vsel %vm730, %v620, 0
  %v738 = vsel %vm730, %v621, 0
  %v741 = vsel %vm730, %v622, 0
  %v744 = vsel %vm730, %v623, 0
  %v747 = vsel %vm730, %v624, 0
  %v750 = vsel %vm730, %v625, 0
  %v753 = vsel %vm730, %v626, 0
  %v756 = vsel %vm730, %v627, 0
  %v759 = vsel %vm730, %v628, 0
  %v762 = vsel %vm730, %v629, 0
  %v765 = vsel %vm730, %v630, 0
  %v768 = vsel %vm730, %v631, 0
  %v771 = vsel %vm730, %v632, 0
  %v774 = vsel %vm730, %v633, 0
  %v777 = vsel %vm730, %v634, 0
  %v780 = vsel %vm730, %v635, 0
  %v783 = vsel %vm730, %v636, 0
  %v786 = vsel %vm730, %v637, 0
  %v789 = vsel %vm730, %v638, 0
  %v792 = vsel %vm730, %v639, 0
  %v795 = vsel %vm730, %v640, 0
  %v798 = vsel %vm730, %v641, 0
  %v801 = vsel %vm730, %v642, 0
  %v804 = vsel %vm730, %v643, 0
  %v807 = vsel %vm730, %v644, 0
  %v810 = vsel %vm730, %v645, 0
  %v813 = vsel %vm730, %v646, 0
  %v816 = vsel %vm730, %v647, 0
  %v819 = vsel %vm730, %v648, 0
  %v822 = vsel %vm730, %v649, 0
  %v825 = vsel %vm730, %v650, 0
  %v828 = vsel %vm730, %v651, 0
  %v831 = vsel %vm730, %v652, 0
  %v834 = vsel %vm730, %v653, 0
  %v837 = vsel %vm730, %v654, 0
  %v840 = vsel %vm730, %v655, 0
  %v843 = vsel %vm730, %v656, 0
  %v846 = vsel %vm730, %v657, 0
  %v849 = vsel %vm730, %v658, 0
  %v852 = vsel %vm730, %v659, 0
  %v855 = vsel %vm730, %v660, 0
  %v858 = vsel %vm730, %v661, 0
  %v861 = vsel %vm730, %v662, 0
  %v864 = vsel %vm730, %v663, 0
  %v867 = vsel %vm730, %v664, 0
  %v870 = vsel %vm730, %v665, 0
  %v873 = vsel %vm730, %v666, 0
  %v876 = vsel %vm730, %v667, 0
  %v879 = vsel %vm730, %v668, 0
  %v882 = vsel %vm730, %v669, 0
  %v885 = vsel %vm730, %v670, 0
  %v888 = vsel %vm730, %v671, 0
  %v891 = vsel %vm730, %v672, 0
  %v894 = vsel %vm730, %v673, 0
  %v897 = vsel %vm730, %v674, 0
  %v900 = vsel %vm730, %v675, 0
  %v903 = vsel %vm730, %v676, 0
  %v906 = vsel %vm730, %v677, 0
  %v909 = vsel %vm730, %v678, 0
  %v912 = vsel %vm730, %v679, 0
  %v915 = vsel %vm730, %v680, 0
  %v918 = vsel %vm730, %v681, 0
  %v921 = vsel %vm730, %v682, 0
  %v924 = vsel %vm730, %v683, 0
  %v927 = vsel %vm730, %v684, 0
  %v930 = vsel %vm730, %v685, 0
  %v933 = vsel %vm730, %v686, 0
  %v936 = vsel %vm730, %v687, 0
  %v939 = vsel %vm730, %v688, 0
  %v942 = vsel %vm730, %v689, 0
  %v945 = vsel %vm730, %v690, 0
  %v948 = vsel %vm730, %v691, 0
  %v951 = vsel %vm730, %v692, 0
  %v954 = vsel %vm730, %v693, 0
  %v957 = vsel %vm730, %v694, 0
  %v960 = vsel %vm730, %v695, 0
  %v963 = vsel %vm730, %v696, 0
  %v966 = vsel %vm730, %v697, 0
  %v969 = vsel %vm730, %v698, 0
  %v972 = vsel %vm730, %v699, 0
  %v975 = vsel %vm730, %v700, 0
  %v978 = vsel %vm730, %v701, 0
  %v981 = vsel %vm730, %v702, 0
  %v984 = vsel %vm730, %v703, 0
  %v987 = vsel %vm730, %v704, 0
  %v990 = vsel %vm730, %v705, 0
  %v993 = vsel %vm730, %v706, 0
  %v996 = vsel %vm730, %v707, 0
  %v999 = vsel %vm730, %v708, 0
  %v1002 = vsel %vm730, %v709, 0
  %v1005 = vsel %vm730, %v710, 0
  %v1008 = vsel %vm730, %v711, 0
  %v1011 = vsel %vm730, %v712, 0
  %v1014 = vsel %vm730, %v713, 0
  %v1017 = vsel %vm730, %v714, 0
  %v1020 = vsel %vm730, %v715, 0
  %v1023 = vsel %vm730, %v716, 0
  %v1026 = vsel %vm730, %v717, 0
  %v1029 = vsel %vm730, %v718, 0
  %vm1031 = vcmask 1043456
  %vm1032 = vcmask 1044480
  %v1033 = vsel %vm1031, 4294967295, 65535
  %v1034 = vsel %vm1032, %v1033, 0
  %v1036 = vand.u32 %v728, %v1034
  %1038 = vmatprep.subr.bf16.mxu0 0
  %1039 = vmatpush1.bf16.msra.mxu0 %v727
  %1040 = vmatprep.subr.bf16.mxu0 0
  %1041 = vmatpush1.bf16.msra.mxu0 %v1036
  %1042 = vmatprep.subr.bf16.mxu0 0
  %1043 = vmatpush1.bf16.msra.mxu0 0
  %1044 = vmatprep.subr.bf16.mxu0 0
  %1045 = vmatpush1.bf16.msra.mxu0 0
  %1046 = vmatprep.subr.bf16.mxu0 0
  %1047 = vmatpush1.bf16.msra.mxu0 0
  %1048 = vmatprep.subr.bf16.mxu0 0
  %1049 = vmatpush1.bf16.msra.mxu0 0
  %1050 = vmatprep.subr.bf16.mxu0 0
  %1051 = vmatpush1.bf16.msra.mxu0 0
  %1052 = vmatprep.subr.bf16.mxu0 0
  %1053 = vmatpush1.bf16.msra.mxu0 0
  %1054 = vmatprep.subr.bf16.mxu0 0
  %1055 = vmatpush1.bf16.msra.mxu0 0
  %1056 = vmatprep.subr.bf16.mxu0 0
  %1057 = vmatpush1.bf16.msra.mxu0 0
  %1058 = vmatprep.subr.bf16.mxu0 0
  %1059 = vmatpush1.bf16.msra.mxu0 0
  %1060 = vmatprep.subr.bf16.mxu0 0
  %1061 = vmatpush1.bf16.msra.mxu0 0
  %1062 = vmatprep.subr.bf16.mxu0 0
  %1063 = vmatpush1.bf16.msra.mxu0 0
  %1064 = vmatprep.subr.bf16.mxu0 0
  %1065 = vmatpush1.bf16.msra.mxu0 0
  %1066 = vmatprep.subr.bf16.mxu0 0
  %1067 = vmatpush1.bf16.msra.mxu0 0
  %1068 = vmatprep.subr.bf16.mxu0 0
  %1069 = vmatpush1.bf16.msra.mxu0 0
  %1070 = vmatprep.mubr.bf16.mxu0 0
  %1071 = vmatmul.mubr.bf16.gmra.mrb[0].mxu0 %v732
  %v1072 = vpop.f32.mrb[0].mxu0
  %v1073 = vadd.f32 0.0, %v1072
  %v1074 = vpop.f32.mrb[0].mxu0
  %v1075 = vpop.f32.mrb[0].mxu0
  %v1076 = vadd.f32 0.0, %v1075
  %v1077 = vpop.f32.mrb[0].mxu0
  %1078 = vmatprep.mubr.bf16.mxu0 0
  %1079 = vmatmul.mubr.bf16.gmra.mrb[0].mxu0 %v735
  %v1080 = vpop.f32.mrb[0].mxu0
  %v1081 = vadd.f32 0.0, %v1080
  %v1082 = vpop.f32.mrb[0].mxu0
  %v1083 = vpop.f32.mrb[0].mxu0
  %v1084 = vadd.f32 0.0, %v1083
  %v1085 = vpop.f32.mrb[0].mxu0
  %1086 = vmatprep.mubr.bf16.mxu0 0
  %1087 = vmatmul.mubr.bf16.gmra.mrb[0].mxu0 %v738
  %v1088 = vpop.f32.mrb[0].mxu0
  %v1089 = vadd.f32 0.0, %v1088
  %v1090 = vpop.f32.mrb[0].mxu0
  %v1091 = vpop.f32.mrb[0].mxu0
  %v1092 = vadd.f32 0.0, %v1091
  %v1093 = vpop.f32.mrb[0].mxu0
  %1094 = vmatprep.mubr.bf16.mxu0 0
  %1095 = vmatmul.mubr.bf16.gmra.mrb[0].mxu0 %v741
  %v1096 = vpop.f32.mrb[0].mxu0
  %v1097 = vadd.f32 0.0, %v1096
  %v1098 = vpop.f32.mrb[0].mxu0
  %v1099 = vpop.f32.mrb[0].mxu0
  %v1100 = vadd.f32 0.0, %v1099
  %v1101 = vpop.f32.mrb[0].mxu0
  %1102 = vmatprep.mubr.bf16.mxu0 0
  %1103 = vmatmul.mubr.bf16.gmra.mrb[0].mxu0 %v744
  %v1104 = vpop.f32.mrb[0].mxu0
  %v1105 = vadd.f32 0.0, %v1104
  %v1106 = vpop.f32.mrb[0].mxu0
  %v1107 = vpop.f32.mrb[0].mxu0
  %v1108 = vadd.f32 0.0, %v1107
  %v1109 = vpop.f32.mrb[0].mxu0
  %1110 = vmatprep.mubr.bf16.mxu0 0
  %1111 = vmatmul.mubr.bf16.gmra.mrb[0].mxu0 %v747
  %v1112 = vpop.f32.mrb[0].mxu0
  %v1113 = vadd.f32 0.0, %v1112
  %v1114 = vpop.f32.mrb[0].mxu0
  %v1115 = vpop.f32.mrb[0].mxu0
  %v1116 = vadd.f32 0.0, %v1115
  %v1117 = vpop.f32.mrb[0].mxu0
  %1118 = vmatprep.mubr.bf16.mxu0 0
  %1119 = vmatmul.mubr.bf16.gmra.mrb[0].mxu0 %v750
  %v1120 = vpop.f32.mrb[0].mxu0
  %v1121 = vadd.f32 0.0, %v1120
  %v1122 = vpop.f32.mrb[0].mxu0
  %v1123 = vpop.f32.mrb[0].mxu0
  %v1124 = vadd.f32 0.0, %v1123
  %v1125 = vpop.f32.mrb[0].mxu0
  %1126 = vmatprep.mubr.bf16.mxu0 0
  %1127 = vmatmul.mubr.bf16.gmra.mrb[0].mxu0 %v753
  %v1128 = vpop.f32.mrb[0].mxu0
  %v1129 = vadd.f32 0.0, %v1128
  %v1130 = vpop.f32.mrb[0].mxu0
  %v1131 = vpop.f32.mrb[0].mxu0
  %v1132 = vadd.f32 0.0, %v1131
  %v1133 = vpop.f32.mrb[0].mxu0
  %1134 = vmatprep.mubr.bf16.mxu0 0
  %1135 = vmatmul.mubr.bf16.gmra.mrb[0].mxu0 %v756
  %v1136 = vpop.f32.mrb[0].mxu0
  %v1137 = vadd.f32 0.0, %v1136
  %v1138 = vpop.f32.mrb[0].mxu0
  %v1139 = vpop.f32.mrb[0].mxu0
  %v1140 = vadd.f32 0.0, %v1139
  %v1141 = vpop.f32.mrb[0].mxu0
  %1142 = vmatprep.mubr.bf16.mxu0 0
  %1143 = vmatmul.mubr.bf16.gmra.mrb[0].mxu0 %v759
  %v1144 = vpop.f32.mrb[0].mxu0
  %v1145 = vadd.f32 0.0, %v1144
  %v1146 = vpop.f32.mrb[0].mxu0
  %v1147 = vpop.f32.mrb[0].mxu0
  %v1148 = vadd.f32 0.0, %v1147
  %v1149 = vpop.f32.mrb[0].mxu0
  %1150 = vmatprep.mubr.bf16.mxu0 0
  %1151 = vmatmul.mubr.bf16.gmra.mrb[0].mxu0 %v762
  %v1152 = vpop.f32.mrb[0].mxu0
  %v1153 = vadd.f32 0.0, %v1152
  %v1154 = vpop.f32.mrb[0].mxu0
  %v1155 = vpop.f32.mrb[0].mxu0
  %v1156 = vadd.f32 0.0, %v1155
  %v1157 = vpop.f32.mrb[0].mxu0
  %1158 = vmatprep.mubr.bf16.mxu0 0
  %1159 = vmatmul.mubr.bf16.gmra.mrb[0].mxu0 %v765
  %v1160 = vpop.f32.mrb[0].mxu0
  %v1161 = vadd.f32 0.0, %v1160
  %v1162 = vpop.f32.mrb[0].mxu0
  %v1163 = vpop.f32.mrb[0].mxu0
  %v1164 = vadd.f32 0.0, %v1163
  %v1165 = vpop.f32.mrb[0].mxu0
  %1166 = vmatprep.mubr.bf16.mxu0 0
  %1167 = vmatmul.mubr.bf16.gmra.mrb[0].mxu0 %v768
  %v1168 = vpop.f32.mrb[0].mxu0
  %v1169 = vadd.f32 0.0, %v1168
  %v1170 = vpop.f32.mrb[0].mxu0
  %v1171 = vpop.f32.mrb[0].mxu0
  %v1172 = vadd.f32 0.0, %v1171
  %v1173 = vpop.f32.mrb[0].mxu0
  %1174 = vmatprep.mubr.bf16.mxu0 0
  %1175 = vmatmul.mubr.bf16.gmra.mrb[0].mxu0 %v771
  %v1176 = vpop.f32.mrb[0].mxu0
  %v1177 = vadd.f32 0.0, %v1176
  %v1178 = vpop.f32.mrb[0].mxu0
  %v1179 = vpop.f32.mrb[0].mxu0
  %v1180 = vadd.f32 0.0, %v1179
  %v1181 = vpop.f32.mrb[0].mxu0
  %1182 = vmatprep.mubr.bf16.mxu0 0
  %1183 = vmatmul.mubr.bf16.gmra.mrb[0].mxu0 %v774
  %v1184 = vpop.f32.mrb[0].mxu0
  %v1185 = vadd.f32 0.0, %v1184
  %v1186 = vpop.f32.mrb[0].mxu0
  %v1187 = vpop.f32.mrb[0].mxu0
  %v1188 = vadd.f32 0.0, %v1187
  %v1189 = vpop.f32.mrb[0].mxu0
  %1190 = vmatprep.mubr.bf16.mxu0 0
  %1191 = vmatmul.mubr.bf16.gmra.mrb[0].mxu0 %v777
  %v1192 = vpop.f32.mrb[0].mxu0
  %v1193 = vadd.f32 0.0, %v1192
  %v1194 = vpop.f32.mrb[0].mxu0
  %v1195 = vpop.f32.mrb[0].mxu0
  %v1196 = vadd.f32 0.0, %v1195
  %v1197 = vpop.f32.mrb[0].mxu0
  %1198 = vmatprep.mubr.bf16.mxu0 0
  %1199 = vmatmul.mubr.bf16.gmra.mrb[0].mxu0 %v780
  %v1200 = vpop.f32.mrb[0].mxu0
  %v1201 = vadd.f32 0.0, %v1200
  %v1202 = vpop.f32.mrb[0].mxu0
  %v1203 = vpop.f32.mrb[0].mxu0
  %v1204 = vadd.f32 0.0, %v1203
  %v1205 = vpop.f32.mrb[0].mxu0
  %1206 = vmatprep.mubr.bf16.mxu0 0
  %1207 = vmatmul.mubr.bf16.gmra.mrb[0].mxu0 %v783
  %v1208 = vpop.f32.mrb[0].mxu0
  %v1209 = vadd.f32 0.0, %v1208
  %v1210 = vpop.f32.mrb[0].mxu0
  %v1211 = vpop.f32.mrb[0].mxu0
  %v1212 = vadd.f32 0.0, %v1211
  %v1213 = vpop.f32.mrb[0].mxu0
  %1214 = vmatprep.mubr.bf16.mxu0 0
  %1215 = vmatmul.mubr.bf16.gmra.mrb[0].mxu0 %v786
  %v1216 = vpop.f32.mrb[0].mxu0
  %v1217 = vadd.f32 0.0, %v1216
  %v1218 = vpop.f32.mrb[0].mxu0
  %v1219 = vpop.f32.mrb[0].mxu0
  %v1220 = vadd.f32 0.0, %v1219
  %v1221 = vpop.f32.mrb[0].mxu0
  %1222 = vmatprep.mubr.bf16.mxu0 0
  %1223 = vmatmul.mubr.bf16.gmra.mrb[0].mxu0 %v789
  %v1224 = vpop.f32.mrb[0].mxu0
  %v1225 = vadd.f32 0.0, %v1224
  %v1226 = vpop.f32.mrb[0].mxu0
  %v1227 = vpop.f32.mrb[0].mxu0
  %v1228 = vadd.f32 0.0, %v1227
  %v1229 = vpop.f32.mrb[0].mxu0
  %1230 = vmatprep.mubr.bf16.mxu0 0
  %1231 = vmatmul.mubr.bf16.gmra.mrb[0].mxu0 %v792
  %v1232 = vpop.f32.mrb[0].mxu0
  %v1233 = vadd.f32 0.0, %v1232
  %v1234 = vpop.f32.mrb[0].mxu0
  %v1235 = vpop.f32.mrb[0].mxu0
  %v1236 = vadd.f32 0.0, %v1235
  %v1237 = vpop.f32.mrb[0].mxu0
  %1238 = vmatprep.mubr.bf16.mxu0 0
  %1239 = vmatmul.mubr.bf16.gmra.mrb[0].mxu0 %v795
  %v1240 = vpop.f32.mrb[0].mxu0
  %v1241 = vadd.f32 0.0, %v1240
  %v1242 = vpop.f32.mrb[0].mxu0
  %v1243 = vpop.f32.mrb[0].mxu0
  %v1244 = vadd.f32 0.0, %v1243
  %v1245 = vpop.f32.mrb[0].mxu0
  %1246 = vmatprep.mubr.bf16.mxu0 0
  %1247 = vmatmul.mubr.bf16.gmra.mrb[0].mxu0 %v798
  %v1248 = vpop.f32.mrb[0].mxu0
  %v1249 = vadd.f32 0.0, %v1248
  %v1250 = vpop.f32.mrb[0].mxu0
  %v1251 = vpop.f32.mrb[0].mxu0
  %v1252 = vadd.f32 0.0, %v1251
  %v1253 = vpop.f32.mrb[0].mxu0
  %1254 = vmatprep.mubr.bf16.mxu0 0
  %1255 = vmatmul.mubr.bf16.gmra.mrb[0].mxu0 %v801
  %v1256 = vpop.f32.mrb[0].mxu0
  %v1257 = vadd.f32 0.0, %v1256
  %v1258 = vpop.f32.mrb[0].mxu0
  %v1259 = vpop.f32.mrb[0].mxu0
  %v1260 = vadd.f32 0.0, %v1259
  %v1261 = vpop.f32.mrb[0].mxu0
  %1262 = vmatprep.mubr.bf16.mxu0 0
  %1263 = vmatmul.mubr.bf16.gmra.mrb[0].mxu0 %v804
  %v1264 = vpop.f32.mrb[0].mxu0
  %v1265 = vadd.f32 0.0, %v1264
  %v1266 = vpop.f32.mrb[0].mxu0
  %v1267 = vpop.f32.mrb[0].mxu0
  %v1268 = vadd.f32 0.0, %v1267
  %v1269 = vpop.f32.mrb[0].mxu0
  %1270 = vmatprep.mubr.bf16.mxu0 0
  %1271 = vmatmul.mubr.bf16.gmra.mrb[0].mxu0 %v807
  %v1272 = vpop.f32.mrb[0].mxu0
  %v1273 = vadd.f32 0.0, %v1272
  %v1274 = vpop.f32.mrb[0].mxu0
  %v1275 = vpop.f32.mrb[0].mxu0
  %v1276 = vadd.f32 0.0, %v1275
  %v1277 = vpop.f32.mrb[0].mxu0
  %1278 = vmatprep.mubr.bf16.mxu0 0
  %1279 = vmatmul.mubr.bf16.gmra.mrb[0].mxu0 %v810
  %v1280 = vpop.f32.mrb[0].mxu0
  %v1281 = vadd.f32 0.0, %v1280
  %v1282 = vpop.f32.mrb[0].mxu0
  %v1283 = vpop.f32.mrb[0].mxu0
  %v1284 = vadd.f32 0.0, %v1283
  %v1285 = vpop.f32.mrb[0].mxu0
  %1286 = vmatprep.mubr.bf16.mxu0 0
  %1287 = vmatmul.mubr.bf16.gmra.mrb[0].mxu0 %v813
  %v1288 = vpop.f32.mrb[0].mxu0
  %v1289 = vadd.f32 0.0, %v1288
  %v1290 = vpop.f32.mrb[0].mxu0
  %v1291 = vpop.f32.mrb[0].mxu0
  %v1292 = vadd.f32 0.0, %v1291
  %v1293 = vpop.f32.mrb[0].mxu0
  %1294 = vmatprep.mubr.bf16.mxu0 0
  %1295 = vmatmul.mubr.bf16.gmra.mrb[0].mxu0 %v816
  %v1296 = vpop.f32.mrb[0].mxu0
  %v1297 = vadd.f32 0.0, %v1296
  %v1298 = vpop.f32.mrb[0].mxu0
  %v1299 = vpop.f32.mrb[0].mxu0
  %v1300 = vadd.f32 0.0, %v1299
  %v1301 = vpop.f32.mrb[0].mxu0
  %1302 = vmatprep.mubr.bf16.mxu0 0
  %1303 = vmatmul.mubr.bf16.gmra.mrb[0].mxu0 %v819
  %v1304 = vpop.f32.mrb[0].mxu0
  %v1305 = vadd.f32 0.0, %v1304
  %v1306 = vpop.f32.mrb[0].mxu0
  %v1307 = vpop.f32.mrb[0].mxu0
  %v1308 = vadd.f32 0.0, %v1307
  %v1309 = vpop.f32.mrb[0].mxu0
  %1310 = vmatprep.mubr.bf16.mxu0 0
  %1311 = vmatmul.mubr.bf16.gmra.mrb[0].mxu0 %v822
  %v1312 = vpop.f32.mrb[0].mxu0
  %v1313 = vadd.f32 0.0, %v1312
  %v1314 = vpop.f32.mrb[0].mxu0
  %v1315 = vpop.f32.mrb[0].mxu0
  %v1316 = vadd.f32 0.0, %v1315
  %v1317 = vpop.f32.mrb[0].mxu0
  %1318 = vmatprep.mubr.bf16.mxu0 0
  %1319 = vmatmul.mubr.bf16.gmra.mrb[0].mxu0 %v825
  %v1320 = vpop.f32.mrb[0].mxu0
  %v1321 = vadd.f32 0.0, %v1320
  %v1322 = vpop.f32.mrb[0].mxu0
  %v1323 = vpop.f32.mrb[0].mxu0
  %v1324 = vadd.f32 0.0, %v1323
  %v1325 = vpop.f32.mrb[0].mxu0
  %1326 = vmatprep.mubr.bf16.mxu0 0
  %1327 = vmatmul.mubr.bf16.gmra.mrb[0].mxu0 %v828
  %v1328 = vpop.f32.mrb[0].mxu0
  %v1329 = vadd.f32 0.0, %v1328
  %v1330 = vpop.f32.mrb[0].mxu0
  %v1331 = vpop.f32.mrb[0].mxu0
  %v1332 = vadd.f32 0.0, %v1331
  %v1333 = vpop.f32.mrb[0].mxu0
  %1334 = vmatprep.mubr.bf16.mxu0 0
  %1335 = vmatmul.mubr.bf16.gmra.mrb[0].mxu0 %v831
  %v1336 = vpop.f32.mrb[0].mxu0
  %v1337 = vadd.f32 0.0, %v1336
  %v1338 = vpop.f32.mrb[0].mxu0
  %v1339 = vpop.f32.mrb[0].mxu0
  %v1340 = vadd.f32 0.0, %v1339
  %v1341 = vpop.f32.mrb[0].mxu0
  %1342 = vmatprep.mubr.bf16.mxu0 0
  %1343 = vmatmul.mubr.bf16.gmra.mrb[0].mxu0 %v834
  %v1344 = vpop.f32.mrb[0].mxu0
  %v1345 = vadd.f32 0.0, %v1344
  %v1346 = vpop.f32.mrb[0].mxu0
  %v1347 = vpop.f32.mrb[0].mxu0
  %v1348 = vadd.f32 0.0, %v1347
  %v1349 = vpop.f32.mrb[0].mxu0
  %1350 = vmatprep.mubr.bf16.mxu0 0
  %1351 = vmatmul.mubr.bf16.gmra.mrb[0].mxu0 %v837
  %v1352 = vpop.f32.mrb[0].mxu0
  %v1353 = vadd.f32 0.0, %v1352
  %v1354 = vpop.f32.mrb[0].mxu0
  %v1355 = vpop.f32.mrb[0].mxu0
  %v1356 = vadd.f32 0.0, %v1355
  %v1357 = vpop.f32.mrb[0].mxu0
  %1358 = vmatprep.mubr.bf16.mxu0 0
  %1359 = vmatmul.mubr.bf16.gmra.mrb[0].mxu0 %v840
  %v1360 = vpop.f32.mrb[0].mxu0
  %v1361 = vadd.f32 0.0, %v1360
  %v1362 = vpop.f32.mrb[0].mxu0
  %v1363 = vpop.f32.mrb[0].mxu0
  %v1364 = vadd.f32 0.0, %v1363
  %v1365 = vpop.f32.mrb[0].mxu0
  %1366 = vmatprep.mubr.bf16.mxu0 0
  %1367 = vmatmul.mubr.bf16.gmra.mrb[0].mxu0 %v843
  %v1368 = vpop.f32.mrb[0].mxu0
  %v1369 = vadd.f32 0.0, %v1368
  %v1370 = vpop.f32.mrb[0].mxu0
  %v1371 = vpop.f32.mrb[0].mxu0
  %v1372 = vadd.f32 0.0, %v1371
  %v1373 = vpop.f32.mrb[0].mxu0
  %1374 = vmatprep.mubr.bf16.mxu0 0
  %1375 = vmatmul.mubr.bf16.gmra.mrb[0].mxu0 %v846
  %v1376 = vpop.f32.mrb[0].mxu0
  %v1377 = vadd.f32 0.0, %v1376
  %v1378 = vpop.f32.mrb[0].mxu0
  %v1379 = vpop.f32.mrb[0].mxu0
  %v1380 = vadd.f32 0.0, %v1379
  %v1381 = vpop.f32.mrb[0].mxu0
  %1382 = vmatprep.mubr.bf16.mxu0 0
  %1383 = vmatmul.mubr.bf16.gmra.mrb[0].mxu0 %v849
  %v1384 = vpop.f32.mrb[0].mxu0
  %v1385 = vadd.f32 0.0, %v1384
  %v1386 = vpop.f32.mrb[0].mxu0
  %v1387 = vpop.f32.mrb[0].mxu0
  %v1388 = vadd.f32 0.0, %v1387
  %v1389 = vpop.f32.mrb[0].mxu0
  %1390 = vmatprep.mubr.bf16.mxu0 0
  %1391 = vmatmul.mubr.bf16.gmra.mrb[0].mxu0 %v852
  %v1392 = vpop.f32.mrb[0].mxu0
  %v1393 = vadd.f32 0.0, %v1392
  %v1394 = vpop.f32.mrb[0].mxu0
  %v1395 = vpop.f32.mrb[0].mxu0
  %v1396 = vadd.f32 0.0, %v1395
  %v1397 = vpop.f32.mrb[0].mxu0
  %1398 = vmatprep.mubr.bf16.mxu0 0
  %1399 = vmatmul.mubr.bf16.gmra.mrb[0].mxu0 %v855
  %v1400 = vpop.f32.mrb[0].mxu0
  %v1401 = vadd.f32 0.0, %v1400
  %v1402 = vpop.f32.mrb[0].mxu0
  %v1403 = vpop.f32.mrb[0].mxu0
  %v1404 = vadd.f32 0.0, %v1403
  %v1405 = vpop.f32.mrb[0].mxu0
  %1406 = vmatprep.mubr.bf16.mxu0 0
  %1407 = vmatmul.mubr.bf16.gmra.mrb[0].mxu0 %v858
  %v1408 = vpop.f32.mrb[0].mxu0
  %v1409 = vadd.f32 0.0, %v1408
  %v1410 = vpop.f32.mrb[0].mxu0
  %v1411 = vpop.f32.mrb[0].mxu0
  %v1412 = vadd.f32 0.0, %v1411
  %v1413 = vpop.f32.mrb[0].mxu0
  %1414 = vmatprep.mubr.bf16.mxu0 0
  %1415 = vmatmul.mubr.bf16.gmra.mrb[0].mxu0 %v861
  %v1416 = vpop.f32.mrb[0].mxu0
  %v1417 = vadd.f32 0.0, %v1416
  %v1418 = vpop.f32.mrb[0].mxu0
  %v1419 = vpop.f32.mrb[0].mxu0
  %v1420 = vadd.f32 0.0, %v1419
  %v1421 = vpop.f32.mrb[0].mxu0
  %1422 = vmatprep.mubr.bf16.mxu0 0
  %1423 = vmatmul.mubr.bf16.gmra.mrb[0].mxu0 %v864
  %v1424 = vpop.f32.mrb[0].mxu0
  %v1425 = vadd.f32 0.0, %v1424
  %v1426 = vpop.f32.mrb[0].mxu0
  %v1427 = vpop.f32.mrb[0].mxu0
  %v1428 = vadd.f32 0.0, %v1427
  %v1429 = vpop.f32.mrb[0].mxu0
  %1430 = vmatprep.mubr.bf16.mxu0 0
  %1431 = vmatmul.mubr.bf16.gmra.mrb[0].mxu0 %v867
  %v1432 = vpop.f32.mrb[0].mxu0
  %v1433 = vadd.f32 0.0, %v1432
  %v1434 = vpop.f32.mrb[0].mxu0
  %v1435 = vpop.f32.mrb[0].mxu0
  %v1436 = vadd.f32 0.0, %v1435
  %v1437 = vpop.f32.mrb[0].mxu0
  %1438 = vmatprep.mubr.bf16.mxu0 0
  %1439 = vmatmul.mubr.bf16.gmra.mrb[0].mxu0 %v870
  %v1440 = vpop.f32.mrb[0].mxu0
  %v1441 = vadd.f32 0.0, %v1440
  %v1442 = vpop.f32.mrb[0].mxu0
  %v1443 = vpop.f32.mrb[0].mxu0
  %v1444 = vadd.f32 0.0, %v1443
  %v1445 = vpop.f32.mrb[0].mxu0
  %1446 = vmatprep.mubr.bf16.mxu0 0
  %1447 = vmatmul.mubr.bf16.gmra.mrb[0].mxu0 %v873
  %v1448 = vpop.f32.mrb[0].mxu0
  %v1449 = vadd.f32 0.0, %v1448
  %v1450 = vpop.f32.mrb[0].mxu0
  %v1451 = vpop.f32.mrb[0].mxu0
  %v1452 = vadd.f32 0.0, %v1451
  %v1453 = vpop.f32.mrb[0].mxu0
  %1454 = vmatprep.mubr.bf16.mxu0 0
  %1455 = vmatmul.mubr.bf16.gmra.mrb[0].mxu0 %v876
  %v1456 = vpop.f32.mrb[0].mxu0
  %v1457 = vadd.f32 0.0, %v1456
  %v1458 = vpop.f32.mrb[0].mxu0
  %v1459 = vpop.f32.mrb[0].mxu0
  %v1460 = vadd.f32 0.0, %v1459
  %v1461 = vpop.f32.mrb[0].mxu0
  %1462 = vmatprep.mubr.bf16.mxu0 0
  %1463 = vmatmul.mubr.bf16.gmra.mrb[0].mxu0 %v879
  %v1464 = vpop.f32.mrb[0].mxu0
  %v1465 = vadd.f32 0.0, %v1464
  %v1466 = vpop.f32.mrb[0].mxu0
  %v1467 = vpop.f32.mrb[0].mxu0
  %v1468 = vadd.f32 0.0, %v1467
  %v1469 = vpop.f32.mrb[0].mxu0
  %1470 = vmatprep.mubr.bf16.mxu0 0
  %1471 = vmatmul.mubr.bf16.gmra.mrb[0].mxu0 %v882
  %v1472 = vpop.f32.mrb[0].mxu0
  %v1473 = vadd.f32 0.0, %v1472
  %v1474 = vpop.f32.mrb[0].mxu0
  %v1475 = vpop.f32.mrb[0].mxu0
  %v1476 = vadd.f32 0.0, %v1475
  %v1477 = vpop.f32.mrb[0].mxu0
  %1478 = vmatprep.mubr.bf16.mxu0 0
  %1479 = vmatmul.mubr.bf16.gmra.mrb[0].mxu0 %v885
  %v1480 = vpop.f32.mrb[0].mxu0
  %v1481 = vadd.f32 0.0, %v1480
  %v1482 = vpop.f32.mrb[0].mxu0
  %v1483 = vpop.f32.mrb[0].mxu0
  %v1484 = vadd.f32 0.0, %v1483
  %v1485 = vpop.f32.mrb[0].mxu0
  %1486 = vmatprep.mubr.bf16.mxu0 0
  %1487 = vmatmul.mubr.bf16.gmra.mrb[0].mxu0 %v888
  %v1488 = vpop.f32.mrb[0].mxu0
  %v1489 = vadd.f32 0.0, %v1488
  %v1490 = vpop.f32.mrb[0].mxu0
  %v1491 = vpop.f32.mrb[0].mxu0
  %v1492 = vadd.f32 0.0, %v1491
  %v1493 = vpop.f32.mrb[0].mxu0
  %1494 = vmatprep.mubr.bf16.mxu0 0
  %1495 = vmatmul.mubr.bf16.gmra.mrb[0].mxu0 %v891
  %v1496 = vpop.f32.mrb[0].mxu0
  %v1497 = vadd.f32 0.0, %v1496
  %v1498 = vpop.f32.mrb[0].mxu0
  %v1499 = vpop.f32.mrb[0].mxu0
  %v1500 = vadd.f32 0.0, %v1499
  %v1501 = vpop.f32.mrb[0].mxu0
  %1502 = vmatprep.mubr.bf16.mxu0 0
  %1503 = vmatmul.mubr.bf16.gmra.mrb[0].mxu0 %v894
  %v1504 = vpop.f32.mrb[0].mxu0
  %v1505 = vadd.f32 0.0, %v1504
  %v1506 = vpop.f32.mrb[0].mxu0
  %v1507 = vpop.f32.mrb[0].mxu0
  %v1508 = vadd.f32 0.0, %v1507
  %v1509 = vpop.f32.mrb[0].mxu0
  %1510 = vmatprep.mubr.bf16.mxu0 0
  %1511 = vmatmul.mubr.bf16.gmra.mrb[0].mxu0 %v897
  %v1512 = vpop.f32.mrb[0].mxu0
  %v1513 = vadd.f32 0.0, %v1512
  %v1514 = vpop.f32.mrb[0].mxu0
  %v1515 = vpop.f32.mrb[0].mxu0
  %v1516 = vadd.f32 0.0, %v1515
  %v1517 = vpop.f32.mrb[0].mxu0
  %1518 = vmatprep.mubr.bf16.mxu0 0
  %1519 = vmatmul.mubr.bf16.gmra.mrb[0].mxu0 %v900
  %v1520 = vpop.f32.mrb[0].mxu0
  %v1521 = vadd.f32 0.0, %v1520
  %v1522 = vpop.f32.mrb[0].mxu0
  %v1523 = vpop.f32.mrb[0].mxu0
  %v1524 = vadd.f32 0.0, %v1523
  %v1525 = vpop.f32.mrb[0].mxu0
  %1526 = vmatprep.mubr.bf16.mxu0 0
  %1527 = vmatmul.mubr.bf16.gmra.mrb[0].mxu0 %v903
  %v1528 = vpop.f32.mrb[0].mxu0
  %v1529 = vadd.f32 0.0, %v1528
  %v1530 = vpop.f32.mrb[0].mxu0
  %v1531 = vpop.f32.mrb[0].mxu0
  %v1532 = vadd.f32 0.0, %v1531
  %v1533 = vpop.f32.mrb[0].mxu0
  %1534 = vmatprep.mubr.bf16.mxu0 0
  %1535 = vmatmul.mubr.bf16.gmra.mrb[0].mxu0 %v906
  %v1536 = vpop.f32.mrb[0].mxu0
  %v1537 = vadd.f32 0.0, %v1536
  %v1538 = vpop.f32.mrb[0].mxu0
  %v1539 = vpop.f32.mrb[0].mxu0
  %v1540 = vadd.f32 0.0, %v1539
  %v1541 = vpop.f32.mrb[0].mxu0
  %1542 = vmatprep.mubr.bf16.mxu0 0
  %1543 = vmatmul.mubr.bf16.gmra.mrb[0].mxu0 %v909
  %v1544 = vpop.f32.mrb[0].mxu0
  %v1545 = vadd.f32 0.0, %v1544
  %v1546 = vpop.f32.mrb[0].mxu0
  %v1547 = vpop.f32.mrb[0].mxu0
  %v1548 = vadd.f32 0.0, %v1547
  %v1549 = vpop.f32.mrb[0].mxu0
  %1550 = vmatprep.mubr.bf16.mxu0 0
  %1551 = vmatmul.mubr.bf16.gmra.mrb[0].mxu0 %v912
  %v1552 = vpop.f32.mrb[0].mxu0
  %v1553 = vadd.f32 0.0, %v1552
  %v1554 = vpop.f32.mrb[0].mxu0
  %v1555 = vpop.f32.mrb[0].mxu0
  %v1556 = vadd.f32 0.0, %v1555
  %v1557 = vpop.f32.mrb[0].mxu0
  %1558 = vmatprep.mubr.bf16.mxu0 0
  %1559 = vmatmul.mubr.bf16.gmra.mrb[0].mxu0 %v915
  %v1560 = vpop.f32.mrb[0].mxu0
  %v1561 = vadd.f32 0.0, %v1560
  %v1562 = vpop.f32.mrb[0].mxu0
  %v1563 = vpop.f32.mrb[0].mxu0
  %v1564 = vadd.f32 0.0, %v1563
  %v1565 = vpop.f32.mrb[0].mxu0
  %1566 = vmatprep.mubr.bf16.mxu0 0
  %1567 = vmatmul.mubr.bf16.gmra.mrb[0].mxu0 %v918
  %v1568 = vpop.f32.mrb[0].mxu0
  %v1569 = vadd.f32 0.0, %v1568
  %v1570 = vpop.f32.mrb[0].mxu0
  %v1571 = vpop.f32.mrb[0].mxu0
  %v1572 = vadd.f32 0.0, %v1571
  %v1573 = vpop.f32.mrb[0].mxu0
  %1574 = vmatprep.mubr.bf16.mxu0 0
  %1575 = vmatmul.mubr.bf16.gmra.mrb[0].mxu0 %v921
  %v1576 = vpop.f32.mrb[0].mxu0
  %v1577 = vadd.f32 0.0, %v1576
  %v1578 = vpop.f32.mrb[0].mxu0
  %v1579 = vpop.f32.mrb[0].mxu0
  %v1580 = vadd.f32 0.0, %v1579
  %v1581 = vpop.f32.mrb[0].mxu0
  %1582 = vmatprep.mubr.bf16.mxu0 0
  %1583 = vmatmul.mubr.bf16.gmra.mrb[0].mxu0 %v924
  %v1584 = vpop.f32.mrb[0].mxu0
  %v1585 = vadd.f32 0.0, %v1584
  %v1586 = vpop.f32.mrb[0].mxu0
  %v1587 = vpop.f32.mrb[0].mxu0
  %v1588 = vadd.f32 0.0, %v1587
  %v1589 = vpop.f32.mrb[0].mxu0
  %1590 = vmatprep.mubr.bf16.mxu0 0
  %1591 = vmatmul.mubr.bf16.gmra.mrb[0].mxu0 %v927
  %v1592 = vpop.f32.mrb[0].mxu0
  %v1593 = vadd.f32 0.0, %v1592
  %v1594 = vpop.f32.mrb[0].mxu0
  %v1595 = vpop.f32.mrb[0].mxu0
  %v1596 = vadd.f32 0.0, %v1595
  %v1597 = vpop.f32.mrb[0].mxu0
  %1598 = vmatprep.mubr.bf16.mxu0 0
  %1599 = vmatmul.mubr.bf16.gmra.mrb[0].mxu0 %v930
  %v1600 = vpop.f32.mrb[0].mxu0
  %v1601 = vadd.f32 0.0, %v1600
  %v1602 = vpop.f32.mrb[0].mxu0
  %v1603 = vpop.f32.mrb[0].mxu0
  %v1604 = vadd.f32 0.0, %v1603
  %v1605 = vpop.f32.mrb[0].mxu0
  %1606 = vmatprep.mubr.bf16.mxu0 0
  %1607 = vmatmul.mubr.bf16.gmra.mrb[0].mxu0 %v933
  %v1608 = vpop.f32.mrb[0].mxu0
  %v1609 = vadd.f32 0.0, %v1608
  %v1610 = vpop.f32.mrb[0].mxu0
  %v1611 = vpop.f32.mrb[0].mxu0
  %v1612 = vadd.f32 0.0, %v1611
  %v1613 = vpop.f32.mrb[0].mxu0
  %1614 = vmatprep.mubr.bf16.mxu0 0
  %1615 = vmatmul.mubr.bf16.gmra.mrb[0].mxu0 %v936
  %v1616 = vpop.f32.mrb[0].mxu0
  %v1617 = vadd.f32 0.0, %v1616
  %v1618 = vpop.f32.mrb[0].mxu0
  %v1619 = vpop.f32.mrb[0].mxu0
  %v1620 = vadd.f32 0.0, %v1619
  %v1621 = vpop.f32.mrb[0].mxu0
  %1622 = vmatprep.mubr.bf16.mxu0 0
  %1623 = vmatmul.mubr.bf16.gmra.mrb[0].mxu0 %v939
  %v1624 = vpop.f32.mrb[0].mxu0
  %v1625 = vadd.f32 0.0, %v1624
  %v1626 = vpop.f32.mrb[0].mxu0
  %v1627 = vpop.f32.mrb[0].mxu0
  %v1628 = vadd.f32 0.0, %v1627
  %v1629 = vpop.f32.mrb[0].mxu0
  %1630 = vmatprep.mubr.bf16.mxu0 0
  %1631 = vmatmul.mubr.bf16.gmra.mrb[0].mxu0 %v942
  %v1632 = vpop.f32.mrb[0].mxu0
  %v1633 = vadd.f32 0.0, %v1632
  %v1634 = vpop.f32.mrb[0].mxu0
  %v1635 = vpop.f32.mrb[0].mxu0
  %v1636 = vadd.f32 0.0, %v1635
  %v1637 = vpop.f32.mrb[0].mxu0
  %1638 = vmatprep.mubr.bf16.mxu0 0
  %1639 = vmatmul.mubr.bf16.gmra.mrb[0].mxu0 %v945
  %v1640 = vpop.f32.mrb[0].mxu0
  %v1641 = vadd.f32 0.0, %v1640
  %v1642 = vpop.f32.mrb[0].mxu0
  %v1643 = vpop.f32.mrb[0].mxu0
  %v1644 = vadd.f32 0.0, %v1643
  %v1645 = vpop.f32.mrb[0].mxu0
  %1646 = vmatprep.mubr.bf16.mxu0 0
  %1647 = vmatmul.mubr.bf16.gmra.mrb[0].mxu0 %v948
  %v1648 = vpop.f32.mrb[0].mxu0
  %v1649 = vadd.f32 0.0, %v1648
  %v1650 = vpop.f32.mrb[0].mxu0
  %v1651 = vpop.f32.mrb[0].mxu0
  %v1652 = vadd.f32 0.0, %v1651
  %v1653 = vpop.f32.mrb[0].mxu0
  %1654 = vmatprep.mubr.bf16.mxu0 0
  %1655 = vmatmul.mubr.bf16.gmra.mrb[0].mxu0 %v951
  %v1656 = vpop.f32.mrb[0].mxu0
  %v1657 = vadd.f32 0.0, %v1656
  %v1658 = vpop.f32.mrb[0].mxu0
  %v1659 = vpop.f32.mrb[0].mxu0
  %v1660 = vadd.f32 0.0, %v1659
  %v1661 = vpop.f32.mrb[0].mxu0
  %1662 = vmatprep.mubr.bf16.mxu0 0
  %1663 = vmatmul.mubr.bf16.gmra.mrb[0].mxu0 %v954
  %v1664 = vpop.f32.mrb[0].mxu0
  %v1665 = vadd.f32 0.0, %v1664
  %v1666 = vpop.f32.mrb[0].mxu0
  %v1667 = vpop.f32.mrb[0].mxu0
  %v1668 = vadd.f32 0.0, %v1667
  %v1669 = vpop.f32.mrb[0].mxu0
  %1670 = vmatprep.mubr.bf16.mxu0 0
  %1671 = vmatmul.mubr.bf16.gmra.mrb[0].mxu0 %v957
  %v1672 = vpop.f32.mrb[0].mxu0
  %v1673 = vadd.f32 0.0, %v1672
  %v1674 = vpop.f32.mrb[0].mxu0
  %v1675 = vpop.f32.mrb[0].mxu0
  %v1676 = vadd.f32 0.0, %v1675
  %v1677 = vpop.f32.mrb[0].mxu0
  %1678 = vmatprep.mubr.bf16.mxu0 0
  %1679 = vmatmul.mubr.bf16.gmra.mrb[0].mxu0 %v960
  %v1680 = vpop.f32.mrb[0].mxu0
  %v1681 = vadd.f32 0.0, %v1680
  %v1682 = vpop.f32.mrb[0].mxu0
  %v1683 = vpop.f32.mrb[0].mxu0
  %v1684 = vadd.f32 0.0, %v1683
  %v1685 = vpop.f32.mrb[0].mxu0
  %1686 = vmatprep.mubr.bf16.mxu0 0
  %1687 = vmatmul.mubr.bf16.gmra.mrb[0].mxu0 %v963
  %v1688 = vpop.f32.mrb[0].mxu0
  %v1689 = vadd.f32 0.0, %v1688
  %v1690 = vpop.f32.mrb[0].mxu0
  %v1691 = vpop.f32.mrb[0].mxu0
  %v1692 = vadd.f32 0.0, %v1691
  %v1693 = vpop.f32.mrb[0].mxu0
  %1694 = vmatprep.mubr.bf16.mxu0 0
  %1695 = vmatmul.mubr.bf16.gmra.mrb[0].mxu0 %v966
  %v1696 = vpop.f32.mrb[0].mxu0
  %v1697 = vadd.f32 0.0, %v1696
  %v1698 = vpop.f32.mrb[0].mxu0
  %v1699 = vpop.f32.mrb[0].mxu0
  %v1700 = vadd.f32 0.0, %v1699
  %v1701 = vpop.f32.mrb[0].mxu0
  %1702 = vmatprep.mubr.bf16.mxu0 0
  %1703 = vmatmul.mubr.bf16.gmra.mrb[0].mxu0 %v969
  %v1704 = vpop.f32.mrb[0].mxu0
  %v1705 = vadd.f32 0.0, %v1704
  %v1706 = vpop.f32.mrb[0].mxu0
  %v1707 = vpop.f32.mrb[0].mxu0
  %v1708 = vadd.f32 0.0, %v1707
  %v1709 = vpop.f32.mrb[0].mxu0
  %1710 = vmatprep.mubr.bf16.mxu0 0
  %1711 = vmatmul.mubr.bf16.gmra.mrb[0].mxu0 %v972
  %v1712 = vpop.f32.mrb[0].mxu0
  %v1713 = vadd.f32 0.0, %v1712
  %v1714 = vpop.f32.mrb[0].mxu0
  %v1715 = vpop.f32.mrb[0].mxu0
  %v1716 = vadd.f32 0.0, %v1715
  %v1717 = vpop.f32.mrb[0].mxu0
  %1718 = vmatprep.mubr.bf16.mxu0 0
  %1719 = vmatmul.mubr.bf16.gmra.mrb[0].mxu0 %v975
  %v1720 = vpop.f32.mrb[0].mxu0
  %v1721 = vadd.f32 0.0, %v1720
  %v1722 = vpop.f32.mrb[0].mxu0
  %v1723 = vpop.f32.mrb[0].mxu0
  %v1724 = vadd.f32 0.0, %v1723
  %v1725 = vpop.f32.mrb[0].mxu0
  %1726 = vmatprep.mubr.bf16.mxu0 0
  %1727 = vmatmul.mubr.bf16.gmra.mrb[0].mxu0 %v978
  %v1728 = vpop.f32.mrb[0].mxu0
  %v1729 = vadd.f32 0.0, %v1728
  %v1730 = vpop.f32.mrb[0].mxu0
  %v1731 = vpop.f32.mrb[0].mxu0
  %v1732 = vadd.f32 0.0, %v1731
  %v1733 = vpop.f32.mrb[0].mxu0
  %1734 = vmatprep.mubr.bf16.mxu0 0
  %1735 = vmatmul.mubr.bf16.gmra.mrb[0].mxu0 %v981
  %v1736 = vpop.f32.mrb[0].mxu0
  %v1737 = vadd.f32 0.0, %v1736
  %v1738 = vpop.f32.mrb[0].mxu0
  %v1739 = vpop.f32.mrb[0].mxu0
  %v1740 = vadd.f32 0.0, %v1739
  %v1741 = vpop.f32.mrb[0].mxu0
  %1742 = vmatprep.mubr.bf16.mxu0 0
  %1743 = vmatmul.mubr.bf16.gmra.mrb[0].mxu0 %v984
  %v1744 = vpop.f32.mrb[0].mxu0
  %v1745 = vadd.f32 0.0, %v1744
  %v1746 = vpop.f32.mrb[0].mxu0
  %v1747 = vpop.f32.mrb[0].mxu0
  %v1748 = vadd.f32 0.0, %v1747
  %v1749 = vpop.f32.mrb[0].mxu0
  %1750 = vmatprep.mubr.bf16.mxu0 0
  %1751 = vmatmul.mubr.bf16.gmra.mrb[0].mxu0 %v987
  %v1752 = vpop.f32.mrb[0].mxu0
  %v1753 = vadd.f32 0.0, %v1752
  %v1754 = vpop.f32.mrb[0].mxu0
  %v1755 = vpop.f32.mrb[0].mxu0
  %v1756 = vadd.f32 0.0, %v1755
  %v1757 = vpop.f32.mrb[0].mxu0
  %1758 = vmatprep.mubr.bf16.mxu0 0
  %1759 = vmatmul.mubr.bf16.gmra.mrb[0].mxu0 %v990
  %v1760 = vpop.f32.mrb[0].mxu0
  %v1761 = vadd.f32 0.0, %v1760
  %v1762 = vpop.f32.mrb[0].mxu0
  %v1763 = vpop.f32.mrb[0].mxu0
  %v1764 = vadd.f32 0.0, %v1763
  %v1765 = vpop.f32.mrb[0].mxu0
  %1766 = vmatprep.mubr.bf16.mxu0 0
  %1767 = vmatmul.mubr.bf16.gmra.mrb[0].mxu0 %v993
  %v1768 = vpop.f32.mrb[0].mxu0
  %v1769 = vadd.f32 0.0, %v1768
  %v1770 = vpop.f32.mrb[0].mxu0
  %v1771 = vpop.f32.mrb[0].mxu0
  %v1772 = vadd.f32 0.0, %v1771
  %v1773 = vpop.f32.mrb[0].mxu0
  %1774 = vmatprep.mubr.bf16.mxu0 0
  %1775 = vmatmul.mubr.bf16.gmra.mrb[0].mxu0 %v996
  %v1776 = vpop.f32.mrb[0].mxu0
  %v1777 = vadd.f32 0.0, %v1776
  %v1778 = vpop.f32.mrb[0].mxu0
  %v1779 = vpop.f32.mrb[0].mxu0
  %v1780 = vadd.f32 0.0, %v1779
  %v1781 = vpop.f32.mrb[0].mxu0
  %1782 = vmatprep.mubr.bf16.mxu0 0
  %1783 = vmatmul.mubr.bf16.gmra.mrb[0].mxu0 %v999
  %v1784 = vpop.f32.mrb[0].mxu0
  %v1785 = vadd.f32 0.0, %v1784
  %v1786 = vpop.f32.mrb[0].mxu0
  %v1787 = vpop.f32.mrb[0].mxu0
  %v1788 = vadd.f32 0.0, %v1787
  %v1789 = vpop.f32.mrb[0].mxu0
  %1790 = vmatprep.mubr.bf16.mxu0 0
  %1791 = vmatmul.mubr.bf16.gmra.mrb[0].mxu0 %v1002
  %v1792 = vpop.f32.mrb[0].mxu0
  %v1793 = vadd.f32 0.0, %v1792
  %v1794 = vpop.f32.mrb[0].mxu0
  %v1795 = vpop.f32.mrb[0].mxu0
  %v1796 = vadd.f32 0.0, %v1795
  %v1797 = vpop.f32.mrb[0].mxu0
  %1798 = vmatprep.mubr.bf16.mxu0 0
  %1799 = vmatmul.mubr.bf16.gmra.mrb[0].mxu0 %v1005
  %v1800 = vpop.f32.mrb[0].mxu0
  %v1801 = vadd.f32 0.0, %v1800
  %v1802 = vpop.f32.mrb[0].mxu0
  %v1803 = vpop.f32.mrb[0].mxu0
  %v1804 = vadd.f32 0.0, %v1803
  %v1805 = vpop.f32.mrb[0].mxu0
  %1806 = vmatprep.mubr.bf16.mxu0 0
  %1807 = vmatmul.mubr.bf16.gmra.mrb[0].mxu0 %v1008
  %v1808 = vpop.f32.mrb[0].mxu0
  %v1809 = vadd.f32 0.0, %v1808
  %v1810 = vpop.f32.mrb[0].mxu0
  %v1811 = vpop.f32.mrb[0].mxu0
  %v1812 = vadd.f32 0.0, %v1811
  %v1813 = vpop.f32.mrb[0].mxu0
  %1814 = vmatprep.mubr.bf16.mxu0 0
  %1815 = vmatmul.mubr.bf16.gmra.mrb[0].mxu0 %v1011
  %v1816 = vpop.f32.mrb[0].mxu0
  %v1817 = vadd.f32 0.0, %v1816
  %v1818 = vpop.f32.mrb[0].mxu0
  %v1819 = vpop.f32.mrb[0].mxu0
  %v1820 = vadd.f32 0.0, %v1819
  %v1821 = vpop.f32.mrb[0].mxu0
  %1822 = vmatprep.mubr.bf16.mxu0 0
  %1823 = vmatmul.mubr.bf16.gmra.mrb[0].mxu0 %v1014
  %v1824 = vpop.f32.mrb[0].mxu0
  %v1825 = vadd.f32 0.0, %v1824
  %v1826 = vpop.f32.mrb[0].mxu0
  %v1827 = vpop.f32.mrb[0].mxu0
  %v1828 = vadd.f32 0.0, %v1827
  %v1829 = vpop.f32.mrb[0].mxu0
  %1830 = vmatprep.mubr.bf16.mxu0 0
  %1831 = vmatmul.mubr.bf16.gmra.mrb[0].mxu0 %v1017
  %v1832 = vpop.f32.mrb[0].mxu0
  %v1833 = vadd.f32 0.0, %v1832
  %v1834 = vpop.f32.mrb[0].mxu0
  %v1835 = vpop.f32.mrb[0].mxu0
  %v1836 = vadd.f32 0.0, %v1835
  %v1837 = vpop.f32.mrb[0].mxu0
  %1838 = vmatprep.mubr.bf16.mxu0 0
  %1839 = vmatmul.mubr.bf16.gmra.mrb[0].mxu0 %v1020
  %v1840 = vpop.f32.mrb[0].mxu0
  %v1841 = vadd.f32 0.0, %v1840
  %v1842 = vpop.f32.mrb[0].mxu0
  %v1843 = vpop.f32.mrb[0].mxu0
  %v1844 = vadd.f32 0.0, %v1843
  %v1845 = vpop.f32.mrb[0].mxu0
  %1846 = vmatprep.mubr.bf16.mxu0 0
  %1847 = vmatmul.mubr.bf16.gmra.mrb[0].mxu0 %v1023
  %v1848 = vpop.f32.mrb[0].mxu0
  %v1849 = vadd.f32 0.0, %v1848
  %v1850 = vpop.f32.mrb[0].mxu0
  %v1851 = vpop.f32.mrb[0].mxu0
  %v1852 = vadd.f32 0.0, %v1851
  %v1853 = vpop.f32.mrb[0].mxu0
  %1854 = vmatprep.mubr.bf16.mxu0 0
  %1855 = vmatmul.mubr.bf16.gmra.mrb[0].mxu0 %v1026
  %v1856 = vpop.f32.mrb[0].mxu0
  %v1857 = vadd.f32 0.0, %v1856
  %v1858 = vpop.f32.mrb[0].mxu0
  %v1859 = vpop.f32.mrb[0].mxu0
  %v1860 = vadd.f32 0.0, %v1859
  %v1861 = vpop.f32.mrb[0].mxu0
  %1862 = vmatprep.mubr.bf16.mxu0 0
  %1863 = vmatmul.mubr.bf16.gmra.mrb[0].mxu0 %v1029
  %v1864 = vpop.f32.mrb[0].mxu0
  %v1865 = vadd.f32 0.0, %v1864
  %v1866 = vpop.f32.mrb[0].mxu0
  %v1867 = vpop.f32.mrb[0].mxu0
  %v1868 = vadd.f32 0.0, %v1867
  %v1869 = vpop.f32.mrb[0].mxu0
  %1870 = vdwg.mxu0
  %v1871 = vmax.f32 %v1073, %v1273
  %v1872 = vmax.f32 %v1076, %v1276
  %v1873 = vmax.f32 %v1081, %v1281
  %v1874 = vmax.f32 %v1084, %v1284
  %v1875 = vmax.f32 %v1089, %v1289
  %v1876 = vmax.f32 %v1092, %v1292
  %v1877 = vmax.f32 %v1097, %v1297
  %v1878 = vmax.f32 %v1100, %v1300
  %v1879 = vmax.f32 %v1105, %v1305
  %v1880 = vmax.f32 %v1108, %v1308
  %v1881 = vmax.f32 %v1113, %v1313
  %v1882 = vmax.f32 %v1116, %v1316
  %v1883 = vmax.f32 %v1121, %v1321
  %v1884 = vmax.f32 %v1124, %v1324
  %v1885 = vmax.f32 %v1129, %v1329
  %v1886 = vmax.f32 %v1132, %v1332
  %v1887 = vmax.f32 %v1137, %v1337
  %v1888 = vmax.f32 %v1140, %v1340
  %v1889 = vmax.f32 %v1145, %v1345
  %v1890 = vmax.f32 %v1148, %v1348
  %v1891 = vmax.f32 %v1153, %v1353
  %v1892 = vmax.f32 %v1156, %v1356
  %v1893 = vmax.f32 %v1161, %v1361
  %v1894 = vmax.f32 %v1164, %v1364
  %v1895 = vmax.f32 %v1169, %v1369
  %v1896 = vmax.f32 %v1172, %v1372
  %v1897 = vmax.f32 %v1177, %v1377
  %v1898 = vmax.f32 %v1180, %v1380
  %v1899 = vmax.f32 %v1185, %v1385
  %v1900 = vmax.f32 %v1188, %v1388
  %v1901 = vmax.f32 %v1193, %v1393
  %v1902 = vmax.f32 %v1196, %v1396
  %v1903 = vmax.f32 %v1201, %v1401
  %v1904 = vmax.f32 %v1204, %v1404
  %v1905 = vmax.f32 %v1209, %v1409
  %v1906 = vmax.f32 %v1212, %v1412
  %v1907 = vmax.f32 %v1217, %v1417
  %v1908 = vmax.f32 %v1220, %v1420
  %v1909 = vmax.f32 %v1225, %v1425
  %v1910 = vmax.f32 %v1228, %v1428
  %v1911 = vmax.f32 %v1233, %v1433
  %v1912 = vmax.f32 %v1236, %v1436
  %v1913 = vmax.f32 %v1241, %v1441
  %v1914 = vmax.f32 %v1244, %v1444
  %v1915 = vmax.f32 %v1249, %v1449
  %v1916 = vmax.f32 %v1252, %v1452
  %v1917 = vmax.f32 %v1257, %v1457
  %v1918 = vmax.f32 %v1260, %v1460
  %v1919 = vmax.f32 %v1265, %v1465
  %v1920 = vmax.f32 %v1268, %v1468
  %v1921 = vmax.f32 %v1473, %v1673
  %v1922 = vmax.f32 %v1476, %v1676
  %v1923 = vmax.f32 %v1481, %v1681
  %v1924 = vmax.f32 %v1484, %v1684
  %v1925 = vmax.f32 %v1489, %v1689
  %v1926 = vmax.f32 %v1492, %v1692
  %v1927 = vmax.f32 %v1497, %v1697
  %v1928 = vmax.f32 %v1500, %v1700
  %v1929 = vmax.f32 %v1505, %v1705
  %v1930 = vmax.f32 %v1508, %v1708
  %v1931 = vmax.f32 %v1513, %v1713
  %v1932 = vmax.f32 %v1516, %v1716
  %v1933 = vmax.f32 %v1521, %v1721
  %v1934 = vmax.f32 %v1524, %v1724
  %v1935 = vmax.f32 %v1529, %v1729
  %v1936 = vmax.f32 %v1532, %v1732
  %v1937 = vmax.f32 %v1537, %v1737
  %v1938 = vmax.f32 %v1540, %v1740
  %v1939 = vmax.f32 %v1545, %v1745
  %v1940 = vmax.f32 %v1548, %v1748
  %v1941 = vmax.f32 %v1553, %v1753
  %v1942 = vmax.f32 %v1556, %v1756
  %v1943 = vmax.f32 %v1561, %v1761
  %v1944 = vmax.f32 %v1564, %v1764
  %v1945 = vmax.f32 %v1569, %v1769
  %v1946 = vmax.f32 %v1572, %v1772
  %v1947 = vmax.f32 %v1577, %v1777
  %v1948 = vmax.f32 %v1580, %v1780
  %v1949 = vmax.f32 %v1585, %v1785
  %v1950 = vmax.f32 %v1588, %v1788
  %v1951 = vmax.f32 %v1593, %v1793
  %v1952 = vmax.f32 %v1596, %v1796
  %v1953 = vmax.f32 %v1601, %v1801
  %v1954 = vmax.f32 %v1604, %v1804
  %v1955 = vmax.f32 %v1609, %v1809
  %v1956 = vmax.f32 %v1612, %v1812
  %v1957 = vmax.f32 %v1617, %v1817
  %v1958 = vmax.f32 %v1620, %v1820
  %v1959 = vmax.f32 %v1625, %v1825
  %v1960 = vmax.f32 %v1628, %v1828
  %v1961 = vmax.f32 %v1633, %v1833
  %v1962 = vmax.f32 %v1636, %v1836
  %v1963 = vmax.f32 %v1641, %v1841
  %v1964 = vmax.f32 %v1644, %v1844
  %v1965 = vmax.f32 %v1649, %v1849
  %v1966 = vmax.f32 %v1652, %v1852
  %v1967 = vmax.f32 %v1657, %v1857
  %v1968 = vmax.f32 %v1660, %v1860
  %v1969 = vmax.f32 %v1665, %v1865
  %v1970 = vmax.f32 %v1668, %v1868
  %v1971 = vmax.f32 %v1871, %v1921
  %v1972 = vmax.f32 %v1872, %v1922
  %v1973 = vmax.f32 %v1873, %v1923
  %v1974 = vmax.f32 %v1874, %v1924
  %v1975 = vmax.f32 %v1875, %v1925
  %v1976 = vmax.f32 %v1876, %v1926
  %v1977 = vmax.f32 %v1877, %v1927
  %v1978 = vmax.f32 %v1878, %v1928
  %v1979 = vmax.f32 %v1879, %v1929
  %v1980 = vmax.f32 %v1880, %v1930
  %v1981 = vmax.f32 %v1881, %v1931
  %v1982 = vmax.f32 %v1882, %v1932
  %v1983 = vmax.f32 %v1883, %v1933
  %v1984 = vmax.f32 %v1884, %v1934
  %v1985 = vmax.f32 %v1885, %v1935
  %v1986 = vmax.f32 %v1886, %v1936
  %v1987 = vmax.f32 %v1887, %v1937
  %v1988 = vmax.f32 %v1888, %v1938
  %v1989 = vmax.f32 %v1889, %v1939
  %v1990 = vmax.f32 %v1890, %v1940
  %v1991 = vmax.f32 %v1891, %v1941
  %v1992 = vmax.f32 %v1892, %v1942
  %v1993 = vmax.f32 %v1893, %v1943
  %v1994 = vmax.f32 %v1894, %v1944
  %v1995 = vmax.f32 %v1895, %v1945
  %v1996 = vmax.f32 %v1896, %v1946
  %v1997 = vmax.f32 %v1897, %v1947
  %v1998 = vmax.f32 %v1898, %v1948
  %v1999 = vmax.f32 %v1899, %v1949
  %v2000 = vmax.f32 %v1900, %v1950
  %v2001 = vmax.f32 %v1901, %v1951
  %v2002 = vmax.f32 %v1902, %v1952
  %v2003 = vmax.f32 %v1903, %v1953
  %v2004 = vmax.f32 %v1904, %v1954
  %v2005 = vmax.f32 %v1905, %v1955
  %v2006 = vmax.f32 %v1906, %v1956
  %v2007 = vmax.f32 %v1907, %v1957
  %v2008 = vmax.f32 %v1908, %v1958
  %v2009 = vmax.f32 %v1909, %v1959
  %v2010 = vmax.f32 %v1910, %v1960
  %v2011 = vmax.f32 %v1911, %v1961
  %v2012 = vmax.f32 %v1912, %v1962
  %v2013 = vmax.f32 %v1913, %v1963
  %v2014 = vmax.f32 %v1914, %v1964
  %v2015 = vmax.f32 %v1915, %v1965
  %v2016 = vmax.f32 %v1916, %v1966
  %v2017 = vmax.f32 %v1917, %v1967
  %v2018 = vmax.f32 %v1918, %v1968
  %v2019 = vmax.f32 %v1919, %v1969
  %v2020 = vmax.f32 %v1920, %v1970
  %v2021 = vld [vmem:[%s2] sm:$0x1]
  %v2023 = vlaneseq
  %v2024 = vshrl.u32 %v2023, 7
  %v2025 = vsub.s32 0, %v2024
  %v2026 = vrot.slane %v2021, %v2025
  %v2028 = vadd.f32 %v1971, %v2026
  %v2029 = vadd.f32 %v1972, %v2026
  %v2030 = vadd.f32 %v1973, %v2026
  %v2031 = vadd.f32 %v1974, %v2026
  %v2032 = vadd.f32 %v1975, %v2026
  %v2033 = vadd.f32 %v1976, %v2026
  %v2034 = vadd.f32 %v1977, %v2026
  %v2035 = vadd.f32 %v1978, %v2026
  %v2036 = vadd.f32 %v1979, %v2026
  %v2037 = vadd.f32 %v1980, %v2026
  %v2038 = vadd.f32 %v1981, %v2026
  %v2039 = vadd.f32 %v1982, %v2026
  %v2040 = vadd.f32 %v1983, %v2026
  %v2041 = vadd.f32 %v1984, %v2026
  %v2042 = vadd.f32 %v1985, %v2026
  %v2043 = vadd.f32 %v1986, %v2026
  %v2044 = vadd.f32 %v1987, %v2026
  %v2045 = vadd.f32 %v1988, %v2026
  %v2046 = vadd.f32 %v1989, %v2026
  %v2047 = vadd.f32 %v1990, %v2026
  %v2048 = vadd.f32 %v1991, %v2026
  %v2049 = vadd.f32 %v1992, %v2026
  %v2050 = vadd.f32 %v1993, %v2026
  %v2051 = vadd.f32 %v1994, %v2026
  %v2052 = vadd.f32 %v1995, %v2026
  %v2053 = vadd.f32 %v1996, %v2026
  %v2054 = vadd.f32 %v1997, %v2026
  %v2055 = vadd.f32 %v1998, %v2026
  %v2056 = vadd.f32 %v1999, %v2026
  %v2057 = vadd.f32 %v2000, %v2026
  %v2058 = vadd.f32 %v2001, %v2026
  %v2059 = vadd.f32 %v2002, %v2026
  %v2060 = vadd.f32 %v2003, %v2026
  %v2061 = vadd.f32 %v2004, %v2026
  %v2062 = vadd.f32 %v2005, %v2026
  %v2063 = vadd.f32 %v2006, %v2026
  %v2064 = vadd.f32 %v2007, %v2026
  %v2065 = vadd.f32 %v2008, %v2026
  %v2066 = vadd.f32 %v2009, %v2026
  %v2067 = vadd.f32 %v2010, %v2026
  %v2068 = vadd.f32 %v2011, %v2026
  %v2069 = vadd.f32 %v2012, %v2026
  %v2070 = vadd.f32 %v2013, %v2026
  %v2071 = vadd.f32 %v2014, %v2026
  %v2072 = vadd.f32 %v2015, %v2026
  %v2073 = vadd.f32 %v2016, %v2026
  %v2074 = vadd.f32 %v2017, %v2026
  %v2075 = vadd.f32 %v2018, %v2026
  %v2076 = vadd.f32 %v2019, %v2026
  %v2077 = vadd.f32 %v2020, %v2026
  %v2078 = vmax.f32 %v2028, 0.0
  %v2079 = vmax.f32 %v2029, 0.0
  %v2080 = vmax.f32 %v2030, 0.0
  %v2081 = vmax.f32 %v2031, 0.0
  %v2082 = vmax.f32 %v2032, 0.0
  %v2083 = vmax.f32 %v2033, 0.0
  %v2084 = vmax.f32 %v2034, 0.0
  %v2085 = vmax.f32 %v2035, 0.0
  %v2086 = vmax.f32 %v2036, 0.0
  %v2087 = vmax.f32 %v2037, 0.0
  %v2088 = vmax.f32 %v2038, 0.0
  %v2089 = vmax.f32 %v2039, 0.0
  %v2090 = vmax.f32 %v2040, 0.0
  %v2091 = vmax.f32 %v2041, 0.0
  %v2092 = vmax.f32 %v2042, 0.0
  %v2093 = vmax.f32 %v2043, 0.0
  %v2094 = vmax.f32 %v2044, 0.0
  %v2095 = vmax.f32 %v2045, 0.0
  %v2096 = vmax.f32 %v2046, 0.0
  %v2097 = vmax.f32 %v2047, 0.0
  %v2098 = vmax.f32 %v2048, 0.0
  %v2099 = vmax.f32 %v2049, 0.0
  %v2100 = vmax.f32 %v2050, 0.0
  %v2101 = vmax.f32 %v2051, 0.0
  %v2102 = vmax.f32 %v2052, 0.0
  %v2103 = vmax.f32 %v2053, 0.0
  %v2104 = vmax.f32 %v2054, 0.0
  %v2105 = vmax.f32 %v2055, 0.0
  %v2106 = vmax.f32 %v2056, 0.0
  %v2107 = vmax.f32 %v2057, 0.0
  %v2108 = vmax.f32 %v2058, 0.0
  %v2109 = vmax.f32 %v2059, 0.0
  %v2110 = vmax.f32 %v2060, 0.0
  %v2111 = vmax.f32 %v2061, 0.0
  %v2112 = vmax.f32 %v2062, 0.0
  %v2113 = vmax.f32 %v2063, 0.0
  %v2114 = vmax.f32 %v2064, 0.0
  %v2115 = vmax.f32 %v2065, 0.0
  %v2116 = vmax.f32 %v2066, 0.0
  %v2117 = vmax.f32 %v2067, 0.0
  %v2118 = vmax.f32 %v2068, 0.0
  %v2119 = vmax.f32 %v2069, 0.0
  %v2120 = vmax.f32 %v2070, 0.0
  %v2121 = vmax.f32 %v2071, 0.0
  %v2122 = vmax.f32 %v2072, 0.0
  %v2123 = vmax.f32 %v2073, 0.0
  %v2124 = vmax.f32 %v2074, 0.0
  %v2125 = vmax.f32 %v2075, 0.0
  %v2126 = vmax.f32 %v2076, 0.0
  %v2127 = vmax.f32 %v2077, 0.0
  %vm2128 = vcmask 130048
  %2129 = vst.msk [vmem:[%s3] sm:$0xff] %vm2128, %v2078
  %2130 = vst.msk [vmem:[%s3 + $0x8] sm:$0xff] %vm2128, %v2079
  %2131 = vst.msk [vmem:[%s3 + $0x10] sm:$0xff] %vm2128, %v2080
  %2132 = vst.msk [vmem:[%s3 + $0x18] sm:$0xff] %vm2128, %v2081
  %2133 = vst.msk [vmem:[%s3 + $0x20] sm:$0xff] %vm2128, %v2082
  %2134 = vst.msk [vmem:[%s3 + $0x28] sm:$0xff] %vm2128, %v2083
  %2135 = vst.msk [vmem:[%s3 + $0x30] sm:$0xff] %vm2128, %v2084
  %2136 = vst.msk [vmem:[%s3 + $0x38] sm:$0xff] %vm2128, %v2085
  %2137 = vst.msk [vmem:[%s3 + $0x40] sm:$0xff] %vm2128, %v2086
  %2138 = vst.msk [vmem:[%s3 + $0x48] sm:$0xff] %vm2128, %v2087
  %2139 = vst.msk [vmem:[%s3 + $0x50] sm:$0xff] %vm2128, %v2088
  %2140 = vst.msk [vmem:[%s3 + $0x58] sm:$0xff] %vm2128, %v2089
  %2141 = vst.msk [vmem:[%s3 + $0x60] sm:$0xff] %vm2128, %v2090
  %2142 = vst.msk [vmem:[%s3 + $0x68] sm:$0xff] %vm2128, %v2091
  %2143 = vst.msk [vmem:[%s3 + $0x70] sm:$0xff] %vm2128, %v2092
  %2144 = vst.msk [vmem:[%s3 + $0x78] sm:$0xff] %vm2128, %v2093
  %2145 = vst.msk [vmem:[%s3 + $0x80] sm:$0xff] %vm2128, %v2094
  %2146 = vst.msk [vmem:[%s3 + $0x88] sm:$0xff] %vm2128, %v2095
  %2147 = vst.msk [vmem:[%s3 + $0x90] sm:$0xff] %vm2128, %v2096
  %2148 = vst.msk [vmem:[%s3 + $0x98] sm:$0xff] %vm2128, %v2097
  %2149 = vst.msk [vmem:[%s3 + $0xa0] sm:$0xff] %vm2128, %v2098
  %2150 = vst.msk [vmem:[%s3 + $0xa8] sm:$0xff] %vm2128, %v2099
  %2151 = vst.msk [vmem:[%s3 + $0xb0] sm:$0xff] %vm2128, %v2100
  %2152 = vst.msk [vmem:[%s3 + $0xb8] sm:$0xff] %vm2128, %v2101
  %2153 = vst.msk [vmem:[%s3 + $0xc0] sm:$0xff] %vm2128, %v2102
  %2154 = vst.msk [vmem:[%s3 + $0xc8] sm:$0xff] %vm2128, %v2103
  %2155 = vst.msk [vmem:[%s3 + $0xd0] sm:$0xff] %vm2128, %v2104
  %2156 = vst.msk [vmem:[%s3 + $0xd8] sm:$0xff] %vm2128, %v2105
  %2157 = vst.msk [vmem:[%s3 + $0xe0] sm:$0xff] %vm2128, %v2106
  %2158 = vst.msk [vmem:[%s3 + $0xe8] sm:$0xff] %vm2128, %v2107
  %2159 = vst.msk [vmem:[%s3 + $0xf0] sm:$0xff] %vm2128, %v2108
  %2160 = vst.msk [vmem:[%s3 + $0xf8] sm:$0xff] %vm2128, %v2109
  %2161 = vst.msk [vmem:[%s3 + $0x100] sm:$0xff] %vm2128, %v2110
  %2162 = vst.msk [vmem:[%s3 + $0x108] sm:$0xff] %vm2128, %v2111
  %2163 = vst.msk [vmem:[%s3 + $0x110] sm:$0xff] %vm2128, %v2112
  %2164 = vst.msk [vmem:[%s3 + $0x118] sm:$0xff] %vm2128, %v2113
  %2165 = vst.msk [vmem:[%s3 + $0x120] sm:$0xff] %vm2128, %v2114
  %2166 = vst.msk [vmem:[%s3 + $0x128] sm:$0xff] %vm2128, %v2115
  %2167 = vst.msk [vmem:[%s3 + $0x130] sm:$0xff] %vm2128, %v2116
  %2168 = vst.msk [vmem:[%s3 + $0x138] sm:$0xff] %vm2128, %v2117
  %2169 = vst.msk [vmem:[%s3 + $0x140] sm:$0xff] %vm2128, %v2118
  %2170 = vst.msk [vmem:[%s3 + $0x148] sm:$0xff] %vm2128, %v2119
  %2171 = vst.msk [vmem:[%s3 + $0x150] sm:$0xff] %vm2128, %v2120
  %2172 = vst.msk [vmem:[%s3 + $0x158] sm:$0xff] %vm2128, %v2121
  %2173 = vst.msk [vmem:[%s3 + $0x160] sm:$0xff] %vm2128, %v2122
  %2174 = vst.msk [vmem:[%s3 + $0x168] sm:$0xff] %vm2128, %v2123
  %2175 = vst.msk [vmem:[%s3 + $0x170] sm:$0xff] %vm2128, %v2124
  %2176 = vst.msk [vmem:[%s3 + $0x178] sm:$0xff] %vm2128, %v2125
  %2177 = vst.msk [vmem:[%s3 + $0x180] sm:$0xff] %vm2128, %v2126
  %2178 = vst.msk [vmem:[%s3 + $0x188] sm:$0xff] %vm2128, %v2127
  // Predicated region
  $region14: #{cnn_forward.3} parent=0 // pred_check
    _
  $region15: #{cnn_forward.3} parent=0 // pred_check_branch
    %2180 = sbr.rel (0) target = $region17
  $region16: #{cnn_forward.3} parent=0 // pred_region
    _
  $region17: #{cnn_forward.3} parent=0 // pred_fallthru
    _
  // Predicated region
  $region18: #{cnn_forward.3} parent=0 // pred_check
    _
  $region19: #{cnn_forward.3} parent=0 // pred_check_branch
    %2182 = sbr.rel (0) target = $region21
  $region20: #{cnn_forward.3} parent=0 // pred_region
    _
  $region21: #{cnn_forward.3} parent=0 // pred_fallthru
    _

// kernel: cnn_forward.4
$region0: #{cnn_forward.4}
  #allocation0 [shape = 'u32[]', space=smem, size = 0x4, offset = 0x4, fixed_abs, tag = 'smem constant byte address 0x4 - core index']
  #allocation1 [shape = 'u32[144,128]{1,0:T(1,128)}', space=vmem, size = 0x12000, scoped, tag = 'internal scratch']
  %s0 = inlined_call_operand.vmem [shape: bf16[4,112,400], index: 0, kind: input, shape index: {}]
  %s1 = inlined_call_operand.vmem [shape: bf16[400,32], index: 1, kind: input, shape index: {}]
  %s2 = inlined_call_operand.vmem [shape: f32[1,32], index: 2, kind: input, shape index: {}]
  %s3 = inlined_call_operand.vmem [shape: f32[112,32], index: 3, kind: output, shape index: {}]
  %s4 = sld [smem:[#allocation0]]
  $region22: #{cnn_forward.4} parent=0
    _
  %s6 = ssub.s32 1, %s4
  %s7 = scalar_select 0, %s6, %s4
  // Predicated region
  $region2: #{cnn_forward.4} parent=0 // pred_check
    _
  $region3: #{cnn_forward.4} parent=0 // pred_check_branch
    %9 = sbr.rel (0) target = $region5
  $region4: #{cnn_forward.4} parent=0 // pred_region
    _
  $region5: #{cnn_forward.4} parent=0 // pred_fallthru
    _
  // Predicated region
  $region6: #{cnn_forward.4} parent=0 // pred_check
    _
  $region7: #{cnn_forward.4} parent=0 // pred_check_branch
    %11 = sbr.rel (0) target = $region9
  $region8: #{cnn_forward.4} parent=0 // pred_region
    _
  $region9: #{cnn_forward.4} parent=0 // pred_fallthru
    _
  // Predicated region
  $region10: #{cnn_forward.4} parent=0 // pred_check
    _
  $region11: #{cnn_forward.4} parent=0 // pred_check_branch
    %13 = sbr.rel (0) target = $region13
  $region12: #{cnn_forward.4} parent=0 // pred_region
    _
  $region13: #{cnn_forward.4} parent=0 // pred_fallthru
    _
  %v15 = vld [vmem:[%s0] sm:$0xff]
  %v16 = vld [vmem:[%s0 + $0x8] sm:$0xff]
  %v17 = vld [vmem:[%s0 + $0x10] sm:$0xff]
  %v18 = vld [vmem:[%s0 + $0x18] sm:$0xff]
  %v19 = vld [vmem:[%s0 + $0x20] sm:$0xff]
  %v20 = vld [vmem:[%s0 + $0x28] sm:$0xff]
  %v21 = vld [vmem:[%s0 + $0x30] sm:$0xff]
  %v22 = vld [vmem:[%s0 + $0x38] sm:$0xff]
  %v23 = vld [vmem:[%s0 + $0x40] sm:$0xff]
  %v24 = vld [vmem:[%s0 + $0x48] sm:$0xff]
  %v25 = vld [vmem:[%s0 + $0x50] sm:$0xff]
  %v26 = vld [vmem:[%s0 + $0x58] sm:$0xff]
  %v27 = vld [vmem:[%s0 + $0x60] sm:$0xff]
  %v28 = vld [vmem:[%s0 + $0x68] sm:$0xff]
  %v29 = vld [vmem:[%s0 + $0x70] sm:$0xff]
  %v30 = vld [vmem:[%s0 + $0x78] sm:$0xff]
  %v31 = vld [vmem:[%s0 + $0x80] sm:$0xff]
  %v32 = vld [vmem:[%s0 + $0x88] sm:$0xff]
  %v33 = vld [vmem:[%s0 + $0x90] sm:$0xff]
  %v34 = vld [vmem:[%s0 + $0x98] sm:$0xff]
  %v35 = vld [vmem:[%s0 + $0xa0] sm:$0xff]
  %v36 = vld [vmem:[%s0 + $0xa8] sm:$0xff]
  %v37 = vld [vmem:[%s0 + $0xb0] sm:$0xff]
  %v38 = vld [vmem:[%s0 + $0xb8] sm:$0xff]
  %v39 = vld [vmem:[%s0 + $0xc0] sm:$0xff]
  %v40 = vld [vmem:[%s0 + $0xc8] sm:$0xff]
  %v41 = vld [vmem:[%s0 + $0xd0] sm:$0xff]
  %v42 = vld [vmem:[%s0 + $0xd8] sm:$0xff]
  %v43 = vld [vmem:[%s0 + $0xe0] sm:$0xff]
  %v44 = vld [vmem:[%s0 + $0xe8] sm:$0xff]
  %v45 = vld [vmem:[%s0 + $0xf0] sm:$0xff]
  %v46 = vld [vmem:[%s0 + $0xf8] sm:$0xff]
  %v47 = vld [vmem:[%s0 + $0x100] sm:$0xff]
  %v48 = vld [vmem:[%s0 + $0x108] sm:$0xff]
  %v49 = vld [vmem:[%s0 + $0x110] sm:$0xff]
  %v50 = vld [vmem:[%s0 + $0x118] sm:$0xff]
  %v51 = vld [vmem:[%s0 + $0x120] sm:$0xff]
  %v52 = vld [vmem:[%s0 + $0x128] sm:$0xff]
  %v53 = vld [vmem:[%s0 + $0x130] sm:$0xff]
  %v54 = vld [vmem:[%s0 + $0x138] sm:$0xff]
  %v55 = vld [vmem:[%s0 + $0x140] sm:$0xff]
  %v56 = vld [vmem:[%s0 + $0x148] sm:$0xff]
  %v57 = vld [vmem:[%s0 + $0x150] sm:$0xff]
  %v58 = vld [vmem:[%s0 + $0x158] sm:$0xff]
  %v59 = vld [vmem:[%s0 + $0x160] sm:$0xff]
  %v60 = vld [vmem:[%s0 + $0x168] sm:$0xff]
  %v61 = vld [vmem:[%s0 + $0x170] sm:$0xff]
  %v62 = vld [vmem:[%s0 + $0x178] sm:$0xff]
  %v63 = vld [vmem:[%s0 + $0x180] sm:$0xff]
  %v64 = vld [vmem:[%s0 + $0x188] sm:$0xff]
  %v65 = vld [vmem:[%s0 + $0x190] sm:$0xff]
  %v66 = vld [vmem:[%s0 + $0x198] sm:$0xff]
  %v67 = vld [vmem:[%s0 + $0x1a0] sm:$0xff]
  %v68 = vld [vmem:[%s0 + $0x1a8] sm:$0xff]
  %v69 = vld [vmem:[%s0 + $0x1b0] sm:$0xff]
  %v70 = vld [vmem:[%s0 + $0x1b8] sm:$0xff]
  %v71 = vld [vmem:[%s0 + $0x1c0] sm:$0xff]
  %v72 = vld [vmem:[%s0 + $0x1c8] sm:$0xff]
  %v73 = vld [vmem:[%s0 + $0x1d0] sm:$0xff]
  %v74 = vld [vmem:[%s0 + $0x1d8] sm:$0xff]
  %v75 = vld [vmem:[%s0 + $0x1e0] sm:$0xff]
  %v76 = vld [vmem:[%s0 + $0x1e8] sm:$0xff]
  %v77 = vld [vmem:[%s0 + $0x1f0] sm:$0xff]
  %v78 = vld [vmem:[%s0 + $0x1f8] sm:$0xff]
  %v79 = vld [vmem:[%s0 + $0x200] sm:$0xff]
  %v80 = vld [vmem:[%s0 + $0x208] sm:$0xff]
  %v81 = vld [vmem:[%s0 + $0x210] sm:$0xff]
  %v82 = vld [vmem:[%s0 + $0x218] sm:$0xff]
  %v83 = vld [vmem:[%s0 + $0x220] sm:$0xff]
  %v84 = vld [vmem:[%s0 + $0x228] sm:$0xff]
  %v85 = vld [vmem:[%s0 + $0x230] sm:$0xff]
  %v86 = vld [vmem:[%s0 + $0x238] sm:$0xff]
  %v87 = vld [vmem:[%s0 + $0x240] sm:$0xff]
  %v88 = vld [vmem:[%s0 + $0x248] sm:$0xff]
  %v89 = vld [vmem:[%s0 + $0x250] sm:$0xff]
  %v90 = vld [vmem:[%s0 + $0x258] sm:$0xff]
  %v91 = vld [vmem:[%s0 + $0x260] sm:$0xff]
  %v92 = vld [vmem:[%s0 + $0x268] sm:$0xff]
  %v93 = vld [vmem:[%s0 + $0x270] sm:$0xff]
  %v94 = vld [vmem:[%s0 + $0x278] sm:$0xff]
  %v95 = vld [vmem:[%s0 + $0x280] sm:$0xff]
  %v96 = vld [vmem:[%s0 + $0x288] sm:$0xff]
  %v97 = vld [vmem:[%s0 + $0x290] sm:$0xff]
  %v98 = vld [vmem:[%s0 + $0x298] sm:$0xff]
  %v99 = vld [vmem:[%s0 + $0x2a0] sm:$0xff]
  %v100 = vld [vmem:[%s0 + $0x2a8] sm:$0xff]
  %v101 = vld [vmem:[%s0 + $0x2b0] sm:$0xff]
  %v102 = vld [vmem:[%s0 + $0x2b8] sm:$0xff]
  %v103 = vld [vmem:[%s0 + $0x2c0] sm:$0xff]
  %v104 = vld [vmem:[%s0 + $0x2c8] sm:$0xff]
  %v105 = vld [vmem:[%s0 + $0x2d0] sm:$0xff]
  %v106 = vld [vmem:[%s0 + $0x2d8] sm:$0xff]
  %v107 = vld [vmem:[%s0 + $0x2e0] sm:$0xff]
  %v108 = vld [vmem:[%s0 + $0x2e8] sm:$0xff]
  %v109 = vld [vmem:[%s0 + $0x2f0] sm:$0xff]
  %v110 = vld [vmem:[%s0 + $0x2f8] sm:$0xff]
  %v111 = vld [vmem:[%s0 + $0x300] sm:$0xff]
  %v112 = vld [vmem:[%s0 + $0x308] sm:$0xff]
  %v113 = vld [vmem:[%s0 + $0x310] sm:$0xff]
  %v114 = vld [vmem:[%s0 + $0x318] sm:$0xff]
  %v115 = vld [vmem:[%s0 + $0x320] sm:$0xff]
  %v116 = vld [vmem:[%s0 + $0x328] sm:$0xff]
  %v117 = vld [vmem:[%s0 + $0x330] sm:$0xff]
  %v118 = vld [vmem:[%s0 + $0x338] sm:$0xff]
  %v119 = vld [vmem:[%s0 + $0x340] sm:$0xff]
  %v120 = vld [vmem:[%s0 + $0x348] sm:$0xff]
  %v121 = vld [vmem:[%s0 + $0x350] sm:$0xff]
  %v122 = vld [vmem:[%s0 + $0x358] sm:$0xff]
  %v123 = vld [vmem:[%s0 + $0x360] sm:$0xff]
  %v124 = vld [vmem:[%s0 + $0x368] sm:$0xff]
  %v125 = vld [vmem:[%s0 + $0x370] sm:$0xff]
  %v126 = vld [vmem:[%s0 + $0x378] sm:$0xff]
  %v127 = vld [vmem:[%s1] sm:$0xf]
  %v128 = vld [vmem:[%s1 + $0x4] sm:$0xf]
  %v129 = vld [vmem:[%s1 + $0x8] sm:$0xf]
  %v130 = vld [vmem:[%s1 + $0xc] sm:$0xf]
  %v131 = vld [vmem:[%s1 + $0x10] sm:$0xf]
  %v132 = vld [vmem:[%s1 + $0x14] sm:$0xf]
  %v133 = vld [vmem:[%s1 + $0x18] sm:$0xf]
  %v134 = vld [vmem:[%s1 + $0x1c] sm:$0xf]
  %v135 = vld [vmem:[%s1 + $0x20] sm:$0xf]
  %v136 = vld [vmem:[%s1 + $0x24] sm:$0xf]
  %v137 = vld [vmem:[%s1 + $0x28] sm:$0xf]
  %v138 = vld [vmem:[%s1 + $0x2c] sm:$0xf]
  %v139 = vld [vmem:[%s1 + $0x30] sm:$0xf]
  %v140 = vld [vmem:[%s1 + $0x34] sm:$0xf]
  %v141 = vld [vmem:[%s1 + $0x38] sm:$0xf]
  %v142 = vld [vmem:[%s1 + $0x3c] sm:$0xf]
  %v143 = vld [vmem:[%s1 + $0x40] sm:$0xf]
  %v144 = vld [vmem:[%s1 + $0x44] sm:$0xf]
  %v145 = vld [vmem:[%s1 + $0x48] sm:$0xf]
  %v146 = vld [vmem:[%s1 + $0x4c] sm:$0xf]
  %v147 = vld [vmem:[%s1 + $0x50] sm:$0xf]
  %v148 = vld [vmem:[%s1 + $0x54] sm:$0xf]
  %v149 = vld [vmem:[%s1 + $0x58] sm:$0xf]
  %v150 = vld [vmem:[%s1 + $0x5c] sm:$0xf]
  %v151 = vld [vmem:[%s1 + $0x60] sm:$0xf]
  %v152 = vld [vmem:[%s1 + $0x64] sm:$0xf]
  %v153 = vld [vmem:[%s1 + $0x68] sm:$0xf]
  %v154 = vld [vmem:[%s1 + $0x6c] sm:$0xf]
  %v155 = vld [vmem:[%s1 + $0x70] sm:$0xf]
  %v156 = vld [vmem:[%s1 + $0x74] sm:$0xf]
  %v157 = vld [vmem:[%s1 + $0x78] sm:$0xf]
  %v158 = vld [vmem:[%s1 + $0x7c] sm:$0xf]
  %v159 = vld [vmem:[%s1 + $0x80] sm:$0xf]
  %v160 = vld [vmem:[%s1 + $0x84] sm:$0xf]
  %v161 = vld [vmem:[%s1 + $0x88] sm:$0xf]
  %v162 = vld [vmem:[%s1 + $0x8c] sm:$0xf]
  %v163 = vld [vmem:[%s1 + $0x90] sm:$0xf]
  %v164 = vld [vmem:[%s1 + $0x94] sm:$0xf]
  %v165 = vld [vmem:[%s1 + $0x98] sm:$0xf]
  %v166 = vld [vmem:[%s1 + $0x9c] sm:$0xf]
  %v167 = vld [vmem:[%s1 + $0xa0] sm:$0xf]
  %v168 = vld [vmem:[%s1 + $0xa4] sm:$0xf]
  %v169 = vld [vmem:[%s1 + $0xa8] sm:$0xf]
  %v170 = vld [vmem:[%s1 + $0xac] sm:$0xf]
  %v171 = vld [vmem:[%s1 + $0xb0] sm:$0xf]
  %v172 = vld [vmem:[%s1 + $0xb4] sm:$0xf]
  %v173 = vld [vmem:[%s1 + $0xb8] sm:$0xf]
  %v174 = vld [vmem:[%s1 + $0xbc] sm:$0xf]
  %v175 = vld [vmem:[%s1 + $0xc0] sm:$0xf]
  %v176 = vld [vmem:[%s1 + $0xc4] sm:$0xf]
  %v289 = vunpack.c.l.b16 %v15
  %v290 = vunpack.c.h.b16 %v15
  %v291 = vunpack.c.l.b16 %v16
  %v292 = vunpack.c.h.b16 %v16
  %v293 = vunpack.c.l.b16 %v17
  %v294 = vunpack.c.h.b16 %v17
  %v295 = vunpack.c.l.b16 %v18
  %v296 = vunpack.c.h.b16 %v18
  %v297 = vunpack.c.l.b16 %v19
  %v298 = vunpack.c.h.b16 %v19
  %v299 = vunpack.c.l.b16 %v20
  %v300 = vunpack.c.h.b16 %v20
  %v301 = vunpack.c.l.b16 %v21
  %v302 = vunpack.c.h.b16 %v21
  %v303 = vunpack.c.l.b16 %v22
  %v304 = vunpack.c.h.b16 %v22
  %v305 = vunpack.c.l.b16 %v23
  %v306 = vunpack.c.h.b16 %v23
  %v307 = vunpack.c.l.b16 %v24
  %v308 = vunpack.c.h.b16 %v24
  %v309 = vunpack.c.l.b16 %v25
  %v310 = vunpack.c.h.b16 %v25
  %v311 = vunpack.c.l.b16 %v26
  %v312 = vunpack.c.h.b16 %v26
  %v313 = vunpack.c.l.b16 %v27
  %v314 = vunpack.c.h.b16 %v27
  %v315 = vunpack.c.l.b16 %v28
  %v316 = vunpack.c.h.b16 %v28
  %v317 = vunpack.c.l.b16 %v29
  %v318 = vunpack.c.h.b16 %v29
  %v319 = vunpack.c.l.b16 %v30
  %v320 = vunpack.c.h.b16 %v30
  %v321 = vunpack.c.l.b16 %v31
  %v322 = vunpack.c.h.b16 %v31
  %v323 = vunpack.c.l.b16 %v32
  %v324 = vunpack.c.h.b16 %v32
  %v325 = vunpack.c.l.b16 %v33
  %v326 = vunpack.c.h.b16 %v33
  %v327 = vunpack.c.l.b16 %v34
  %v328 = vunpack.c.h.b16 %v34
  %v329 = vunpack.c.l.b16 %v35
  %v330 = vunpack.c.h.b16 %v35
  %v331 = vunpack.c.l.b16 %v36
  %v332 = vunpack.c.h.b16 %v36
  %v333 = vunpack.c.l.b16 %v37
  %v334 = vunpack.c.h.b16 %v37
  %v335 = vunpack.c.l.b16 %v38
  %v336 = vunpack.c.h.b16 %v38
  %v337 = vunpack.c.l.b16 %v39
  %v338 = vunpack.c.h.b16 %v39
  %v339 = vunpack.c.l.b16 %v40
  %v340 = vunpack.c.h.b16 %v40
  %v341 = vunpack.c.l.b16 %v41
  %v342 = vunpack.c.h.b16 %v41
  %v343 = vunpack.c.l.b16 %v42
  %v344 = vunpack.c.h.b16 %v42
  %v345 = vunpack.c.l.b16 %v43
  %v346 = vunpack.c.h.b16 %v43
  %v347 = vunpack.c.l.b16 %v44
  %v348 = vunpack.c.h.b16 %v44
  %v349 = vunpack.c.l.b16 %v45
  %v350 = vunpack.c.h.b16 %v45
  %v351 = vunpack.c.l.b16 %v46
  %v352 = vunpack.c.h.b16 %v46
  %v353 = vunpack.c.l.b16 %v47
  %v354 = vunpack.c.h.b16 %v47
  %v355 = vunpack.c.l.b16 %v48
  %v356 = vunpack.c.h.b16 %v48
  %v357 = vunpack.c.l.b16 %v49
  %v358 = vunpack.c.h.b16 %v49
  %v359 = vunpack.c.l.b16 %v50
  %v360 = vunpack.c.h.b16 %v50
  %v361 = vunpack.c.l.b16 %v51
  %v362 = vunpack.c.h.b16 %v51
  %v363 = vunpack.c.l.b16 %v52
  %v364 = vunpack.c.h.b16 %v52
  %v365 = vunpack.c.l.b16 %v53
  %v366 = vunpack.c.h.b16 %v53
  %v367 = vunpack.c.l.b16 %v54
  %v368 = vunpack.c.h.b16 %v54
  %v369 = vunpack.c.l.b16 %v55
  %v370 = vunpack.c.h.b16 %v55
  %v371 = vunpack.c.l.b16 %v56
  %v372 = vunpack.c.h.b16 %v56
  %v373 = vunpack.c.l.b16 %v57
  %v374 = vunpack.c.h.b16 %v57
  %v375 = vunpack.c.l.b16 %v58
  %v376 = vunpack.c.h.b16 %v58
  %v377 = vunpack.c.l.b16 %v59
  %v378 = vunpack.c.h.b16 %v59
  %v379 = vunpack.c.l.b16 %v60
  %v380 = vunpack.c.h.b16 %v60
  %v381 = vunpack.c.l.b16 %v61
  %v382 = vunpack.c.h.b16 %v61
  %v383 = vunpack.c.l.b16 %v62
  %v384 = vunpack.c.h.b16 %v62
  %v385 = vunpack.c.l.b16 %v63
  %v386 = vunpack.c.h.b16 %v63
  %v387 = vunpack.c.l.b16 %v64
  %v388 = vunpack.c.h.b16 %v64
  %v389 = vunpack.c.l.b16 %v65
  %v390 = vunpack.c.h.b16 %v65
  %v391 = vunpack.c.l.b16 %v66
  %v392 = vunpack.c.h.b16 %v66
  %v393 = vunpack.c.l.b16 %v67
  %v394 = vunpack.c.h.b16 %v67
  %v395 = vunpack.c.l.b16 %v68
  %v396 = vunpack.c.h.b16 %v68
  %v397 = vunpack.c.l.b16 %v69
  %v398 = vunpack.c.h.b16 %v69
  %v399 = vunpack.c.l.b16 %v70
  %v400 = vunpack.c.h.b16 %v70
  %v401 = vunpack.c.l.b16 %v71
  %v402 = vunpack.c.h.b16 %v71
  %v403 = vunpack.c.l.b16 %v72
  %v404 = vunpack.c.h.b16 %v72
  %v405 = vunpack.c.l.b16 %v73
  %v406 = vunpack.c.h.b16 %v73
  %v407 = vunpack.c.l.b16 %v74
  %v408 = vunpack.c.h.b16 %v74
  %v409 = vunpack.c.l.b16 %v75
  %v410 = vunpack.c.h.b16 %v75
  %v411 = vunpack.c.l.b16 %v76
  %v412 = vunpack.c.h.b16 %v76
  %v413 = vunpack.c.l.b16 %v77
  %v414 = vunpack.c.h.b16 %v77
  %v415 = vunpack.c.l.b16 %v78
  %v416 = vunpack.c.h.b16 %v78
  %v417 = vunpack.c.l.b16 %v79
  %v418 = vunpack.c.h.b16 %v79
  %v419 = vunpack.c.l.b16 %v80
  %v420 = vunpack.c.h.b16 %v80
  %v421 = vunpack.c.l.b16 %v81
  %v422 = vunpack.c.h.b16 %v81
  %v423 = vunpack.c.l.b16 %v82
  %v424 = vunpack.c.h.b16 %v82
  %v425 = vunpack.c.l.b16 %v83
  %v426 = vunpack.c.h.b16 %v83
  %v427 = vunpack.c.l.b16 %v84
  %v428 = vunpack.c.h.b16 %v84
  %v429 = vunpack.c.l.b16 %v85
  %v430 = vunpack.c.h.b16 %v85
  %v431 = vunpack.c.l.b16 %v86
  %v432 = vunpack.c.h.b16 %v86
  %v433 = vunpack.c.l.b16 %v87
  %v434 = vunpack.c.h.b16 %v87
  %v435 = vunpack.c.l.b16 %v88
  %v436 = vunpack.c.h.b16 %v88
  %v437 = vunpack.c.l.b16 %v89
  %v438 = vunpack.c.h.b16 %v89
  %v439 = vunpack.c.l.b16 %v90
  %v440 = vunpack.c.h.b16 %v90
  %v441 = vunpack.c.l.b16 %v91
  %v442 = vunpack.c.h.b16 %v91
  %v443 = vunpack.c.l.b16 %v92
  %v444 = vunpack.c.h.b16 %v92
  %v445 = vunpack.c.l.b16 %v93
  %v446 = vunpack.c.h.b16 %v93
  %v447 = vunpack.c.l.b16 %v94
  %v448 = vunpack.c.h.b16 %v94
  %v449 = vunpack.c.l.b16 %v95
  %v450 = vunpack.c.h.b16 %v95
  %v451 = vunpack.c.l.b16 %v96
  %v452 = vunpack.c.h.b16 %v96
  %v453 = vunpack.c.l.b16 %v97
  %v454 = vunpack.c.h.b16 %v97
  %v455 = vunpack.c.l.b16 %v98
  %v456 = vunpack.c.h.b16 %v98
  %v457 = vunpack.c.l.b16 %v99
  %v458 = vunpack.c.h.b16 %v99
  %v459 = vunpack.c.l.b16 %v100
  %v460 = vunpack.c.h.b16 %v100
  %v461 = vunpack.c.l.b16 %v101
  %v462 = vunpack.c.h.b16 %v101
  %v463 = vunpack.c.l.b16 %v102
  %v464 = vunpack.c.h.b16 %v102
  %v465 = vunpack.c.l.b16 %v103
  %v466 = vunpack.c.h.b16 %v103
  %v467 = vunpack.c.l.b16 %v104
  %v468 = vunpack.c.h.b16 %v104
  %v469 = vunpack.c.l.b16 %v105
  %v470 = vunpack.c.h.b16 %v105
  %v471 = vunpack.c.l.b16 %v106
  %v472 = vunpack.c.h.b16 %v106
  %v473 = vunpack.c.l.b16 %v107
  %v474 = vunpack.c.h.b16 %v107
  %v475 = vunpack.c.l.b16 %v108
  %v476 = vunpack.c.h.b16 %v108
  %v477 = vunpack.c.l.b16 %v109
  %v478 = vunpack.c.h.b16 %v109
  %v479 = vunpack.c.l.b16 %v110
  %v480 = vunpack.c.h.b16 %v110
  %v481 = vunpack.c.l.b16 %v111
  %v482 = vunpack.c.h.b16 %v111
  %v483 = vunpack.c.l.b16 %v112
  %v484 = vunpack.c.h.b16 %v112
  %v485 = vunpack.c.l.b16 %v113
  %v486 = vunpack.c.h.b16 %v113
  %v487 = vunpack.c.l.b16 %v114
  %v488 = vunpack.c.h.b16 %v114
  %v489 = vunpack.c.l.b16 %v115
  %v490 = vunpack.c.h.b16 %v115
  %v491 = vunpack.c.l.b16 %v116
  %v492 = vunpack.c.h.b16 %v116
  %v493 = vunpack.c.l.b16 %v117
  %v494 = vunpack.c.h.b16 %v117
  %v495 = vunpack.c.l.b16 %v118
  %v496 = vunpack.c.h.b16 %v118
  %v497 = vunpack.c.l.b16 %v119
  %v498 = vunpack.c.h.b16 %v119
  %v499 = vunpack.c.l.b16 %v120
  %v500 = vunpack.c.h.b16 %v120
  %v501 = vunpack.c.l.b16 %v121
  %v502 = vunpack.c.h.b16 %v121
  %v503 = vunpack.c.l.b16 %v122
  %v504 = vunpack.c.h.b16 %v122
  %v505 = vunpack.c.l.b16 %v123
  %v506 = vunpack.c.h.b16 %v123
  %v507 = vunpack.c.l.b16 %v124
  %v508 = vunpack.c.h.b16 %v124
  %v509 = vunpack.c.l.b16 %v125
  %v510 = vunpack.c.h.b16 %v125
  %v511 = vunpack.c.l.b16 %v126
  %v512 = vunpack.c.h.b16 %v126
  %v513 = vpack.c.b16 %v293, %v289
  %v514 = vpack.c.b16 %v294, %v290
  %v515 = vpack.c.b16 %v295, %v291
  %v516 = vpack.c.b16 %v296, %v292
  %v517 = vpack.c.b16 %v301, %v297
  %v518 = vpack.c.b16 %v302, %v298
  %v519 = vpack.c.b16 %v303, %v299
  %v520 = vpack.c.b16 %v304, %v300
  %v521 = vpack.c.b16 %v309, %v305
  %v522 = vpack.c.b16 %v310, %v306
  %v523 = vpack.c.b16 %v311, %v307
  %v524 = vpack.c.b16 %v312, %v308
  %v525 = vpack.c.b16 %v317, %v313
  %v526 = vpack.c.b16 %v318, %v314
  %v527 = vpack.c.b16 %v319, %v315
  %v528 = vpack.c.b16 %v320, %v316
  %v529 = vpack.c.b16 %v325, %v321
  %v530 = vpack.c.b16 %v326, %v322
  %v531 = vpack.c.b16 %v327, %v323
  %v532 = vpack.c.b16 %v328, %v324
  %v533 = vpack.c.b16 %v333, %v329
  %v534 = vpack.c.b16 %v334, %v330
  %v535 = vpack.c.b16 %v335, %v331
  %v536 = vpack.c.b16 %v336, %v332
  %v537 = vpack.c.b16 %v341, %v337
  %v538 = vpack.c.b16 %v342, %v338
  %v539 = vpack.c.b16 %v343, %v339
  %v540 = vpack.c.b16 %v344, %v340
  %v541 = vpack.c.b16 %v349, %v345
  %v542 = vpack.c.b16 %v350, %v346
  %v543 = vpack.c.b16 %v351, %v347
  %v544 = vpack.c.b16 %v352, %v348
  %v545 = vpack.c.b16 %v357, %v353
  %v546 = vpack.c.b16 %v358, %v354
  %v547 = vpack.c.b16 %v359, %v355
  %v548 = vpack.c.b16 %v360, %v356
  %v549 = vpack.c.b16 %v365, %v361
  %v550 = vpack.c.b16 %v366, %v362
  %v551 = vpack.c.b16 %v367, %v363
  %v552 = vpack.c.b16 %v368, %v364
  %v553 = vpack.c.b16 %v373, %v369
  %v554 = vpack.c.b16 %v374, %v370
  %v555 = vpack.c.b16 %v375, %v371
  %v556 = vpack.c.b16 %v376, %v372
  %v557 = vpack.c.b16 %v381, %v377
  %v558 = vpack.c.b16 %v382, %v378
  %v559 = vpack.c.b16 %v383, %v379
  %v560 = vpack.c.b16 %v384, %v380
  %v561 = vpack.c.b16 %v389, %v385
  %v562 = vpack.c.b16 %v390, %v386
  %v563 = vpack.c.b16 %v391, %v387
  %v564 = vpack.c.b16 %v392, %v388
  %v565 = vpack.c.b16 %v397, %v393
  %v566 = vpack.c.b16 %v398, %v394
  %v567 = vpack.c.b16 %v399, %v395
  %v568 = vpack.c.b16 %v400, %v396
  %v569 = vpack.c.b16 %v405, %v401
  %v570 = vpack.c.b16 %v406, %v402
  %v571 = vpack.c.b16 %v407, %v403
  %v572 = vpack.c.b16 %v408, %v404
  %v573 = vpack.c.b16 %v413, %v409
  %v574 = vpack.c.b16 %v414, %v410
  %v575 = vpack.c.b16 %v415, %v411
  %v576 = vpack.c.b16 %v416, %v412
  %v577 = vpack.c.b16 %v421, %v417
  %v578 = vpack.c.b16 %v422, %v418
  %v579 = vpack.c.b16 %v423, %v419
  %v580 = vpack.c.b16 %v424, %v420
  %v581 = vpack.c.b16 %v429, %v425
  %v582 = vpack.c.b16 %v430, %v426
  %v583 = vpack.c.b16 %v431, %v427
  %v584 = vpack.c.b16 %v432, %v428
  %v585 = vpack.c.b16 %v437, %v433
  %v586 = vpack.c.b16 %v438, %v434
  %v587 = vpack.c.b16 %v439, %v435
  %v588 = vpack.c.b16 %v440, %v436
  %v589 = vpack.c.b16 %v445, %v441
  %v590 = vpack.c.b16 %v446, %v442
  %v591 = vpack.c.b16 %v447, %v443
  %v592 = vpack.c.b16 %v448, %v444
  %v593 = vpack.c.b16 %v453, %v449
  %v594 = vpack.c.b16 %v454, %v450
  %v595 = vpack.c.b16 %v455, %v451
  %v596 = vpack.c.b16 %v456, %v452
  %v597 = vpack.c.b16 %v461, %v457
  %v598 = vpack.c.b16 %v462, %v458
  %v599 = vpack.c.b16 %v463, %v459
  %v600 = vpack.c.b16 %v464, %v460
  %v601 = vpack.c.b16 %v469, %v465
  %v602 = vpack.c.b16 %v470, %v466
  %v603 = vpack.c.b16 %v471, %v467
  %v604 = vpack.c.b16 %v472, %v468
  %v605 = vpack.c.b16 %v477, %v473
  %v606 = vpack.c.b16 %v478, %v474
  %v607 = vpack.c.b16 %v479, %v475
  %v608 = vpack.c.b16 %v480, %v476
  %v609 = vpack.c.b16 %v485, %v481
  %v610 = vpack.c.b16 %v486, %v482
  %v611 = vpack.c.b16 %v487, %v483
  %v612 = vpack.c.b16 %v488, %v484
  %v613 = vpack.c.b16 %v493, %v489
  %v614 = vpack.c.b16 %v494, %v490
  %v615 = vpack.c.b16 %v495, %v491
  %v616 = vpack.c.b16 %v496, %v492
  %v617 = vpack.c.b16 %v501, %v497
  %v618 = vpack.c.b16 %v502, %v498
  %v619 = vpack.c.b16 %v503, %v499
  %v620 = vpack.c.b16 %v504, %v500
  %v621 = vpack.c.b16 %v509, %v505
  %v622 = vpack.c.b16 %v510, %v506
  %v623 = vpack.c.b16 %v511, %v507
  %v624 = vpack.c.b16 %v512, %v508
  %v759 = vunpack.c.l.b16 %v127
  %v760 = vunpack.c.l.b16 %v128
  %v761 = vunpack.c.l.b16 %v129
  %v762 = vunpack.c.l.b16 %v130
  %v763 = vunpack.c.l.b16 %v131
  %v764 = vunpack.c.l.b16 %v132
  %v765 = vunpack.c.l.b16 %v133
  %v766 = vunpack.c.l.b16 %v134
  %v767 = vunpack.c.l.b16 %v135
  %v768 = vunpack.c.l.b16 %v136
  %v769 = vunpack.c.l.b16 %v137
  %v770 = vunpack.c.l.b16 %v138
  %v771 = vunpack.c.l.b16 %v139
  %v772 = vunpack.c.l.b16 %v140
  %v773 = vunpack.c.l.b16 %v141
  %v774 = vunpack.c.l.b16 %v142
  %v775 = vunpack.c.l.b16 %v143
  %v776 = vunpack.c.l.b16 %v144
  %v777 = vunpack.c.l.b16 %v145
  %v778 = vunpack.c.l.b16 %v146
  %v779 = vunpack.c.l.b16 %v147
  %v780 = vunpack.c.l.b16 %v148
  %v781 = vunpack.c.l.b16 %v149
  %v782 = vunpack.c.l.b16 %v150
  %v783 = vunpack.c.l.b16 %v151
  %v784 = vunpack.c.l.b16 %v152
  %v785 = vunpack.c.l.b16 %v153
  %v786 = vunpack.c.l.b16 %v154
  %v787 = vunpack.c.l.b16 %v155
  %v788 = vunpack.c.l.b16 %v156
  %v789 = vunpack.c.l.b16 %v157
  %v790 = vunpack.c.l.b16 %v158
  %v791 = vunpack.c.l.b16 %v159
  %v792 = vunpack.c.l.b16 %v160
  %v793 = vunpack.c.l.b16 %v161
  %v794 = vunpack.c.l.b16 %v162
  %v795 = vunpack.c.l.b16 %v163
  %v796 = vunpack.c.l.b16 %v164
  %v797 = vunpack.c.l.b16 %v165
  %v798 = vunpack.c.l.b16 %v166
  %v799 = vunpack.c.l.b16 %v167
  %v800 = vunpack.c.l.b16 %v168
  %v801 = vunpack.c.l.b16 %v169
  %v802 = vunpack.c.l.b16 %v170
  %v803 = vunpack.c.l.b16 %v171
  %v804 = vunpack.c.l.b16 %v172
  %v805 = vunpack.c.l.b16 %v173
  %v806 = vunpack.c.l.b16 %v174
  %v807 = vunpack.c.l.b16 %v175
  %v808 = vunpack.c.l.b16 %v176
  %v809 = vpack.c.b16 %v760, %v759
  %v810 = vpack.c.b16 %v762, %v761
  %v811 = vpack.c.b16 %v764, %v763
  %v812 = vpack.c.b16 %v766, %v765
  %v813 = vpack.c.b16 %v768, %v767
  %v814 = vpack.c.b16 %v770, %v769
  %v815 = vpack.c.b16 %v772, %v771
  %v816 = vpack.c.b16 %v774, %v773
  %v817 = vpack.c.b16 %v776, %v775
  %v818 = vpack.c.b16 %v778, %v777
  %v819 = vpack.c.b16 %v780, %v779
  %v820 = vpack.c.b16 %v782, %v781
  %v821 = vpack.c.b16 %v784, %v783
  %v822 = vpack.c.b16 %v786, %v785
  %v823 = vpack.c.b16 %v788, %v787
  %v824 = vpack.c.b16 %v790, %v789
  %v825 = vpack.c.b16 %v792, %v791
  %v826 = vpack.c.b16 %v794, %v793
  %v827 = vpack.c.b16 %v796, %v795
  %v828 = vpack.c.b16 %v798, %v797
  %v829 = vpack.c.b16 %v800, %v799
  %v830 = vpack.c.b16 %v802, %v801
  %v831 = vpack.c.b16 %v804, %v803
  %v832 = vpack.c.b16 %v806, %v805
  %v833 = vpack.c.b16 %v808, %v807
  %vm859 = vcmask 130048
  %v861 = vsel %vm859, %v516, 0
  %v864 = vsel %vm859, %v520, 0
  %v867 = vsel %vm859, %v524, 0
  %v870 = vsel %vm859, %v528, 0
  %v873 = vsel %vm859, %v532, 0
  %v876 = vsel %vm859, %v536, 0
  %v879 = vsel %vm859, %v540, 0
  %v882 = vsel %vm859, %v544, 0
  %v885 = vsel %vm859, %v548, 0
  %v888 = vsel %vm859, %v552, 0
  %v891 = vsel %vm859, %v556, 0
  %v894 = vsel %vm859, %v560, 0
  %v897 = vsel %vm859, %v564, 0
  %v900 = vsel %vm859, %v568, 0
  %v903 = vsel %vm859, %v572, 0
  %v906 = vsel %vm859, %v576, 0
  %v909 = vsel %vm859, %v580, 0
  %v912 = vsel %vm859, %v584, 0
  %v915 = vsel %vm859, %v588, 0
  %v918 = vsel %vm859, %v592, 0
  %v921 = vsel %vm859, %v596, 0
  %v924 = vsel %vm859, %v600, 0
  %v927 = vsel %vm859, %v604, 0
  %v930 = vsel %vm859, %v608, 0
  %v933 = vsel %vm859, %v612, 0
  %v936 = vsel %vm859, %v616, 0
  %v939 = vsel %vm859, %v620, 0
  %v942 = vsel %vm859, %v624, 0
  %944 = vmatprep.subr.bf16.mxu0 0
  %945 = vmatpush1.bf16.msra.mxu0 %v809
  %946 = vmatprep.subr.bf16.mxu0 0
  %947 = vmatpush1.bf16.msra.mxu0 %v810
  %948 = vmatprep.subr.bf16.mxu0 0
  %949 = vmatpush1.bf16.msra.mxu0 %v811
  %950 = vmatprep.subr.bf16.mxu0 0
  %951 = vmatpush1.bf16.msra.mxu0 %v812
  %952 = vmatprep.subr.bf16.mxu0 0
  %953 = vmatpush1.bf16.msra.mxu0 %v813
  %954 = vmatprep.subr.bf16.mxu0 0
  %955 = vmatpush1.bf16.msra.mxu0 %v814
  %956 = vmatprep.subr.bf16.mxu0 0
  %957 = vmatpush1.bf16.msra.mxu0 %v815
  %958 = vmatprep.subr.bf16.mxu0 0
  %959 = vmatpush1.bf16.msra.mxu0 %v816
  %960 = vmatprep.subr.bf16.mxu0 0
  %961 = vmatpush1.bf16.msra.mxu0 %v817
  %962 = vmatprep.subr.bf16.mxu0 0
  %963 = vmatpush1.bf16.msra.mxu0 %v818
  %964 = vmatprep.subr.bf16.mxu0 0
  %965 = vmatpush1.bf16.msra.mxu0 %v819
  %966 = vmatprep.subr.bf16.mxu0 0
  %967 = vmatpush1.bf16.msra.mxu0 %v820
  %968 = vmatprep.subr.bf16.mxu0 0
  %969 = vmatpush1.bf16.msra.mxu0 %v821
  %970 = vmatprep.subr.bf16.mxu0 0
  %971 = vmatpush1.bf16.msra.mxu0 %v822
  %972 = vmatprep.subr.bf16.mxu0 0
  %973 = vmatpush1.bf16.msra.mxu0 %v823
  %974 = vmatprep.subr.bf16.mxu0 0
  %975 = vmatpush1.bf16.msra.mxu0 %v824
  %976 = vmatprep.mubr.bf16.mxu0 %v514
  %977 = vmatmul.mubr.bf16.gmra.mrb[0].mxu0 %v513
  %v978 = vpop.f32.mrb[0].mxu0
  %v979 = vadd.f32 0.0, %v978
  %v980 = vpop.f32.mrb[0].mxu0
  %v981 = vpop.f32.mrb[0].mxu0
  %v982 = vadd.f32 0.0, %v981
  %v983 = vpop.f32.mrb[0].mxu0
  %984 = vmatprep.mubr.bf16.mxu0 %v518
  %985 = vmatmul.mubr.bf16.gmra.mrb[0].mxu0 %v517
  %v986 = vpop.f32.mrb[0].mxu0
  %v987 = vadd.f32 0.0, %v986
  %v988 = vpop.f32.mrb[0].mxu0
  %v989 = vpop.f32.mrb[0].mxu0
  %v990 = vadd.f32 0.0, %v989
  %v991 = vpop.f32.mrb[0].mxu0
  %992 = vmatprep.mubr.bf16.mxu0 %v522
  %993 = vmatmul.mubr.bf16.gmra.mrb[0].mxu0 %v521
  %v994 = vpop.f32.mrb[0].mxu0
  %v995 = vadd.f32 0.0, %v994
  %v996 = vpop.f32.mrb[0].mxu0
  %v997 = vpop.f32.mrb[0].mxu0
  %v998 = vadd.f32 0.0, %v997
  %v999 = vpop.f32.mrb[0].mxu0
  %1000 = vmatprep.mubr.bf16.mxu0 %v526
  %1001 = vmatmul.mubr.bf16.gmra.mrb[0].mxu0 %v525
  %v1002 = vpop.f32.mrb[0].mxu0
  %v1003 = vadd.f32 0.0, %v1002
  %v1004 = vpop.f32.mrb[0].mxu0
  %v1005 = vpop.f32.mrb[0].mxu0
  %v1006 = vadd.f32 0.0, %v1005
  %v1007 = vpop.f32.mrb[0].mxu0
  %1008 = vmatprep.mubr.bf16.mxu0 %v530
  %1009 = vmatmul.mubr.bf16.gmra.mrb[0].mxu0 %v529
  %v1010 = vpop.f32.mrb[0].mxu0
  %v1011 = vadd.f32 0.0, %v1010
  %v1012 = vpop.f32.mrb[0].mxu0
  %v1013 = vpop.f32.mrb[0].mxu0
  %v1014 = vadd.f32 0.0, %v1013
  %v1015 = vpop.f32.mrb[0].mxu0
  %1016 = vmatprep.mubr.bf16.mxu0 %v534
  %1017 = vmatmul.mubr.bf16.gmra.mrb[0].mxu0 %v533
  %v1018 = vpop.f32.mrb[0].mxu0
  %v1019 = vadd.f32 0.0, %v1018
  %v1020 = vpop.f32.mrb[0].mxu0
  %v1021 = vpop.f32.mrb[0].mxu0
  %v1022 = vadd.f32 0.0, %v1021
  %v1023 = vpop.f32.mrb[0].mxu0
  %1024 = vmatprep.mubr.bf16.mxu0 %v538
  %1025 = vmatmul.mubr.bf16.gmra.mrb[0].mxu0 %v537
  %v1026 = vpop.f32.mrb[0].mxu0
  %v1027 = vadd.f32 0.0, %v1026
  %v1028 = vpop.f32.mrb[0].mxu0
  %v1029 = vpop.f32.mrb[0].mxu0
  %v1030 = vadd.f32 0.0, %v1029
  %v1031 = vpop.f32.mrb[0].mxu0
  %1032 = vmatprep.mubr.bf16.mxu0 %v542
  %1033 = vmatmul.mubr.bf16.gmra.mrb[0].mxu0 %v541
  %v1034 = vpop.f32.mrb[0].mxu0
  %v1035 = vadd.f32 0.0, %v1034
  %v1036 = vpop.f32.mrb[0].mxu0
  %v1037 = vpop.f32.mrb[0].mxu0
  %v1038 = vadd.f32 0.0, %v1037
  %v1039 = vpop.f32.mrb[0].mxu0
  %1040 = vmatprep.mubr.bf16.mxu0 %v546
  %1041 = vmatmul.mubr.bf16.gmra.mrb[0].mxu0 %v545
  %v1042 = vpop.f32.mrb[0].mxu0
  %v1043 = vadd.f32 0.0, %v1042
  %v1044 = vpop.f32.mrb[0].mxu0
  %v1045 = vpop.f32.mrb[0].mxu0
  %v1046 = vadd.f32 0.0, %v1045
  %v1047 = vpop.f32.mrb[0].mxu0
  %1048 = vmatprep.mubr.bf16.mxu0 %v550
  %1049 = vmatmul.mubr.bf16.gmra.mrb[0].mxu0 %v549
  %v1050 = vpop.f32.mrb[0].mxu0
  %v1051 = vadd.f32 0.0, %v1050
  %v1052 = vpop.f32.mrb[0].mxu0
  %v1053 = vpop.f32.mrb[0].mxu0
  %v1054 = vadd.f32 0.0, %v1053
  %v1055 = vpop.f32.mrb[0].mxu0
  %1056 = vmatprep.mubr.bf16.mxu0 %v554
  %1057 = vmatmul.mubr.bf16.gmra.mrb[0].mxu0 %v553
  %v1058 = vpop.f32.mrb[0].mxu0
  %v1059 = vadd.f32 0.0, %v1058
  %v1060 = vpop.f32.mrb[0].mxu0
  %v1061 = vpop.f32.mrb[0].mxu0
  %v1062 = vadd.f32 0.0, %v1061
  %v1063 = vpop.f32.mrb[0].mxu0
  %1064 = vmatprep.mubr.bf16.mxu0 %v558
  %1065 = vmatmul.mubr.bf16.gmra.mrb[0].mxu0 %v557
  %v1066 = vpop.f32.mrb[0].mxu0
  %v1067 = vadd.f32 0.0, %v1066
  %v1068 = vpop.f32.mrb[0].mxu0
  %v1069 = vpop.f32.mrb[0].mxu0
  %v1070 = vadd.f32 0.0, %v1069
  %v1071 = vpop.f32.mrb[0].mxu0
  %1072 = vmatprep.mubr.bf16.mxu0 %v562
  %1073 = vmatmul.mubr.bf16.gmra.mrb[0].mxu0 %v561
  %v1074 = vpop.f32.mrb[0].mxu0
  %v1075 = vadd.f32 0.0, %v1074
  %v1076 = vpop.f32.mrb[0].mxu0
  %v1077 = vpop.f32.mrb[0].mxu0
  %v1078 = vadd.f32 0.0, %v1077
  %v1079 = vpop.f32.mrb[0].mxu0
  %1080 = vmatprep.mubr.bf16.mxu0 %v566
  %1081 = vmatmul.mubr.bf16.gmra.mrb[0].mxu0 %v565
  %v1082 = vpop.f32.mrb[0].mxu0
  %v1083 = vadd.f32 0.0, %v1082
  %v1084 = vpop.f32.mrb[0].mxu0
  %v1085 = vpop.f32.mrb[0].mxu0
  %v1086 = vadd.f32 0.0, %v1085
  %v1087 = vpop.f32.mrb[0].mxu0
  %1088 = vmatprep.mubr.bf16.mxu0 %v570
  %1089 = vmatmul.mubr.bf16.gmra.mrb[0].mxu0 %v569
  %v1090 = vpop.f32.mrb[0].mxu0
  %v1091 = vadd.f32 0.0, %v1090
  %v1092 = vpop.f32.mrb[0].mxu0
  %v1093 = vpop.f32.mrb[0].mxu0
  %v1094 = vadd.f32 0.0, %v1093
  %v1095 = vpop.f32.mrb[0].mxu0
  %1096 = vmatprep.mubr.bf16.mxu0 %v574
  %1097 = vmatmul.mubr.bf16.gmra.mrb[0].mxu0 %v573
  %v1098 = vpop.f32.mrb[0].mxu0
  %v1099 = vadd.f32 0.0, %v1098
  %v1100 = vpop.f32.mrb[0].mxu0
  %v1101 = vpop.f32.mrb[0].mxu0
  %v1102 = vadd.f32 0.0, %v1101
  %v1103 = vpop.f32.mrb[0].mxu0
  %1104 = vmatprep.mubr.bf16.mxu0 %v578
  %1105 = vmatmul.mubr.bf16.gmra.mrb[0].mxu0 %v577
  %v1106 = vpop.f32.mrb[0].mxu0
  %v1107 = vadd.f32 0.0, %v1106
  %v1108 = vpop.f32.mrb[0].mxu0
  %v1109 = vpop.f32.mrb[0].mxu0
  %v1110 = vadd.f32 0.0, %v1109
  %v1111 = vpop.f32.mrb[0].mxu0
  %1112 = vmatprep.mubr.bf16.mxu0 %v582
  %1113 = vmatmul.mubr.bf16.gmra.mrb[0].mxu0 %v581
  %v1114 = vpop.f32.mrb[0].mxu0
  %v1115 = vadd.f32 0.0, %v1114
  %v1116 = vpop.f32.mrb[0].mxu0
  %v1117 = vpop.f32.mrb[0].mxu0
  %v1118 = vadd.f32 0.0, %v1117
  %v1119 = vpop.f32.mrb[0].mxu0
  %1120 = vmatprep.mubr.bf16.mxu0 %v586
  %1121 = vmatmul.mubr.bf16.gmra.mrb[0].mxu0 %v585
  %v1122 = vpop.f32.mrb[0].mxu0
  %v1123 = vadd.f32 0.0, %v1122
  %v1124 = vpop.f32.mrb[0].mxu0
  %v1125 = vpop.f32.mrb[0].mxu0
  %v1126 = vadd.f32 0.0, %v1125
  %v1127 = vpop.f32.mrb[0].mxu0
  %1128 = vmatprep.mubr.bf16.mxu0 %v590
  %1129 = vmatmul.mubr.bf16.gmra.mrb[0].mxu0 %v589
  %v1130 = vpop.f32.mrb[0].mxu0
  %v1131 = vadd.f32 0.0, %v1130
  %v1132 = vpop.f32.mrb[0].mxu0
  %v1133 = vpop.f32.mrb[0].mxu0
  %v1134 = vadd.f32 0.0, %v1133
  %v1135 = vpop.f32.mrb[0].mxu0
  %1136 = vmatprep.mubr.bf16.mxu0 %v594
  %1137 = vmatmul.mubr.bf16.gmra.mrb[0].mxu0 %v593
  %v1138 = vpop.f32.mrb[0].mxu0
  %v1139 = vadd.f32 0.0, %v1138
  %v1140 = vpop.f32.mrb[0].mxu0
  %v1141 = vpop.f32.mrb[0].mxu0
  %v1142 = vadd.f32 0.0, %v1141
  %v1143 = vpop.f32.mrb[0].mxu0
  %1144 = vmatprep.mubr.bf16.mxu0 %v598
  %1145 = vmatmul.mubr.bf16.gmra.mrb[0].mxu0 %v597
  %v1146 = vpop.f32.mrb[0].mxu0
  %v1147 = vadd.f32 0.0, %v1146
  %v1148 = vpop.f32.mrb[0].mxu0
  %v1149 = vpop.f32.mrb[0].mxu0
  %v1150 = vadd.f32 0.0, %v1149
  %v1151 = vpop.f32.mrb[0].mxu0
  %1152 = vmatprep.mubr.bf16.mxu0 %v602
  %1153 = vmatmul.mubr.bf16.gmra.mrb[0].mxu0 %v601
  %v1154 = vpop.f32.mrb[0].mxu0
  %v1155 = vadd.f32 0.0, %v1154
  %v1156 = vpop.f32.mrb[0].mxu0
  %v1157 = vpop.f32.mrb[0].mxu0
  %v1158 = vadd.f32 0.0, %v1157
  %v1159 = vpop.f32.mrb[0].mxu0
  %1160 = vmatprep.mubr.bf16.mxu0 %v606
  %1161 = vmatmul.mubr.bf16.gmra.mrb[0].mxu0 %v605
  %v1162 = vpop.f32.mrb[0].mxu0
  %v1163 = vadd.f32 0.0, %v1162
  %v1164 = vpop.f32.mrb[0].mxu0
  %v1165 = vpop.f32.mrb[0].mxu0
  %v1166 = vadd.f32 0.0, %v1165
  %v1167 = vpop.f32.mrb[0].mxu0
  %1168 = vmatprep.mubr.bf16.mxu0 %v610
  %1169 = vmatmul.mubr.bf16.gmra.mrb[0].mxu0 %v609
  %v1170 = vpop.f32.mrb[0].mxu0
  %v1171 = vadd.f32 0.0, %v1170
  %v1172 = vpop.f32.mrb[0].mxu0
  %v1173 = vpop.f32.mrb[0].mxu0
  %v1174 = vadd.f32 0.0, %v1173
  %v1175 = vpop.f32.mrb[0].mxu0
  %1176 = vmatprep.mubr.bf16.mxu0 %v614
  %1177 = vmatmul.mubr.bf16.gmra.mrb[0].mxu0 %v613
  %v1178 = vpop.f32.mrb[0].mxu0
  %v1179 = vadd.f32 0.0, %v1178
  %v1180 = vpop.f32.mrb[0].mxu0
  %v1181 = vpop.f32.mrb[0].mxu0
  %v1182 = vadd.f32 0.0, %v1181
  %v1183 = vpop.f32.mrb[0].mxu0
  %1184 = vmatprep.mubr.bf16.mxu0 %v618
  %1185 = vmatmul.mubr.bf16.gmra.mrb[0].mxu0 %v617
  %v1186 = vpop.f32.mrb[0].mxu0
  %v1187 = vadd.f32 0.0, %v1186
  %v1188 = vpop.f32.mrb[0].mxu0
  %v1189 = vpop.f32.mrb[0].mxu0
  %v1190 = vadd.f32 0.0, %v1189
  %v1191 = vpop.f32.mrb[0].mxu0
  %1192 = vmatprep.mubr.bf16.mxu0 %v622
  %1193 = vmatmul.mubr.bf16.gmra.mrb[0].mxu0 %v621
  %v1194 = vpop.f32.mrb[0].mxu0
  %v1195 = vadd.f32 0.0, %v1194
  %v1196 = vpop.f32.mrb[0].mxu0
  %v1197 = vpop.f32.mrb[0].mxu0
  %v1198 = vadd.f32 0.0, %v1197
  %v1199 = vpop.f32.mrb[0].mxu0
  %1200 = vdwg.mxu0
  %1201 = vmatprep.subr.bf16.mxu0 0
  %1202 = vmatpush1.bf16.msra.mxu0 %v825
  %1203 = vmatprep.subr.bf16.mxu0 0
  %1204 = vmatpush1.bf16.msra.mxu0 %v826
  %1205 = vmatprep.subr.bf16.mxu0 0
  %1206 = vmatpush1.bf16.msra.mxu0 %v827
  %1207 = vmatprep.subr.bf16.mxu0 0
  %1208 = vmatpush1.bf16.msra.mxu0 %v828
  %1209 = vmatprep.subr.bf16.mxu0 0
  %1210 = vmatpush1.bf16.msra.mxu0 %v829
  %1211 = vmatprep.subr.bf16.mxu0 0
  %1212 = vmatpush1.bf16.msra.mxu0 %v830
  %1213 = vmatprep.subr.bf16.mxu0 0
  %1214 = vmatpush1.bf16.msra.mxu0 %v831
  %1215 = vmatprep.subr.bf16.mxu0 0
  %1216 = vmatpush1.bf16.msra.mxu0 %v832
  %1217 = vmatprep.subr.bf16.mxu0 0
  %1218 = vmatpush1.bf16.msra.mxu0 %v833
  %1219 = vmatprep.subr.bf16.mxu0 0
  %1220 = vmatpush1.bf16.msra.mxu0 0
  %1221 = vmatprep.subr.bf16.mxu0 0
  %1222 = vmatpush1.bf16.msra.mxu0 0
  %1223 = vmatprep.subr.bf16.mxu0 0
  %1224 = vmatpush1.bf16.msra.mxu0 0
  %1225 = vmatprep.subr.bf16.mxu0 0
  %1226 = vmatpush1.bf16.msra.mxu0 0
  %1227 = vmatprep.subr.bf16.mxu0 0
  %1228 = vmatpush1.bf16.msra.mxu0 0
  %1229 = vmatprep.subr.bf16.mxu0 0
  %1230 = vmatpush1.bf16.msra.mxu0 0
  %1231 = vmatprep.subr.bf16.mxu0 0
  %1232 = vmatpush1.bf16.msra.mxu0 0
  %1233 = vmatprep.mubr.bf16.mxu0 %v861
  %1234 = vmatmul.mubr.bf16.gmra.mrb[0].mxu0 %v515
  %v1235 = vpop.f32.mrb[0].mxu0
  %v1236 = vadd.f32 %v979, %v1235
  %v1237 = vpop.f32.mrb[0].mxu0
  %v1238 = vpop.f32.mrb[0].mxu0
  %v1239 = vadd.f32 %v982, %v1238
  %v1240 = vpop.f32.mrb[0].mxu0
  %1241 = vmatprep.mubr.bf16.mxu0 %v864
  %1242 = vmatmul.mubr.bf16.gmra.mrb[0].mxu0 %v519
  %v1243 = vpop.f32.mrb[0].mxu0
  %v1244 = vadd.f32 %v987, %v1243
  %v1245 = vpop.f32.mrb[0].mxu0
  %v1246 = vpop.f32.mrb[0].mxu0
  %v1247 = vadd.f32 %v990, %v1246
  %v1248 = vpop.f32.mrb[0].mxu0
  %1249 = vmatprep.mubr.bf16.mxu0 %v867
  %1250 = vmatmul.mubr.bf16.gmra.mrb[0].mxu0 %v523
  %v1251 = vpop.f32.mrb[0].mxu0
  %v1252 = vadd.f32 %v995, %v1251
  %v1253 = vpop.f32.mrb[0].mxu0
  %v1254 = vpop.f32.mrb[0].mxu0
  %v1255 = vadd.f32 %v998, %v1254
  %v1256 = vpop.f32.mrb[0].mxu0
  %1257 = vmatprep.mubr.bf16.mxu0 %v870
  %1258 = vmatmul.mubr.bf16.gmra.mrb[0].mxu0 %v527
  %v1259 = vpop.f32.mrb[0].mxu0
  %v1260 = vadd.f32 %v1003, %v1259
  %v1261 = vpop.f32.mrb[0].mxu0
  %v1262 = vpop.f32.mrb[0].mxu0
  %v1263 = vadd.f32 %v1006, %v1262
  %v1264 = vpop.f32.mrb[0].mxu0
  %1265 = vmatprep.mubr.bf16.mxu0 %v873
  %1266 = vmatmul.mubr.bf16.gmra.mrb[0].mxu0 %v531
  %v1267 = vpop.f32.mrb[0].mxu0
  %v1268 = vadd.f32 %v1011, %v1267
  %v1269 = vpop.f32.mrb[0].mxu0
  %v1270 = vpop.f32.mrb[0].mxu0
  %v1271 = vadd.f32 %v1014, %v1270
  %v1272 = vpop.f32.mrb[0].mxu0
  %1273 = vmatprep.mubr.bf16.mxu0 %v876
  %1274 = vmatmul.mubr.bf16.gmra.mrb[0].mxu0 %v535
  %v1275 = vpop.f32.mrb[0].mxu0
  %v1276 = vadd.f32 %v1019, %v1275
  %v1277 = vpop.f32.mrb[0].mxu0
  %v1278 = vpop.f32.mrb[0].mxu0
  %v1279 = vadd.f32 %v1022, %v1278
  %v1280 = vpop.f32.mrb[0].mxu0
  %1281 = vmatprep.mubr.bf16.mxu0 %v879
  %1282 = vmatmul.mubr.bf16.gmra.mrb[0].mxu0 %v539
  %v1283 = vpop.f32.mrb[0].mxu0
  %v1284 = vadd.f32 %v1027, %v1283
  %v1285 = vpop.f32.mrb[0].mxu0
  %v1286 = vpop.f32.mrb[0].mxu0
  %v1287 = vadd.f32 %v1030, %v1286
  %v1288 = vpop.f32.mrb[0].mxu0
  %1289 = vmatprep.mubr.bf16.mxu0 %v882
  %1290 = vmatmul.mubr.bf16.gmra.mrb[0].mxu0 %v543
  %v1291 = vpop.f32.mrb[0].mxu0
  %v1292 = vadd.f32 %v1035, %v1291
  %v1293 = vpop.f32.mrb[0].mxu0
  %v1294 = vpop.f32.mrb[0].mxu0
  %v1295 = vadd.f32 %v1038, %v1294
  %v1296 = vpop.f32.mrb[0].mxu0
  %1297 = vmatprep.mubr.bf16.mxu0 %v885
  %1298 = vmatmul.mubr.bf16.gmra.mrb[0].mxu0 %v547
  %v1299 = vpop.f32.mrb[0].mxu0
  %v1300 = vadd.f32 %v1043, %v1299
  %v1301 = vpop.f32.mrb[0].mxu0
  %v1302 = vpop.f32.mrb[0].mxu0
  %v1303 = vadd.f32 %v1046, %v1302
  %v1304 = vpop.f32.mrb[0].mxu0
  %1305 = vmatprep.mubr.bf16.mxu0 %v888
  %1306 = vmatmul.mubr.bf16.gmra.mrb[0].mxu0 %v551
  %v1307 = vpop.f32.mrb[0].mxu0
  %v1308 = vadd.f32 %v1051, %v1307
  %v1309 = vpop.f32.mrb[0].mxu0
  %v1310 = vpop.f32.mrb[0].mxu0
  %v1311 = vadd.f32 %v1054, %v1310
  %v1312 = vpop.f32.mrb[0].mxu0
  %1313 = vmatprep.mubr.bf16.mxu0 %v891
  %1314 = vmatmul.mubr.bf16.gmra.mrb[0].mxu0 %v555
  %v1315 = vpop.f32.mrb[0].mxu0
  %v1316 = vadd.f32 %v1059, %v1315
  %v1317 = vpop.f32.mrb[0].mxu0
  %v1318 = vpop.f32.mrb[0].mxu0
  %v1319 = vadd.f32 %v1062, %v1318
  %v1320 = vpop.f32.mrb[0].mxu0
  %1321 = vmatprep.mubr.bf16.mxu0 %v894
  %1322 = vmatmul.mubr.bf16.gmra.mrb[0].mxu0 %v559
  %v1323 = vpop.f32.mrb[0].mxu0
  %v1324 = vadd.f32 %v1067, %v1323
  %v1325 = vpop.f32.mrb[0].mxu0
  %v1326 = vpop.f32.mrb[0].mxu0
  %v1327 = vadd.f32 %v1070, %v1326
  %v1328 = vpop.f32.mrb[0].mxu0
  %1329 = vmatprep.mubr.bf16.mxu0 %v897
  %1330 = vmatmul.mubr.bf16.gmra.mrb[0].mxu0 %v563
  %v1331 = vpop.f32.mrb[0].mxu0
  %v1332 = vadd.f32 %v1075, %v1331
  %v1333 = vpop.f32.mrb[0].mxu0
  %v1334 = vpop.f32.mrb[0].mxu0
  %v1335 = vadd.f32 %v1078, %v1334
  %v1336 = vpop.f32.mrb[0].mxu0
  %1337 = vmatprep.mubr.bf16.mxu0 %v900
  %1338 = vmatmul.mubr.bf16.gmra.mrb[0].mxu0 %v567
  %v1339 = vpop.f32.mrb[0].mxu0
  %v1340 = vadd.f32 %v1083, %v1339
  %v1341 = vpop.f32.mrb[0].mxu0
  %v1342 = vpop.f32.mrb[0].mxu0
  %v1343 = vadd.f32 %v1086, %v1342
  %v1344 = vpop.f32.mrb[0].mxu0
  %1345 = vmatprep.mubr.bf16.mxu0 %v903
  %1346 = vmatmul.mubr.bf16.gmra.mrb[0].mxu0 %v571
  %v1347 = vpop.f32.mrb[0].mxu0
  %v1348 = vadd.f32 %v1091, %v1347
  %v1349 = vpop.f32.mrb[0].mxu0
  %v1350 = vpop.f32.mrb[0].mxu0
  %v1351 = vadd.f32 %v1094, %v1350
  %v1352 = vpop.f32.mrb[0].mxu0
  %1353 = vmatprep.mubr.bf16.mxu0 %v906
  %1354 = vmatmul.mubr.bf16.gmra.mrb[0].mxu0 %v575
  %v1355 = vpop.f32.mrb[0].mxu0
  %v1356 = vadd.f32 %v1099, %v1355
  %v1357 = vpop.f32.mrb[0].mxu0
  %v1358 = vpop.f32.mrb[0].mxu0
  %v1359 = vadd.f32 %v1102, %v1358
  %v1360 = vpop.f32.mrb[0].mxu0
  %1361 = vmatprep.mubr.bf16.mxu0 %v909
  %1362 = vmatmul.mubr.bf16.gmra.mrb[0].mxu0 %v579
  %v1363 = vpop.f32.mrb[0].mxu0
  %v1364 = vadd.f32 %v1107, %v1363
  %v1365 = vpop.f32.mrb[0].mxu0
  %v1366 = vpop.f32.mrb[0].mxu0
  %v1367 = vadd.f32 %v1110, %v1366
  %v1368 = vpop.f32.mrb[0].mxu0
  %1369 = vmatprep.mubr.bf16.mxu0 %v912
  %1370 = vmatmul.mubr.bf16.gmra.mrb[0].mxu0 %v583
  %v1371 = vpop.f32.mrb[0].mxu0
  %v1372 = vadd.f32 %v1115, %v1371
  %v1373 = vpop.f32.mrb[0].mxu0
  %v1374 = vpop.f32.mrb[0].mxu0
  %v1375 = vadd.f32 %v1118, %v1374
  %v1376 = vpop.f32.mrb[0].mxu0
  %1377 = vmatprep.mubr.bf16.mxu0 %v915
  %1378 = vmatmul.mubr.bf16.gmra.mrb[0].mxu0 %v587
  %v1379 = vpop.f32.mrb[0].mxu0
  %v1380 = vadd.f32 %v1123, %v1379
  %v1381 = vpop.f32.mrb[0].mxu0
  %v1382 = vpop.f32.mrb[0].mxu0
  %v1383 = vadd.f32 %v1126, %v1382
  %v1384 = vpop.f32.mrb[0].mxu0
  %1385 = vmatprep.mubr.bf16.mxu0 %v918
  %1386 = vmatmul.mubr.bf16.gmra.mrb[0].mxu0 %v591
  %v1387 = vpop.f32.mrb[0].mxu0
  %v1388 = vadd.f32 %v1131, %v1387
  %v1389 = vpop.f32.mrb[0].mxu0
  %v1390 = vpop.f32.mrb[0].mxu0
  %v1391 = vadd.f32 %v1134, %v1390
  %v1392 = vpop.f32.mrb[0].mxu0
  %1393 = vmatprep.mubr.bf16.mxu0 %v921
  %1394 = vmatmul.mubr.bf16.gmra.mrb[0].mxu0 %v595
  %v1395 = vpop.f32.mrb[0].mxu0
  %v1396 = vadd.f32 %v1139, %v1395
  %v1397 = vpop.f32.mrb[0].mxu0
  %v1398 = vpop.f32.mrb[0].mxu0
  %v1399 = vadd.f32 %v1142, %v1398
  %v1400 = vpop.f32.mrb[0].mxu0
  %1401 = vmatprep.mubr.bf16.mxu0 %v924
  %1402 = vmatmul.mubr.bf16.gmra.mrb[0].mxu0 %v599
  %v1403 = vpop.f32.mrb[0].mxu0
  %v1404 = vadd.f32 %v1147, %v1403
  %v1405 = vpop.f32.mrb[0].mxu0
  %v1406 = vpop.f32.mrb[0].mxu0
  %v1407 = vadd.f32 %v1150, %v1406
  %v1408 = vpop.f32.mrb[0].mxu0
  %1409 = vmatprep.mubr.bf16.mxu0 %v927
  %1410 = vmatmul.mubr.bf16.gmra.mrb[0].mxu0 %v603
  %v1411 = vpop.f32.mrb[0].mxu0
  %v1412 = vadd.f32 %v1155, %v1411
  %v1413 = vpop.f32.mrb[0].mxu0
  %v1414 = vpop.f32.mrb[0].mxu0
  %v1415 = vadd.f32 %v1158, %v1414
  %v1416 = vpop.f32.mrb[0].mxu0
  %1417 = vmatprep.mubr.bf16.mxu0 %v930
  %1418 = vmatmul.mubr.bf16.gmra.mrb[0].mxu0 %v607
  %v1419 = vpop.f32.mrb[0].mxu0
  %v1420 = vadd.f32 %v1163, %v1419
  %v1421 = vpop.f32.mrb[0].mxu0
  %v1422 = vpop.f32.mrb[0].mxu0
  %v1423 = vadd.f32 %v1166, %v1422
  %v1424 = vpop.f32.mrb[0].mxu0
  %1425 = vmatprep.mubr.bf16.mxu0 %v933
  %1426 = vmatmul.mubr.bf16.gmra.mrb[0].mxu0 %v611
  %v1427 = vpop.f32.mrb[0].mxu0
  %v1428 = vadd.f32 %v1171, %v1427
  %v1429 = vpop.f32.mrb[0].mxu0
  %v1430 = vpop.f32.mrb[0].mxu0
  %v1431 = vadd.f32 %v1174, %v1430
  %v1432 = vpop.f32.mrb[0].mxu0
  %1433 = vmatprep.mubr.bf16.mxu0 %v936
  %1434 = vmatmul.mubr.bf16.gmra.mrb[0].mxu0 %v615
  %v1435 = vpop.f32.mrb[0].mxu0
  %v1436 = vadd.f32 %v1179, %v1435
  %v1437 = vpop.f32.mrb[0].mxu0
  %v1438 = vpop.f32.mrb[0].mxu0
  %v1439 = vadd.f32 %v1182, %v1438
  %v1440 = vpop.f32.mrb[0].mxu0
  %1441 = vmatprep.mubr.bf16.mxu0 %v939
  %1442 = vmatmul.mubr.bf16.gmra.mrb[0].mxu0 %v619
  %v1443 = vpop.f32.mrb[0].mxu0
  %v1444 = vadd.f32 %v1187, %v1443
  %v1445 = vpop.f32.mrb[0].mxu0
  %v1446 = vpop.f32.mrb[0].mxu0
  %v1447 = vadd.f32 %v1190, %v1446
  %v1448 = vpop.f32.mrb[0].mxu0
  %1449 = vmatprep.mubr.bf16.mxu0 %v942
  %1450 = vmatmul.mubr.bf16.gmra.mrb[0].mxu0 %v623
  %v1451 = vpop.f32.mrb[0].mxu0
  %v1452 = vadd.f32 %v1195, %v1451
  %v1453 = vpop.f32.mrb[0].mxu0
  %v1454 = vpop.f32.mrb[0].mxu0
  %v1455 = vadd.f32 %v1198, %v1454
  %v1456 = vpop.f32.mrb[0].mxu0
  %1457 = vdwg.mxu0
  %v1458 = vmax.f32 %v1236, %v1292
  %v1459 = vmax.f32 %v1239, %v1295
  %v1460 = vmax.f32 %v1244, %v1300
  %v1461 = vmax.f32 %v1247, %v1303
  %v1462 = vmax.f32 %v1252, %v1308
  %v1463 = vmax.f32 %v1255, %v1311
  %v1464 = vmax.f32 %v1260, %v1316
  %v1465 = vmax.f32 %v1263, %v1319
  %v1466 = vmax.f32 %v1268, %v1324
  %v1467 = vmax.f32 %v1271, %v1327
  %v1468 = vmax.f32 %v1276, %v1332
  %v1469 = vmax.f32 %v1279, %v1335
  %v1470 = vmax.f32 %v1284, %v1340
  %v1471 = vmax.f32 %v1287, %v1343
  %v1472 = vmax.f32 %v1348, %v1404
  %v1473 = vmax.f32 %v1351, %v1407
  %v1474 = vmax.f32 %v1356, %v1412
  %v1475 = vmax.f32 %v1359, %v1415
  %v1476 = vmax.f32 %v1364, %v1420
  %v1477 = vmax.f32 %v1367, %v1423
  %v1478 = vmax.f32 %v1372, %v1428
  %v1479 = vmax.f32 %v1375, %v1431
  %v1480 = vmax.f32 %v1380, %v1436
  %v1481 = vmax.f32 %v1383, %v1439
  %v1482 = vmax.f32 %v1388, %v1444
  %v1483 = vmax.f32 %v1391, %v1447
  %v1484 = vmax.f32 %v1396, %v1452
  %v1485 = vmax.f32 %v1399, %v1455
  %v1486 = vmax.f32 %v1458, %v1472
  %v1487 = vmax.f32 %v1459, %v1473
  %v1488 = vmax.f32 %v1460, %v1474
  %v1489 = vmax.f32 %v1461, %v1475
  %v1490 = vmax.f32 %v1462, %v1476
  %v1491 = vmax.f32 %v1463, %v1477
  %v1492 = vmax.f32 %v1464, %v1478
  %v1493 = vmax.f32 %v1465, %v1479
  %v1494 = vmax.f32 %v1466, %v1480
  %v1495 = vmax.f32 %v1467, %v1481
  %v1496 = vmax.f32 %v1468, %v1482
  %v1497 = vmax.f32 %v1469, %v1483
  %v1498 = vmax.f32 %v1470, %v1484
  %v1499 = vmax.f32 %v1471, %v1485
  %v1500 = vld [vmem:[%s2] sm:$0x1]
  %v1502 = vlaneseq
  %v1503 = vshrl.u32 %v1502, 7
  %v1504 = vsub.s32 0, %v1503
  %v1505 = vrot.slane %v1500, %v1504
  %v1507 = vadd.f32 %v1486, %v1505
  %v1508 = vadd.f32 %v1487, %v1505
  %v1509 = vadd.f32 %v1488, %v1505
  %v1510 = vadd.f32 %v1489, %v1505
  %v1511 = vadd.f32 %v1490, %v1505
  %v1512 = vadd.f32 %v1491, %v1505
  %v1513 = vadd.f32 %v1492, %v1505
  %v1514 = vadd.f32 %v1493, %v1505
  %v1515 = vadd.f32 %v1494, %v1505
  %v1516 = vadd.f32 %v1495, %v1505
  %v1517 = vadd.f32 %v1496, %v1505
  %v1518 = vadd.f32 %v1497, %v1505
  %v1519 = vadd.f32 %v1498, %v1505
  %v1520 = vadd.f32 %v1499, %v1505
  %v1521 = vmax.f32 %v1507, 0.0
  %v1522 = vmax.f32 %v1508, 0.0
  %v1523 = vmax.f32 %v1509, 0.0
  %v1524 = vmax.f32 %v1510, 0.0
  %v1525 = vmax.f32 %v1511, 0.0
  %v1526 = vmax.f32 %v1512, 0.0
  %v1527 = vmax.f32 %v1513, 0.0
  %v1528 = vmax.f32 %v1514, 0.0
  %v1529 = vmax.f32 %v1515, 0.0
  %v1530 = vmax.f32 %v1516, 0.0
  %v1531 = vmax.f32 %v1517, 0.0
  %v1532 = vmax.f32 %v1518, 0.0
  %v1533 = vmax.f32 %v1519, 0.0
  %v1534 = vmax.f32 %v1520, 0.0
  %vm1535 = vcmask 261120
  %1536 = vst.msk [vmem:[%s3] sm:$0xff] %vm1535, %v1521
  %1537 = vst.msk [vmem:[%s3 + $0x8] sm:$0xff] %vm1535, %v1522
  %1538 = vst.msk [vmem:[%s3 + $0x10] sm:$0xff] %vm1535, %v1523
  %1539 = vst.msk [vmem:[%s3 + $0x18] sm:$0xff] %vm1535, %v1524
  %1540 = vst.msk [vmem:[%s3 + $0x20] sm:$0xff] %vm1535, %v1525
  %1541 = vst.msk [vmem:[%s3 + $0x28] sm:$0xff] %vm1535, %v1526
  %1542 = vst.msk [vmem:[%s3 + $0x30] sm:$0xff] %vm1535, %v1527
  %1543 = vst.msk [vmem:[%s3 + $0x38] sm:$0xff] %vm1535, %v1528
  %1544 = vst.msk [vmem:[%s3 + $0x40] sm:$0xff] %vm1535, %v1529
  %1545 = vst.msk [vmem:[%s3 + $0x48] sm:$0xff] %vm1535, %v1530
  %1546 = vst.msk [vmem:[%s3 + $0x50] sm:$0xff] %vm1535, %v1531
  %1547 = vst.msk [vmem:[%s3 + $0x58] sm:$0xff] %vm1535, %v1532
  %1548 = vst.msk [vmem:[%s3 + $0x60] sm:$0xff] %vm1535, %v1533
  %1549 = vst.msk [vmem:[%s3 + $0x68] sm:$0xff] %vm1535, %v1534
  // Predicated region
  $region14: #{cnn_forward.4} parent=0 // pred_check
    _
  $region15: #{cnn_forward.4} parent=0 // pred_check_branch
    %1551 = sbr.rel (0) target = $region17
  $region16: #{cnn_forward.4} parent=0 // pred_region
    _
  $region17: #{cnn_forward.4} parent=0 // pred_fallthru
    _
  // Predicated region
  $region18: #{cnn_forward.4} parent=0 // pred_check
    _
  $region19: #{cnn_forward.4} parent=0 // pred_check_branch
    %1553 = sbr.rel (0) target = $region21
  $region20: #{cnn_forward.4} parent=0 // pred_region
    _
  $region21: #{cnn_forward.4} parent=0 // pred_fallthru
    _

// kernel: cnn_forward.5
$region0: #{cnn_forward.5}
  #allocation0 [shape = 'u32[]', space=smem, size = 0x4, offset = 0x4, fixed_abs, tag = 'smem constant byte address 0x4 - core index']
  #allocation1 [shape = 'u32[144,128]{1,0:T(1,128)}', space=vmem, size = 0x12000, scoped, tag = 'internal scratch']
  %s0 = inlined_call_operand.vmem [shape: bf16[16,1568], index: 0, kind: input, shape index: {}]
  %s1 = inlined_call_operand.vmem [shape: bf16[1568,128], index: 1, kind: input, shape index: {}]
  %s2 = inlined_call_operand.vmem [shape: f32[1,128], index: 2, kind: input, shape index: {}]
  %s3 = inlined_call_operand.vmem [shape: f32[16,128], index: 3, kind: output, shape index: {}]
  %s4 = sld [smem:[#allocation0]]
  $region22: #{cnn_forward.5} parent=0
    _
  %s6 = ssub.s32 1, %s4
  %s7 = scalar_select 0, %s6, %s4
  // Predicated region
  $region2: #{cnn_forward.5} parent=0 // pred_check
    _
  $region3: #{cnn_forward.5} parent=0 // pred_check_branch
    %9 = sbr.rel (0) target = $region5
  $region4: #{cnn_forward.5} parent=0 // pred_region
    _
  $region5: #{cnn_forward.5} parent=0 // pred_fallthru
    _
  // Predicated region
  $region6: #{cnn_forward.5} parent=0 // pred_check
    _
  $region7: #{cnn_forward.5} parent=0 // pred_check_branch
    %11 = sbr.rel (0) target = $region9
  $region8: #{cnn_forward.5} parent=0 // pred_region
    _
  $region9: #{cnn_forward.5} parent=0 // pred_fallthru
    _
  // Predicated region
  $region10: #{cnn_forward.5} parent=0 // pred_check
    _
  $region11: #{cnn_forward.5} parent=0 // pred_check_branch
    %13 = sbr.rel (0) target = $region13
  $region12: #{cnn_forward.5} parent=0 // pred_region
    _
  $region13: #{cnn_forward.5} parent=0 // pred_fallthru
    _
  %v15 = vld [vmem:[%s0] sm:$0xff]
  %v16 = vld [vmem:[%s0 + $0x8] sm:$0xff]
  %v17 = vld [vmem:[%s0 + $0x10] sm:$0xff]
  %v18 = vld [vmem:[%s0 + $0x18] sm:$0xff]
  %v19 = vld [vmem:[%s0 + $0x20] sm:$0xff]
  %v20 = vld [vmem:[%s0 + $0x28] sm:$0xff]
  %v21 = vld [vmem:[%s0 + $0x30] sm:$0xf]
  %v22 = vld [vmem:[%s0 + $0x34] sm:$0xff]
  %v23 = vld [vmem:[%s0 + $0x3c] sm:$0xff]
  %v24 = vld [vmem:[%s0 + $0x44] sm:$0xff]
  %v25 = vld [vmem:[%s0 + $0x4c] sm:$0xff]
  %v26 = vld [vmem:[%s0 + $0x54] sm:$0xff]
  %v27 = vld [vmem:[%s0 + $0x5c] sm:$0xff]
  %v28 = vld [vmem:[%s0 + $0x64] sm:$0xf]
  %v29 = vld [vmem:[%s1] sm:$0xf]
  %v30 = vld [vmem:[%s1 + $0x4] sm:$0xf]
  %v31 = vld [vmem:[%s1 + $0x8] sm:$0xf]
  %v32 = vld [vmem:[%s1 + $0xc] sm:$0xf]
  %v33 = vld [vmem:[%s1 + $0x10] sm:$0xf]
  %v34 = vld [vmem:[%s1 + $0x14] sm:$0xf]
  %v35 = vld [vmem:[%s1 + $0x18] sm:$0xf]
  %v36 = vld [vmem:[%s1 + $0x1c] sm:$0xf]
  %v37 = vld [vmem:[%s1 + $0x20] sm:$0xf]
  %v38 = vld [vmem:[%s1 + $0x24] sm:$0xf]
  %v39 = vld [vmem:[%s1 + $0x28] sm:$0xf]
  %v40 = vld [vmem:[%s1 + $0x2c] sm:$0xf]
  %v41 = vld [vmem:[%s1 + $0x30] sm:$0xf]
  %v42 = vld [vmem:[%s1 + $0x34] sm:$0xf]
  %v43 = vld [vmem:[%s1 + $0x38] sm:$0xf]
  %v44 = vld [vmem:[%s1 + $0x3c] sm:$0xf]
  %v45 = vld [vmem:[%s1 + $0x40] sm:$0xf]
  %v46 = vld [vmem:[%s1 + $0x44] sm:$0xf]
  %v47 = vld [vmem:[%s1 + $0x48] sm:$0xf]
  %v48 = vld [vmem:[%s1 + $0x4c] sm:$0xf]
  %v49 = vld [vmem:[%s1 + $0x50] sm:$0xf]
  %v50 = vld [vmem:[%s1 + $0x54] sm:$0xf]
  %v51 = vld [vmem:[%s1 + $0x58] sm:$0xf]
  %v52 = vld [vmem:[%s1 + $0x5c] sm:$0xf]
  %v53 = vld [vmem:[%s1 + $0x60] sm:$0xf]
  %v54 = vld [vmem:[%s1 + $0x64] sm:$0xf]
  %v55 = vld [vmem:[%s1 + $0x68] sm:$0xf]
  %v56 = vld [vmem:[%s1 + $0x6c] sm:$0xf]
  %v57 = vld [vmem:[%s1 + $0x70] sm:$0xf]
  %v58 = vld [vmem:[%s1 + $0x74] sm:$0xf]
  %v59 = vld [vmem:[%s1 + $0x78] sm:$0xf]
  %v60 = vld [vmem:[%s1 + $0x7c] sm:$0xf]
  %v61 = vld [vmem:[%s1 + $0x80] sm:$0xf]
  %v62 = vld [vmem:[%s1 + $0x84] sm:$0xf]
  %v63 = vld [vmem:[%s1 + $0x88] sm:$0xf]
  %v64 = vld [vmem:[%s1 + $0x8c] sm:$0xf]
  %v65 = vld [vmem:[%s1 + $0x90] sm:$0xf]
  %v66 = vld [vmem:[%s1 + $0x94] sm:$0xf]
  %v67 = vld [vmem:[%s1 + $0x98] sm:$0xf]
  %v68 = vld [vmem:[%s1 + $0x9c] sm:$0xf]
  %v69 = vld [vmem:[%s1 + $0xa0] sm:$0xf]
  %v70 = vld [vmem:[%s1 + $0xa4] sm:$0xf]
  %v71 = vld [vmem:[%s1 + $0xa8] sm:$0xf]
  %v72 = vld [vmem:[%s1 + $0xac] sm:$0xf]
  %v73 = vld [vmem:[%s1 + $0xb0] sm:$0xf]
  %v74 = vld [vmem:[%s1 + $0xb4] sm:$0xf]
  %v75 = vld [vmem:[%s1 + $0xb8] sm:$0xf]
  %v76 = vld [vmem:[%s1 + $0xbc] sm:$0xf]
  %v77 = vld [vmem:[%s1 + $0xc0] sm:$0xf]
  %v78 = vld [vmem:[%s1 + $0xc4] sm:$0xf]
  %v79 = vld [vmem:[%s1 + $0xc8] sm:$0xf]
  %v80 = vld [vmem:[%s1 + $0xcc] sm:$0xf]
  %v81 = vld [vmem:[%s1 + $0xd0] sm:$0xf]
  %v82 = vld [vmem:[%s1 + $0xd4] sm:$0xf]
  %v83 = vld [vmem:[%s1 + $0xd8] sm:$0xf]
  %v84 = vld [vmem:[%s1 + $0xdc] sm:$0xf]
  %v85 = vld [vmem:[%s1 + $0xe0] sm:$0xf]
  %v86 = vld [vmem:[%s1 + $0xe4] sm:$0xf]
  %v87 = vld [vmem:[%s1 + $0xe8] sm:$0xf]
  %v88 = vld [vmem:[%s1 + $0xec] sm:$0xf]
  %v89 = vld [vmem:[%s1 + $0xf0] sm:$0xf]
  %v90 = vld [vmem:[%s1 + $0xf4] sm:$0xf]
  %v91 = vld [vmem:[%s1 + $0xf8] sm:$0xf]
  %v92 = vld [vmem:[%s1 + $0xfc] sm:$0xf]
  %v93 = vld [vmem:[%s1 + $0x100] sm:$0xf]
  %v94 = vld [vmem:[%s1 + $0x104] sm:$0xf]
  %v95 = vld [vmem:[%s1 + $0x108] sm:$0xf]
  %v96 = vld [vmem:[%s1 + $0x10c] sm:$0xf]
  %v97 = vld [vmem:[%s1 + $0x110] sm:$0xf]
  %v98 = vld [vmem:[%s1 + $0x114] sm:$0xf]
  %v99 = vld [vmem:[%s1 + $0x118] sm:$0xf]
  %v100 = vld [vmem:[%s1 + $0x11c] sm:$0xf]
  %v101 = vld [vmem:[%s1 + $0x120] sm:$0xf]
  %v102 = vld [vmem:[%s1 + $0x124] sm:$0xf]
  %v103 = vld [vmem:[%s1 + $0x128] sm:$0xf]
  %v104 = vld [vmem:[%s1 + $0x12c] sm:$0xf]
  %v105 = vld [vmem:[%s1 + $0x130] sm:$0xf]
  %v106 = vld [vmem:[%s1 + $0x134] sm:$0xf]
  %v107 = vld [vmem:[%s1 + $0x138] sm:$0xf]
  %v108 = vld [vmem:[%s1 + $0x13c] sm:$0xf]
  %v109 = vld [vmem:[%s1 + $0x140] sm:$0xf]
  %v110 = vld [vmem:[%s1 + $0x144] sm:$0xf]
  %v111 = vld [vmem:[%s1 + $0x148] sm:$0xf]
  %v112 = vld [vmem:[%s1 + $0x14c] sm:$0xf]
  %v113 = vld [vmem:[%s1 + $0x150] sm:$0xf]
  %v114 = vld [vmem:[%s1 + $0x154] sm:$0xf]
  %v115 = vld [vmem:[%s1 + $0x158] sm:$0xf]
  %v116 = vld [vmem:[%s1 + $0x15c] sm:$0xf]
  %v117 = vld [vmem:[%s1 + $0x160] sm:$0xf]
  %v118 = vld [vmem:[%s1 + $0x164] sm:$0xf]
  %v119 = vld [vmem:[%s1 + $0x168] sm:$0xf]
  %v120 = vld [vmem:[%s1 + $0x16c] sm:$0xf]
  %v121 = vld [vmem:[%s1 + $0x170] sm:$0xf]
  %v122 = vld [vmem:[%s1 + $0x174] sm:$0xf]
  %v123 = vld [vmem:[%s1 + $0x178] sm:$0xf]
  %v124 = vld [vmem:[%s1 + $0x17c] sm:$0xf]
  %v125 = vld [vmem:[%s1 + $0x180] sm:$0xf]
  %v126 = vld [vmem:[%s1 + $0x184] sm:$0xf]
  %v127 = vld [vmem:[%s1 + $0x188] sm:$0xf]
  %v128 = vld [vmem:[%s1 + $0x18c] sm:$0xf]
  %v129 = vld [vmem:[%s1 + $0x190] sm:$0xf]
  %v130 = vld [vmem:[%s1 + $0x194] sm:$0xf]
  %v131 = vld [vmem:[%s1 + $0x198] sm:$0xf]
  %v132 = vld [vmem:[%s1 + $0x19c] sm:$0xf]
  %v133 = vld [vmem:[%s1 + $0x1a0] sm:$0xf]
  %v134 = vld [vmem:[%s1 + $0x1a4] sm:$0xf]
  %v135 = vld [vmem:[%s1 + $0x1a8] sm:$0xf]
  %v136 = vld [vmem:[%s1 + $0x1ac] sm:$0xf]
  %v137 = vld [vmem:[%s1 + $0x1b0] sm:$0xf]
  %v138 = vld [vmem:[%s1 + $0x1b4] sm:$0xf]
  %v139 = vld [vmem:[%s1 + $0x1b8] sm:$0xf]
  %v140 = vld [vmem:[%s1 + $0x1bc] sm:$0xf]
  %v141 = vld [vmem:[%s1 + $0x1c0] sm:$0xf]
  %v142 = vld [vmem:[%s1 + $0x1c4] sm:$0xf]
  %v143 = vld [vmem:[%s1 + $0x1c8] sm:$0xf]
  %v144 = vld [vmem:[%s1 + $0x1cc] sm:$0xf]
  %v145 = vld [vmem:[%s1 + $0x1d0] sm:$0xf]
  %v146 = vld [vmem:[%s1 + $0x1d4] sm:$0xf]
  %v147 = vld [vmem:[%s1 + $0x1d8] sm:$0xf]
  %v148 = vld [vmem:[%s1 + $0x1dc] sm:$0xf]
  %v149 = vld [vmem:[%s1 + $0x1e0] sm:$0xf]
  %v150 = vld [vmem:[%s1 + $0x1e4] sm:$0xf]
  %v151 = vld [vmem:[%s1 + $0x1e8] sm:$0xf]
  %v152 = vld [vmem:[%s1 + $0x1ec] sm:$0xf]
  %v153 = vld [vmem:[%s1 + $0x1f0] sm:$0xf]
  %v154 = vld [vmem:[%s1 + $0x1f4] sm:$0xf]
  %v155 = vld [vmem:[%s1 + $0x1f8] sm:$0xf]
  %v156 = vld [vmem:[%s1 + $0x1fc] sm:$0xf]
  %v157 = vld [vmem:[%s1 + $0x200] sm:$0xf]
  %v158 = vld [vmem:[%s1 + $0x204] sm:$0xf]
  %v159 = vld [vmem:[%s1 + $0x208] sm:$0xf]
  %v160 = vld [vmem:[%s1 + $0x20c] sm:$0xf]
  %v161 = vld [vmem:[%s1 + $0x210] sm:$0xf]
  %v162 = vld [vmem:[%s1 + $0x214] sm:$0xf]
  %v163 = vld [vmem:[%s1 + $0x218] sm:$0xf]
  %v164 = vld [vmem:[%s1 + $0x21c] sm:$0xf]
  %v165 = vld [vmem:[%s1 + $0x220] sm:$0xf]
  %v166 = vld [vmem:[%s1 + $0x224] sm:$0xf]
  %v167 = vld [vmem:[%s1 + $0x228] sm:$0xf]
  %v168 = vld [vmem:[%s1 + $0x22c] sm:$0xf]
  %v169 = vld [vmem:[%s1 + $0x230] sm:$0xf]
  %v170 = vld [vmem:[%s1 + $0x234] sm:$0xf]
  %v171 = vld [vmem:[%s1 + $0x238] sm:$0xf]
  %v172 = vld [vmem:[%s1 + $0x23c] sm:$0xf]
  %v173 = vld [vmem:[%s1 + $0x240] sm:$0xf]
  %v174 = vld [vmem:[%s1 + $0x244] sm:$0xf]
  %v175 = vld [vmem:[%s1 + $0x248] sm:$0xf]
  %v176 = vld [vmem:[%s1 + $0x24c] sm:$0xf]
  %v177 = vld [vmem:[%s1 + $0x250] sm:$0xf]
  %v178 = vld [vmem:[%s1 + $0x254] sm:$0xf]
  %v179 = vld [vmem:[%s1 + $0x258] sm:$0xf]
  %v180 = vld [vmem:[%s1 + $0x25c] sm:$0xf]
  %v181 = vld [vmem:[%s1 + $0x260] sm:$0xf]
  %v182 = vld [vmem:[%s1 + $0x264] sm:$0xf]
  %v183 = vld [vmem:[%s1 + $0x268] sm:$0xf]
  %v184 = vld [vmem:[%s1 + $0x26c] sm:$0xf]
  %v185 = vld [vmem:[%s1 + $0x270] sm:$0xf]
  %v186 = vld [vmem:[%s1 + $0x274] sm:$0xf]
  %v187 = vld [vmem:[%s1 + $0x278] sm:$0xf]
  %v188 = vld [vmem:[%s1 + $0x27c] sm:$0xf]
  %v189 = vld [vmem:[%s1 + $0x280] sm:$0xf]
  %v190 = vld [vmem:[%s1 + $0x284] sm:$0xf]
  %v191 = vld [vmem:[%s1 + $0x288] sm:$0xf]
  %v192 = vld [vmem:[%s1 + $0x28c] sm:$0xf]
  %v193 = vld [vmem:[%s1 + $0x290] sm:$0xf]
  %v194 = vld [vmem:[%s1 + $0x294] sm:$0xf]
  %v195 = vld [vmem:[%s1 + $0x298] sm:$0xf]
  %v196 = vld [vmem:[%s1 + $0x29c] sm:$0xf]
  %v197 = vld [vmem:[%s1 + $0x2a0] sm:$0xf]
  %v198 = vld [vmem:[%s1 + $0x2a4] sm:$0xf]
  %v199 = vld [vmem:[%s1 + $0x2a8] sm:$0xf]
  %v200 = vld [vmem:[%s1 + $0x2ac] sm:$0xf]
  %v201 = vld [vmem:[%s1 + $0x2b0] sm:$0xf]
  %v202 = vld [vmem:[%s1 + $0x2b4] sm:$0xf]
  %v203 = vld [vmem:[%s1 + $0x2b8] sm:$0xf]
  %v204 = vld [vmem:[%s1 + $0x2bc] sm:$0xf]
  %v205 = vld [vmem:[%s1 + $0x2c0] sm:$0xf]
  %v206 = vld [vmem:[%s1 + $0x2c4] sm:$0xf]
  %v207 = vld [vmem:[%s1 + $0x2c8] sm:$0xf]
  %v208 = vld [vmem:[%s1 + $0x2cc] sm:$0xf]
  %v209 = vld [vmem:[%s1 + $0x2d0] sm:$0xf]
  %v210 = vld [vmem:[%s1 + $0x2d4] sm:$0xf]
  %v211 = vld [vmem:[%s1 + $0x2d8] sm:$0xf]
  %v212 = vld [vmem:[%s1 + $0x2dc] sm:$0xf]
  %v213 = vld [vmem:[%s1 + $0x2e0] sm:$0xf]
  %v214 = vld [vmem:[%s1 + $0x2e4] sm:$0xf]
  %v215 = vld [vmem:[%s1 + $0x2e8] sm:$0xf]
  %v216 = vld [vmem:[%s1 + $0x2ec] sm:$0xf]
  %v217 = vld [vmem:[%s1 + $0x2f0] sm:$0xf]
  %v218 = vld [vmem:[%s1 + $0x2f4] sm:$0xf]
  %v219 = vld [vmem:[%s1 + $0x2f8] sm:$0xf]
  %v220 = vld [vmem:[%s1 + $0x2fc] sm:$0xf]
  %v221 = vld [vmem:[%s1 + $0x300] sm:$0xf]
  %v222 = vld [vmem:[%s1 + $0x304] sm:$0xf]
  %v223 = vld [vmem:[%s1 + $0x308] sm:$0xf]
  %v224 = vld [vmem:[%s1 + $0x30c] sm:$0xf]
  %v225 = vld [vmem:[%s2] sm:$0x1]
  %v227 = vlaneseq
  %v228 = vshrl.u32 %v227, 7
  %v229 = vsub.s32 0, %v228
  %v230 = vrot.slane %v225, %v229
  %v246 = vunpack.c.l.b16 %v15
  %v247 = vunpack.c.h.b16 %v15
  %v248 = vunpack.c.l.b16 %v16
  %v249 = vunpack.c.h.b16 %v16
  %v250 = vunpack.c.l.b16 %v17
  %v251 = vunpack.c.h.b16 %v17
  %v252 = vunpack.c.l.b16 %v18
  %v253 = vunpack.c.h.b16 %v18
  %v254 = vunpack.c.l.b16 %v19
  %v255 = vunpack.c.h.b16 %v19
  %v256 = vunpack.c.l.b16 %v20
  %v257 = vunpack.c.h.b16 %v20
  %v258 = vunpack.c.l.b16 %v21
  %v259 = vunpack.c.l.b16 %v22
  %v260 = vunpack.c.h.b16 %v22
  %v261 = vunpack.c.l.b16 %v23
  %v262 = vunpack.c.h.b16 %v23
  %v263 = vunpack.c.l.b16 %v24
  %v264 = vunpack.c.h.b16 %v24
  %v265 = vunpack.c.l.b16 %v25
  %v266 = vunpack.c.h.b16 %v25
  %v267 = vunpack.c.l.b16 %v26
  %v268 = vunpack.c.h.b16 %v26
  %v269 = vunpack.c.l.b16 %v27
  %v270 = vunpack.c.h.b16 %v27
  %v271 = vunpack.c.l.b16 %v28
  %v272 = vpack.c.b16 %v259, %v246
  %v273 = vpack.c.b16 %v260, %v247
  %v274 = vpack.c.b16 %v261, %v248
  %v275 = vpack.c.b16 %v262, %v249
  %v276 = vpack.c.b16 %v263, %v250
  %v277 = vpack.c.b16 %v264, %v251
  %v278 = vpack.c.b16 %v265, %v252
  %v279 = vpack.c.b16 %v266, %v253
  %v280 = vpack.c.b16 %v267, %v254
  %v281 = vpack.c.b16 %v268, %v255
  %v282 = vpack.c.b16 %v269, %v256
  %v283 = vpack.c.b16 %v270, %v257
  %v284 = vpack.c.b16 %v271, %v258
  %v493 = vunpack.c.l.b16 %v29
  %v494 = vunpack.c.l.b16 %v30
  %v495 = vunpack.c.l.b16 %v31
  %v496 = vunpack.c.l.b16 %v32
  %v497 = vunpack.c.l.b16 %v33
  %v498 = vunpack.c.l.b16 %v34
  %v499 = vunpack.c.l.b16 %v35
  %v500 = vunpack.c.l.b16 %v36
  %v501 = vunpack.c.l.b16 %v37
  %v502 = vunpack.c.l.b16 %v38
  %v503 = vunpack.c.l.b16 %v39
  %v504 = vunpack.c.l.b16 %v40
  %v505 = vunpack.c.l.b16 %v41
  %v506 = vunpack.c.l.b16 %v42
  %v507 = vunpack.c.l.b16 %v43
  %v508 = vunpack.c.l.b16 %v44
  %v509 = vunpack.c.l.b16 %v45
  %v510 = vunpack.c.l.b16 %v46
  %v511 = vunpack.c.l.b16 %v47
  %v512 = vunpack.c.l.b16 %v48
  %v513 = vunpack.c.l.b16 %v49
  %v514 = vunpack.c.l.b16 %v50
  %v515 = vunpack.c.l.b16 %v51
  %v516 = vunpack.c.l.b16 %v52
  %v517 = vunpack.c.l.b16 %v53
  %v518 = vunpack.c.l.b16 %v54
  %v519 = vunpack.c.l.b16 %v55
  %v520 = vunpack.c.l.b16 %v56
  %v521 = vunpack.c.l.b16 %v57
  %v522 = vunpack.c.l.b16 %v58
  %v523 = vunpack.c.l.b16 %v59
  %v524 = vunpack.c.l.b16 %v60
  %v525 = vunpack.c.l.b16 %v61
  %v526 = vunpack.c.l.b16 %v62
  %v527 = vunpack.c.l.b16 %v63
  %v528 = vunpack.c.l.b16 %v64
  %v529 = vunpack.c.l.b16 %v65
  %v530 = vunpack.c.l.b16 %v66
  %v531 = vunpack.c.l.b16 %v67
  %v532 = vunpack.c.l.b16 %v68
  %v533 = vunpack.c.l.b16 %v69
  %v534 = vunpack.c.l.b16 %v70
  %v535 = vunpack.c.l.b16 %v71
  %v536 = vunpack.c.l.b16 %v72
  %v537 = vunpack.c.l.b16 %v73
  %v538 = vunpack.c.l.b16 %v74
  %v539 = vunpack.c.l.b16 %v75
  %v540 = vunpack.c.l.b16 %v76
  %v541 = vunpack.c.l.b16 %v77
  %v542 = vunpack.c.l.b16 %v78
  %v543 = vunpack.c.l.b16 %v79
  %v544 = vunpack.c.l.b16 %v80
  %v545 = vunpack.c.l.b16 %v81
  %v546 = vunpack.c.l.b16 %v82
  %v547 = vunpack.c.l.b16 %v83
  %v548 = vunpack.c.l.b16 %v84
  %v549 = vunpack.c.l.b16 %v85
  %v550 = vunpack.c.l.b16 %v86
  %v551 = vunpack.c.l.b16 %v87
  %v552 = vunpack.c.l.b16 %v88
  %v553 = vunpack.c.l.b16 %v89
  %v554 = vunpack.c.l.b16 %v90
  %v555 = vunpack.c.l.b16 %v91
  %v556 = vunpack.c.l.b16 %v92
  %v557 = vunpack.c.l.b16 %v93
  %v558 = vunpack.c.l.b16 %v94
  %v559 = vunpack.c.l.b16 %v95
  %v560 = vunpack.c.l.b16 %v96
  %v561 = vunpack.c.l.b16 %v97
  %v562 = vunpack.c.l.b16 %v98
  %v563 = vunpack.c.l.b16 %v99
  %v564 = vunpack.c.l.b16 %v100
  %v565 = vunpack.c.l.b16 %v101
  %v566 = vunpack.c.l.b16 %v102
  %v567 = vunpack.c.l.b16 %v103
  %v568 = vunpack.c.l.b16 %v104
  %v569 = vunpack.c.l.b16 %v105
  %v570 = vunpack.c.l.b16 %v106
  %v571 = vunpack.c.l.b16 %v107
  %v572 = vunpack.c.l.b16 %v108
  %v573 = vunpack.c.l.b16 %v109
  %v574 = vunpack.c.l.b16 %v110
  %v575 = vunpack.c.l.b16 %v111
  %v576 = vunpack.c.l.b16 %v112
  %v577 = vunpack.c.l.b16 %v113
  %v578 = vunpack.c.l.b16 %v114
  %v579 = vunpack.c.l.b16 %v115
  %v580 = vunpack.c.l.b16 %v116
  %v581 = vunpack.c.l.b16 %v117
  %v582 = vunpack.c.l.b16 %v118
  %v583 = vunpack.c.l.b16 %v119
  %v584 = vunpack.c.l.b16 %v120
  %v585 = vunpack.c.l.b16 %v121
  %v586 = vunpack.c.l.b16 %v122
  %v587 = vunpack.c.l.b16 %v123
  %v588 = vunpack.c.l.b16 %v124
  %v589 = vunpack.c.l.b16 %v125
  %v590 = vunpack.c.l.b16 %v126
  %v591 = vunpack.c.l.b16 %v127
  %v592 = vunpack.c.l.b16 %v128
  %v593 = vunpack.c.l.b16 %v129
  %v594 = vunpack.c.l.b16 %v130
  %v595 = vunpack.c.l.b16 %v131
  %v596 = vunpack.c.l.b16 %v132
  %v597 = vunpack.c.l.b16 %v133
  %v598 = vunpack.c.l.b16 %v134
  %v599 = vunpack.c.l.b16 %v135
  %v600 = vunpack.c.l.b16 %v136
  %v601 = vunpack.c.l.b16 %v137
  %v602 = vunpack.c.l.b16 %v138
  %v603 = vunpack.c.l.b16 %v139
  %v604 = vunpack.c.l.b16 %v140
  %v605 = vunpack.c.l.b16 %v141
  %v606 = vunpack.c.l.b16 %v142
  %v607 = vunpack.c.l.b16 %v143
  %v608 = vunpack.c.l.b16 %v144
  %v609 = vunpack.c.l.b16 %v145
  %v610 = vunpack.c.l.b16 %v146
  %v611 = vunpack.c.l.b16 %v147
  %v612 = vunpack.c.l.b16 %v148
  %v613 = vunpack.c.l.b16 %v149
  %v614 = vunpack.c.l.b16 %v150
  %v615 = vunpack.c.l.b16 %v151
  %v616 = vunpack.c.l.b16 %v152
  %v617 = vunpack.c.l.b16 %v153
  %v618 = vunpack.c.l.b16 %v154
  %v619 = vunpack.c.l.b16 %v155
  %v620 = vunpack.c.l.b16 %v156
  %v621 = vunpack.c.l.b16 %v157
  %v622 = vunpack.c.l.b16 %v158
  %v623 = vunpack.c.l.b16 %v159
  %v624 = vunpack.c.l.b16 %v160
  %v625 = vunpack.c.l.b16 %v161
  %v626 = vunpack.c.l.b16 %v162
  %v627 = vunpack.c.l.b16 %v163
  %v628 = vunpack.c.l.b16 %v164
  %v629 = vunpack.c.l.b16 %v165
  %v630 = vunpack.c.l.b16 %v166
  %v631 = vunpack.c.l.b16 %v167
  %v632 = vunpack.c.l.b16 %v168
  %v633 = vunpack.c.l.b16 %v169
  %v634 = vunpack.c.l.b16 %v170
  %v635 = vunpack.c.l.b16 %v171
  %v636 = vunpack.c.l.b16 %v172
  %v637 = vunpack.c.l.b16 %v173
  %v638 = vunpack.c.l.b16 %v174
  %v639 = vunpack.c.l.b16 %v175
  %v640 = vunpack.c.l.b16 %v176
  %v641 = vunpack.c.l.b16 %v177
  %v642 = vunpack.c.l.b16 %v178
  %v643 = vunpack.c.l.b16 %v179
  %v644 = vunpack.c.l.b16 %v180
  %v645 = vunpack.c.l.b16 %v181
  %v646 = vunpack.c.l.b16 %v182
  %v647 = vunpack.c.l.b16 %v183
  %v648 = vunpack.c.l.b16 %v184
  %v649 = vunpack.c.l.b16 %v185
  %v650 = vunpack.c.l.b16 %v186
  %v651 = vunpack.c.l.b16 %v187
  %v652 = vunpack.c.l.b16 %v188
  %v653 = vunpack.c.l.b16 %v189
  %v654 = vunpack.c.l.b16 %v190
  %v655 = vunpack.c.l.b16 %v191
  %v656 = vunpack.c.l.b16 %v192
  %v657 = vunpack.c.l.b16 %v193
  %v658 = vunpack.c.l.b16 %v194
  %v659 = vunpack.c.l.b16 %v195
  %v660 = vunpack.c.l.b16 %v196
  %v661 = vunpack.c.l.b16 %v197
  %v662 = vunpack.c.l.b16 %v198
  %v663 = vunpack.c.l.b16 %v199
  %v664 = vunpack.c.l.b16 %v200
  %v665 = vunpack.c.l.b16 %v201
  %v666 = vunpack.c.l.b16 %v202
  %v667 = vunpack.c.l.b16 %v203
  %v668 = vunpack.c.l.b16 %v204
  %v669 = vunpack.c.l.b16 %v205
  %v670 = vunpack.c.l.b16 %v206
  %v671 = vunpack.c.l.b16 %v207
  %v672 = vunpack.c.l.b16 %v208
  %v673 = vunpack.c.l.b16 %v209
  %v674 = vunpack.c.l.b16 %v210
  %v675 = vunpack.c.l.b16 %v211
  %v676 = vunpack.c.l.b16 %v212
  %v677 = vunpack.c.l.b16 %v213
  %v678 = vunpack.c.l.b16 %v214
  %v679 = vunpack.c.l.b16 %v215
  %v680 = vunpack.c.l.b16 %v216
  %v681 = vunpack.c.l.b16 %v217
  %v682 = vunpack.c.l.b16 %v218
  %v683 = vunpack.c.l.b16 %v219
  %v684 = vunpack.c.l.b16 %v220
  %v685 = vunpack.c.l.b16 %v221
  %v686 = vunpack.c.l.b16 %v222
  %v687 = vunpack.c.l.b16 %v223
  %v688 = vunpack.c.l.b16 %v224
  %v689 = vpack.c.b16 %v494, %v493
  %v690 = vpack.c.b16 %v496, %v495
  %v691 = vpack.c.b16 %v498, %v497
  %v692 = vpack.c.b16 %v500, %v499
  %v693 = vpack.c.b16 %v502, %v501
  %v694 = vpack.c.b16 %v504, %v503
  %v695 = vpack.c.b16 %v506, %v505
  %v696 = vpack.c.b16 %v508, %v507
  %v697 = vpack.c.b16 %v510, %v509
  %v698 = vpack.c.b16 %v512, %v511
  %v699 = vpack.c.b16 %v514, %v513
  %v700 = vpack.c.b16 %v516, %v515
  %v701 = vpack.c.b16 %v518, %v517
  %v702 = vpack.c.b16 %v520, %v519
  %v703 = vpack.c.b16 %v522, %v521
  %v704 = vpack.c.b16 %v524, %v523
  %v705 = vpack.c.b16 %v526, %v525
  %v706 = vpack.c.b16 %v528, %v527
  %v707 = vpack.c.b16 %v530, %v529
  %v708 = vpack.c.b16 %v532, %v531
  %v709 = vpack.c.b16 %v534, %v533
  %v710 = vpack.c.b16 %v536, %v535
  %v711 = vpack.c.b16 %v538, %v537
  %v712 = vpack.c.b16 %v540, %v539
  %v713 = vpack.c.b16 %v542, %v541
  %v714 = vpack.c.b16 %v544, %v543
  %v715 = vpack.c.b16 %v546, %v545
  %v716 = vpack.c.b16 %v548, %v547
  %v717 = vpack.c.b16 %v550, %v549
  %v718 = vpack.c.b16 %v552, %v551
  %v719 = vpack.c.b16 %v554, %v553
  %v720 = vpack.c.b16 %v556, %v555
  %v721 = vpack.c.b16 %v558, %v557
  %v722 = vpack.c.b16 %v560, %v559
  %v723 = vpack.c.b16 %v562, %v561
  %v724 = vpack.c.b16 %v564, %v563
  %v725 = vpack.c.b16 %v566, %v565
  %v726 = vpack.c.b16 %v568, %v567
  %v727 = vpack.c.b16 %v570, %v569
  %v728 = vpack.c.b16 %v572, %v571
  %v729 = vpack.c.b16 %v574, %v573
  %v730 = vpack.c.b16 %v576, %v575
  %v731 = vpack.c.b16 %v578, %v577
  %v732 = vpack.c.b16 %v580, %v579
  %v733 = vpack.c.b16 %v582, %v581
  %v734 = vpack.c.b16 %v584, %v583
  %v735 = vpack.c.b16 %v586, %v585
  %v736 = vpack.c.b16 %v588, %v587
  %v737 = vpack.c.b16 %v590, %v589
  %v738 = vpack.c.b16 %v592, %v591
  %v739 = vpack.c.b16 %v594, %v593
  %v740 = vpack.c.b16 %v596, %v595
  %v741 = vpack.c.b16 %v598, %v597
  %v742 = vpack.c.b16 %v600, %v599
  %v743 = vpack.c.b16 %v602, %v601
  %v744 = vpack.c.b16 %v604, %v603
  %v745 = vpack.c.b16 %v606, %v605
  %v746 = vpack.c.b16 %v608, %v607
  %v747 = vpack.c.b16 %v610, %v609
  %v748 = vpack.c.b16 %v612, %v611
  %v749 = vpack.c.b16 %v614, %v613
  %v750 = vpack.c.b16 %v616, %v615
  %v751 = vpack.c.b16 %v618, %v617
  %v752 = vpack.c.b16 %v620, %v619
  %v753 = vpack.c.b16 %v622, %v621
  %v754 = vpack.c.b16 %v624, %v623
  %v755 = vpack.c.b16 %v626, %v625
  %v756 = vpack.c.b16 %v628, %v627
  %v757 = vpack.c.b16 %v630, %v629
  %v758 = vpack.c.b16 %v632, %v631
  %v759 = vpack.c.b16 %v634, %v633
  %v760 = vpack.c.b16 %v636, %v635
  %v761 = vpack.c.b16 %v638, %v637
  %v762 = vpack.c.b16 %v640, %v639
  %v763 = vpack.c.b16 %v642, %v641
  %v764 = vpack.c.b16 %v644, %v643
  %v765 = vpack.c.b16 %v646, %v645
  %v766 = vpack.c.b16 %v648, %v647
  %v767 = vpack.c.b16 %v650, %v649
  %v768 = vpack.c.b16 %v652, %v651
  %v769 = vpack.c.b16 %v654, %v653
  %v770 = vpack.c.b16 %v656, %v655
  %v771 = vpack.c.b16 %v658, %v657
  %v772 = vpack.c.b16 %v660, %v659
  %v773 = vpack.c.b16 %v662, %v661
  %v774 = vpack.c.b16 %v664, %v663
  %v775 = vpack.c.b16 %v666, %v665
  %v776 = vpack.c.b16 %v668, %v667
  %v777 = vpack.c.b16 %v670, %v669
  %v778 = vpack.c.b16 %v672, %v671
  %v779 = vpack.c.b16 %v674, %v673
  %v780 = vpack.c.b16 %v676, %v675
  %v781 = vpack.c.b16 %v678, %v677
  %v782 = vpack.c.b16 %v680, %v679
  %v783 = vpack.c.b16 %v682, %v681
  %v784 = vpack.c.b16 %v684, %v683
  %v785 = vpack.c.b16 %v686, %v685
  %v786 = vpack.c.b16 %v688, %v687
  %vm885 = vcmask 261120
  %v887 = vsel %vm885, %v284, 0
  %889 = vmatprep.subr.bf16.mxu0 0
  %890 = vmatpush1.bf16.msra.mxu0 %v689
  %891 = vmatprep.subr.bf16.mxu0 0
  %892 = vmatpush1.bf16.msra.mxu0 %v690
  %893 = vmatprep.subr.bf16.mxu0 0
  %894 = vmatpush1.bf16.msra.mxu0 %v691
  %895 = vmatprep.subr.bf16.mxu0 0
  %896 = vmatpush1.bf16.msra.mxu0 %v692
  %897 = vmatprep.subr.bf16.mxu0 0
  %898 = vmatpush1.bf16.msra.mxu0 %v693
  %899 = vmatprep.subr.bf16.mxu0 0
  %900 = vmatpush1.bf16.msra.mxu0 %v694
  %901 = vmatprep.subr.bf16.mxu0 0
  %902 = vmatpush1.bf16.msra.mxu0 %v695
  %903 = vmatprep.subr.bf16.mxu0 0
  %904 = vmatpush1.bf16.msra.mxu0 %v696
  %905 = vmatprep.subr.bf16.mxu0 0
  %906 = vmatpush1.bf16.msra.mxu0 %v697
  %907 = vmatprep.subr.bf16.mxu0 0
  %908 = vmatpush1.bf16.msra.mxu0 %v698
  %909 = vmatprep.subr.bf16.mxu0 0
  %910 = vmatpush1.bf16.msra.mxu0 %v699
  %911 = vmatprep.subr.bf16.mxu0 0
  %912 = vmatpush1.bf16.msra.mxu0 %v700
  %913 = vmatprep.subr.bf16.mxu0 0
  %914 = vmatpush1.bf16.msra.mxu0 %v701
  %915 = vmatprep.subr.bf16.mxu0 0
  %916 = vmatpush1.bf16.msra.mxu0 %v702
  %917 = vmatprep.subr.bf16.mxu0 0
  %918 = vmatpush1.bf16.msra.mxu0 %v703
  %919 = vmatprep.subr.bf16.mxu0 0
  %920 = vmatpush1.bf16.msra.mxu0 %v704
  %921 = vmatprep.mubr.bf16.mxu0 %v273
  %922 = vmatmul.mubr.bf16.gmra.mrb[0].mxu0 %v272
  %v923 = vpop.f32.mrb[0].mxu0
  %v924 = vadd.f32 %v230, %v923
  %v925 = vpop.f32.mrb[0].mxu0
  %v926 = vpop.f32.mrb[0].mxu0
  %v927 = vadd.f32 %v230, %v926
  %v928 = vpop.f32.mrb[0].mxu0
  %929 = vdwg.mxu0
  %930 = vmatprep.subr.bf16.mxu0 0
  %931 = vmatpush1.bf16.msra.mxu0 %v705
  %932 = vmatprep.subr.bf16.mxu0 0
  %933 = vmatpush1.bf16.msra.mxu0 %v706
  %934 = vmatprep.subr.bf16.mxu0 0
  %935 = vmatpush1.bf16.msra.mxu0 %v707
  %936 = vmatprep.subr.bf16.mxu0 0
  %937 = vmatpush1.bf16.msra.mxu0 %v708
  %938 = vmatprep.subr.bf16.mxu0 0
  %939 = vmatpush1.bf16.msra.mxu0 %v709
  %940 = vmatprep.subr.bf16.mxu0 0
  %941 = vmatpush1.bf16.msra.mxu0 %v710
  %942 = vmatprep.subr.bf16.mxu0 0
  %943 = vmatpush1.bf16.msra.mxu0 %v711
  %944 = vmatprep.subr.bf16.mxu0 0
  %945 = vmatpush1.bf16.msra.mxu0 %v712
  %946 = vmatprep.subr.bf16.mxu0 0
  %947 = vmatpush1.bf16.msra.mxu0 %v713
  %948 = vmatprep.subr.bf16.mxu0 0
  %949 = vmatpush1.bf16.msra.mxu0 %v714
  %950 = vmatprep.subr.bf16.mxu0 0
  %951 = vmatpush1.bf16.msra.mxu0 %v715
  %952 = vmatprep.subr.bf16.mxu0 0
  %953 = vmatpush1.bf16.msra.mxu0 %v716
  %954 = vmatprep.subr.bf16.mxu0 0
  %955 = vmatpush1.bf16.msra.mxu0 %v717
  %956 = vmatprep.subr.bf16.mxu0 0
  %957 = vmatpush1.bf16.msra.mxu0 %v718
  %958 = vmatprep.subr.bf16.mxu0 0
  %959 = vmatpush1.bf16.msra.mxu0 %v719
  %960 = vmatprep.subr.bf16.mxu0 0
  %961 = vmatpush1.bf16.msra.mxu0 %v720
  %962 = vmatprep.mubr.bf16.mxu0 %v275
  %963 = vmatmul.mubr.bf16.gmra.mrb[0].mxu0 %v274
  %v964 = vpop.f32.mrb[0].mxu0
  %v965 = vadd.f32 %v924, %v964
  %v966 = vpop.f32.mrb[0].mxu0
  %v967 = vpop.f32.mrb[0].mxu0
  %v968 = vadd.f32 %v927, %v967
  %v969 = vpop.f32.mrb[0].mxu0
  %970 = vdwg.mxu0
  %971 = vmatprep.subr.bf16.mxu0 0
  %972 = vmatpush1.bf16.msra.mxu0 %v721
  %973 = vmatprep.subr.bf16.mxu0 0
  %974 = vmatpush1.bf16.msra.mxu0 %v722
  %975 = vmatprep.subr.bf16.mxu0 0
  %976 = vmatpush1.bf16.msra.mxu0 %v723
  %977 = vmatprep.subr.bf16.mxu0 0
  %978 = vmatpush1.bf16.msra.mxu0 %v724
  %979 = vmatprep.subr.bf16.mxu0 0
  %980 = vmatpush1.bf16.msra.mxu0 %v725
  %981 = vmatprep.subr.bf16.mxu0 0
  %982 = vmatpush1.bf16.msra.mxu0 %v726
  %983 = vmatprep.subr.bf16.mxu0 0
  %984 = vmatpush1.bf16.msra.mxu0 %v727
  %985 = vmatprep.subr.bf16.mxu0 0
  %986 = vmatpush1.bf16.msra.mxu0 %v728
  %987 = vmatprep.subr.bf16.mxu0 0
  %988 = vmatpush1.bf16.msra.mxu0 %v729
  %989 = vmatprep.subr.bf16.mxu0 0
  %990 = vmatpush1.bf16.msra.mxu0 %v730
  %991 = vmatprep.subr.bf16.mxu0 0
  %992 = vmatpush1.bf16.msra.mxu0 %v731
  %993 = vmatprep.subr.bf16.mxu0 0
  %994 = vmatpush1.bf16.msra.mxu0 %v732
  %995 = vmatprep.subr.bf16.mxu0 0
  %996 = vmatpush1.bf16.msra.mxu0 %v733
  %997 = vmatprep.subr.bf16.mxu0 0
  %998 = vmatpush1.bf16.msra.mxu0 %v734
  %999 = vmatprep.subr.bf16.mxu0 0
  %1000 = vmatpush1.bf16.msra.mxu0 %v735
  %1001 = vmatprep.subr.bf16.mxu0 0
  %1002 = vmatpush1.bf16.msra.mxu0 %v736
  %1003 = vmatprep.mubr.bf16.mxu0 %v277
  %1004 = vmatmul.mubr.bf16.gmra.mrb[0].mxu0 %v276
  %v1005 = vpop.f32.mrb[0].mxu0
  %v1006 = vadd.f32 %v965, %v1005
  %v1007 = vpop.f32.mrb[0].mxu0
  %v1008 = vpop.f32.mrb[0].mxu0
  %v1009 = vadd.f32 %v968, %v1008
  %v1010 = vpop.f32.mrb[0].mxu0
  %1011 = vdwg.mxu0
  %1012 = vmatprep.subr.bf16.mxu0 0
  %1013 = vmatpush1.bf16.msra.mxu0 %v737
  %1014 = vmatprep.subr.bf16.mxu0 0
  %1015 = vmatpush1.bf16.msra.mxu0 %v738
  %1016 = vmatprep.subr.bf16.mxu0 0
  %1017 = vmatpush1.bf16.msra.mxu0 %v739
  %1018 = vmatprep.subr.bf16.mxu0 0
  %1019 = vmatpush1.bf16.msra.mxu0 %v740
  %1020 = vmatprep.subr.bf16.mxu0 0
  %1021 = vmatpush1.bf16.msra.mxu0 %v741
  %1022 = vmatprep.subr.bf16.mxu0 0
  %1023 = vmatpush1.bf16.msra.mxu0 %v742
  %1024 = vmatprep.subr.bf16.mxu0 0
  %1025 = vmatpush1.bf16.msra.mxu0 %v743
  %1026 = vmatprep.subr.bf16.mxu0 0
  %1027 = vmatpush1.bf16.msra.mxu0 %v744
  %1028 = vmatprep.subr.bf16.mxu0 0
  %1029 = vmatpush1.bf16.msra.mxu0 %v745
  %1030 = vmatprep.subr.bf16.mxu0 0
  %1031 = vmatpush1.bf16.msra.mxu0 %v746
  %1032 = vmatprep.subr.bf16.mxu0 0
  %1033 = vmatpush1.bf16.msra.mxu0 %v747
  %1034 = vmatprep.subr.bf16.mxu0 0
  %1035 = vmatpush1.bf16.msra.mxu0 %v748
  %1036 = vmatprep.subr.bf16.mxu0 0
  %1037 = vmatpush1.bf16.msra.mxu0 %v749
  %1038 = vmatprep.subr.bf16.mxu0 0
  %1039 = vmatpush1.bf16.msra.mxu0 %v750
  %1040 = vmatprep.subr.bf16.mxu0 0
  %1041 = vmatpush1.bf16.msra.mxu0 %v751
  %1042 = vmatprep.subr.bf16.mxu0 0
  %1043 = vmatpush1.bf16.msra.mxu0 %v752
  %1044 = vmatprep.mubr.bf16.mxu0 %v279
  %1045 = vmatmul.mubr.bf16.gmra.mrb[0].mxu0 %v278
  %v1046 = vpop.f32.mrb[0].mxu0
  %v1047 = vadd.f32 %v1006, %v1046
  %v1048 = vpop.f32.mrb[0].mxu0
  %v1049 = vpop.f32.mrb[0].mxu0
  %v1050 = vadd.f32 %v1009, %v1049
  %v1051 = vpop.f32.mrb[0].mxu0
  %1052 = vdwg.mxu0
  %1053 = vmatprep.subr.bf16.mxu0 0
  %1054 = vmatpush1.bf16.msra.mxu0 %v753
  %1055 = vmatprep.subr.bf16.mxu0 0
  %1056 = vmatpush1.bf16.msra.mxu0 %v754
  %1057 = vmatprep.subr.bf16.mxu0 0
  %1058 = vmatpush1.bf16.msra.mxu0 %v755
  %1059 = vmatprep.subr.bf16.mxu0 0
  %1060 = vmatpush1.bf16.msra.mxu0 %v756
  %1061 = vmatprep.subr.bf16.mxu0 0
  %1062 = vmatpush1.bf16.msra.mxu0 %v757
  %1063 = vmatprep.subr.bf16.mxu0 0
  %1064 = vmatpush1.bf16.msra.mxu0 %v758
  %1065 = vmatprep.subr.bf16.mxu0 0
  %1066 = vmatpush1.bf16.msra.mxu0 %v759
  %1067 = vmatprep.subr.bf16.mxu0 0
  %1068 = vmatpush1.bf16.msra.mxu0 %v760
  %1069 = vmatprep.subr.bf16.mxu0 0
  %1070 = vmatpush1.bf16.msra.mxu0 %v761
  %1071 = vmatprep.subr.bf16.mxu0 0
  %1072 = vmatpush1.bf16.msra.mxu0 %v762
  %1073 = vmatprep.subr.bf16.mxu0 0
  %1074 = vmatpush1.bf16.msra.mxu0 %v763
  %1075 = vmatprep.subr.bf16.mxu0 0
  %1076 = vmatpush1.bf16.msra.mxu0 %v764
  %1077 = vmatprep.subr.bf16.mxu0 0
  %1078 = vmatpush1.bf16.msra.mxu0 %v765
  %1079 = vmatprep.subr.bf16.mxu0 0
  %1080 = vmatpush1.bf16.msra.mxu0 %v766
  %1081 = vmatprep.subr.bf16.mxu0 0
  %1082 = vmatpush1.bf16.msra.mxu0 %v767
  %1083 = vmatprep.subr.bf16.mxu0 0
  %1084 = vmatpush1.bf16.msra.mxu0 %v768
  %1085 = vmatprep.mubr.bf16.mxu0 %v281
  %1086 = vmatmul.mubr.bf16.gmra.mrb[0].mxu0 %v280
  %v1087 = vpop.f32.mrb[0].mxu0
  %v1088 = vadd.f32 %v1047, %v1087
  %v1089 = vpop.f32.mrb[0].mxu0
  %v1090 = vpop.f32.mrb[0].mxu0
  %v1091 = vadd.f32 %v1050, %v1090
  %v1092 = vpop.f32.mrb[0].mxu0
  %1093 = vdwg.mxu0
  %1094 = vmatprep.subr.bf16.mxu0 0
  %1095 = vmatpush1.bf16.msra.mxu0 %v769
  %1096 = vmatprep.subr.bf16.mxu0 0
  %1097 = vmatpush1.bf16.msra.mxu0 %v770
  %1098 = vmatprep.subr.bf16.mxu0 0
  %1099 = vmatpush1.bf16.msra.mxu0 %v771
  %1100 = vmatprep.subr.bf16.mxu0 0
  %1101 = vmatpush1.bf16.msra.mxu0 %v772
  %1102 = vmatprep.subr.bf16.mxu0 0
  %1103 = vmatpush1.bf16.msra.mxu0 %v773
  %1104 = vmatprep.subr.bf16.mxu0 0
  %1105 = vmatpush1.bf16.msra.mxu0 %v774
  %1106 = vmatprep.subr.bf16.mxu0 0
  %1107 = vmatpush1.bf16.msra.mxu0 %v775
  %1108 = vmatprep.subr.bf16.mxu0 0
  %1109 = vmatpush1.bf16.msra.mxu0 %v776
  %1110 = vmatprep.subr.bf16.mxu0 0
  %1111 = vmatpush1.bf16.msra.mxu0 %v777
  %1112 = vmatprep.subr.bf16.mxu0 0
  %1113 = vmatpush1.bf16.msra.mxu0 %v778
  %1114 = vmatprep.subr.bf16.mxu0 0
  %1115 = vmatpush1.bf16.msra.mxu0 %v779
  %1116 = vmatprep.subr.bf16.mxu0 0
  %1117 = vmatpush1.bf16.msra.mxu0 %v780
  %1118 = vmatprep.subr.bf16.mxu0 0
  %1119 = vmatpush1.bf16.msra.mxu0 %v781
  %1120 = vmatprep.subr.bf16.mxu0 0
  %1121 = vmatpush1.bf16.msra.mxu0 %v782
  %1122 = vmatprep.subr.bf16.mxu0 0
  %1123 = vmatpush1.bf16.msra.mxu0 %v783
  %1124 = vmatprep.subr.bf16.mxu0 0
  %1125 = vmatpush1.bf16.msra.mxu0 %v784
  %1126 = vmatprep.mubr.bf16.mxu0 %v283
  %1127 = vmatmul.mubr.bf16.gmra.mrb[0].mxu0 %v282
  %v1128 = vpop.f32.mrb[0].mxu0
  %v1129 = vadd.f32 %v1088, %v1128
  %v1130 = vpop.f32.mrb[0].mxu0
  %v1131 = vpop.f32.mrb[0].mxu0
  %v1132 = vadd.f32 %v1091, %v1131
  %v1133 = vpop.f32.mrb[0].mxu0
  %1134 = vdwg.mxu0
  %1135 = vmatprep.subr.bf16.mxu0 0
  %1136 = vmatpush1.bf16.msra.mxu0 %v785
  %1137 = vmatprep.subr.bf16.mxu0 0
  %1138 = vmatpush1.bf16.msra.mxu0 %v786
  %1139 = vmatprep.subr.bf16.mxu0 0
  %1140 = vmatpush1.bf16.msra.mxu0 0
  %1141 = vmatprep.subr.bf16.mxu0 0
  %1142 = vmatpush1.bf16.msra.mxu0 0
  %1143 = vmatprep.subr.bf16.mxu0 0
  %1144 = vmatpush1.bf16.msra.mxu0 0
  %1145 = vmatprep.subr.bf16.mxu0 0
  %1146 = vmatpush1.bf16.msra.mxu0 0
  %1147 = vmatprep.subr.bf16.mxu0 0
  %1148 = vmatpush1.bf16.msra.mxu0 0
  %1149 = vmatprep.subr.bf16.mxu0 0
  %1150 = vmatpush1.bf16.msra.mxu0 0
  %1151 = vmatprep.subr.bf16.mxu0 0
  %1152 = vmatpush1.bf16.msra.mxu0 0
  %1153 = vmatprep.subr.bf16.mxu0 0
  %1154 = vmatpush1.bf16.msra.mxu0 0
  %1155 = vmatprep.subr.bf16.mxu0 0
  %1156 = vmatpush1.bf16.msra.mxu0 0
  %1157 = vmatprep.subr.bf16.mxu0 0
  %1158 = vmatpush1.bf16.msra.mxu0 0
  %1159 = vmatprep.subr.bf16.mxu0 0
  %1160 = vmatpush1.bf16.msra.mxu0 0
  %1161 = vmatprep.subr.bf16.mxu0 0
  %1162 = vmatpush1.bf16.msra.mxu0 0
  %1163 = vmatprep.subr.bf16.mxu0 0
  %1164 = vmatpush1.bf16.msra.mxu0 0
  %1165 = vmatprep.subr.bf16.mxu0 0
  %1166 = vmatpush1.bf16.msra.mxu0 0
  %1167 = vmatprep.mubr.bf16.mxu0 0
  %1168 = vmatmul.mubr.bf16.gmra.mrb[0].mxu0 %v887
  %v1169 = vpop.f32.mrb[0].mxu0
  %v1170 = vadd.f32 %v1129, %v1169
  %v1171 = vpop.f32.mrb[0].mxu0
  %v1172 = vpop.f32.mrb[0].mxu0
  %v1173 = vadd.f32 %v1132, %v1172
  %v1174 = vpop.f32.mrb[0].mxu0
  %1175 = vdwg.mxu0
  %1176 = vst [vmem:[%s3] sm:$0xff] %v1170
  %1177 = vst [vmem:[%s3 + $0x8] sm:$0xff] %v1173
  // Predicated region
  $region14: #{cnn_forward.5} parent=0 // pred_check
    _
  $region15: #{cnn_forward.5} parent=0 // pred_check_branch
    %1179 = sbr.rel (0) target = $region17
  $region16: #{cnn_forward.5} parent=0 // pred_region
    _
  $region17: #{cnn_forward.5} parent=0 // pred_fallthru
    _
  // Predicated region
  $region18: #{cnn_forward.5} parent=0 // pred_check
    _
  $region19: #{cnn_forward.5} parent=0 // pred_check_branch
    %1181 = sbr.rel (0) target = $region21
  $region20: #{cnn_forward.5} parent=0 // pred_region
    _
  $region21: #{cnn_forward.5} parent=0 // pred_fallthru
    _

</llo_original>
